<compile_context>
chip_gen: v7x
topology: tpu7x:2x2x1
jax: 0.10.0
libtpu: 0.0.40
codegen_flags: <defaults>
</compile_context>

<pallas_src>
import jax
import jax.numpy as jnp
from jax.experimental import pallas as pl
from jax.experimental.pallas import tpu as pltpu

# ---------------- module-consistent configuration (small DINO-style ViT) ----
IMG = 32              # img_size
PATCH = 16            # patch_size
IN_CHANS = 3
EMBED_DIM = 32
DEPTH = 2
NUM_HEADS = 4
MLP_RATIO = 4.0
NUM_ELE_SLICE = 4
PER_LI = [-0.5, 0.0, 0.5]          # sorted percentile list (len = NUM_ELE_SLICE - 1)
LN_EPS = 1e-5                      # nn.LayerNorm default eps

HP = IMG // PATCH
NUM_PATCHES = HP * HP              # 4
N_TOK = NUM_PATCHES + 1            # 5 real tokens (cls + patches)
PADDED_TOK = 8                     # padded to one sublane group
CLS_POS = NUM_PATCHES              # token order: [p0..p3, cls, pad, pad, pad]
HEAD_DIM = EMBED_DIM // NUM_HEADS  # 8
HIDDEN = int(EMBED_DIM * MLP_RATIO)  # 128
K_PATCH = IN_CHANS * PATCH * PATCH   # 768
NEG_INF = -1e30


# ---------------- in-kernel helpers ----------------
def _layernorm(x, w, b):
    mu = jnp.mean(x, axis=-1, keepdims=True)
    var = jnp.mean((x - mu) ** 2, axis=-1, keepdims=True)
    return (x - mu) * jax.lax.rsqrt(var + LN_EPS) * w + b


def _gelu_tanh(x):
    # tanh-approx GELU: tanh lowers to the EUP (otherwise-idle slot).
    # TODO(synk): PyTorch nn.GELU() is exact-erf; max abs deviation ~1e-3.
    return 0.5 * x * (1.0 + jnp.tanh(0.7978845608028654 * (x + 0.044715 * x * x * x)))


# ---------------- the fused kernel (one batch tile per grid step) -----------
def fused_vit_kernel(xp_ref, add_ref, pw_ref, wmat_ref, wfc2_ref, vecs_ref,
                     o_ref, scr_ref):
    TB = o_ref.shape[0]                       # samples in this grid step
    ROWS = TB * PADDED_TOK
    scale = HEAD_DIM ** -0.5

    # ---- patch embedding: only real patch rows go through the MXU ----
    patches = jnp.dot(xp_ref[...], pw_ref[...],
                      preferred_element_type=jnp.float32)          # (TB*4, D)
    scr_ref[...] = jnp.zeros_like(scr_ref)
    scr_ref[:, 0:NUM_PATCHES, :] = patches.reshape(TB, NUM_PATCHES, EMBED_DIM)
    # add = pos + cls_token + elevation + conv-bias, pre-folded per padded token
    x = scr_ref[...].reshape(ROWS, EMBED_DIM) + add_ref[...]       # (ROWS, D)

    # key-padding mask built in-kernel (tokens >= N_TOK are padding); no O(B^2)
    # mask operand and no cross-sample attention work.
    kid = jax.lax.broadcasted_iota(jnp.int32, (1, 1, PADDED_TOK), 2)
    kmask = jnp.where(kid < N_TOK, 0.0, NEG_INF)                   # (1, 1, 8)

    for d in range(DEPTH):
        vd = vecs_ref[d]                                           # (8, 128)
        ln1_w, ln1_b = vd[0:1, 0:EMBED_DIM], vd[1:2, 0:EMBED_DIM]
        proj_b = vd[2:3, 0:EMBED_DIM]
        ln2_w, ln2_b = vd[3:4, 0:EMBED_DIM], vd[4:5, 0:EMBED_DIM]
        fc2_b = vd[5:6, 0:EMBED_DIM]
        fc1_b = vd[6:7, :]                                         # (1, 128)
        wd = wmat_ref[d]                                           # (32, 256)

        # ---- x = x + proj(MHSA(LN1(x))) ----
        h = _layernorm(x, ln1_w, ln1_b)
        qkv = jnp.dot(h, wd[:, 0:3 * EMBED_DIM],
                      preferred_element_type=jnp.float32)          # (ROWS, 96)
        qkv3 = qkv.reshape(TB, PADDED_TOK, 3 * EMBED_DIM)
        for hi in range(NUM_HEADS):
            lo = hi * HEAD_DIM
            q = qkv3[:, :, lo:lo + HEAD_DIM]
            k = qkv3[:, :, EMBED_DIM + lo:EMBED_DIM + lo + HEAD_DIM]
            v = qkv3[:, :, 2 * EMBED_DIM + lo:2 * EMBED_DIM + lo + HEAD_DIM]
            s = jnp.einsum('bqd,bkd->bqk', q, k,
                           preferred_element_type=jnp.float32) * scale + kmask
            s = s - jnp.max(s, axis=-1, keepdims=True)
            p = jnp.exp(s)
            p = p / jnp.sum(p, axis=-1, keepdims=True)             # exact softmax
            pv = jnp.einsum('bqk,bkd->bqd', p, v,
                            preferred_element_type=jnp.float32)    # (TB, 8, hd)
            scr_ref[:, :, lo:lo + HEAD_DIM] = pv                   # head -> lane slice
        attn = scr_ref[...].reshape(ROWS, EMBED_DIM)
        x = x + jnp.dot(attn, wd[:, 3 * EMBED_DIM:4 * EMBED_DIM],
                        preferred_element_type=jnp.float32) + proj_b

        # ---- x = x + fc2(GELU(fc1(LN2(x)))) ----
        h2 = _layernorm(x, ln2_w, ln2_b)
        g = jnp.dot(h2, wd[:, 4 * EMBED_DIM:4 * EMBED_DIM + HIDDEN],
                    preferred_element_type=jnp.float32) + fc1_b
        g = _gelu_tanh(g)
        g = jnp.dot(g, wfc2_ref[d], preferred_element_type=jnp.float32) + fc2_b
        x = x + g

    # ---- final LayerNorm on the cls rows only; kernel output is (TB, D) ----
    v0 = vecs_ref[0]
    norm_w = v0[7:8, 0:EMBED_DIM]
    norm_b = v0[7:8, EMBED_DIM:2 * EMBED_DIM]
    cls = x.reshape(TB, PADDED_TOK, EMBED_DIM)[:, CLS_POS:CLS_POS + 1, :]
    o_ref[...] = _layernorm(cls.reshape(TB, EMBED_DIM), norm_w, norm_b)


# ---------------- wrapper ----------------
def _pick_tile(B):
    """Samples per grid step: whole batch when tiny, else an 8-aligned divisor."""
    if B <= 8:
        return B
    for t in (128, 64, 32, 16, 8):
        if B % t == 0:
            return t
    return B


def elevation_transformer_forward(params, x, x_g_norm):
    B = x.shape[0]
    B_true = x_g_norm.shape[0]
    crops = B // B_true
    f32 = jnp.float32

    # ---- XLA glue (tiny, fused under jit) ----
    # patchify: Conv2d(kernel=stride=PATCH) == per-patch flatten of (c, dh, dw)
    xp = x.reshape(B, IN_CHANS, HP, PATCH, HP, PATCH)
    xp = xp.transpose(0, 2, 4, 1, 3, 5).reshape(B * NUM_PATCHES, K_PATCH)

    # get_map_idx: bisect_left(per_li, mean(x_g_norm[b])); crop-major replication
    means = jnp.mean(x_g_norm.reshape(B_true, -1), axis=1)
    idx = jnp.searchsorted(params['per_li'], means, side='left')
    ele = params['eleva_embed'][jnp.tile(idx, (crops,))]           # (B, D)

    # per-token additive term, padded to 8 tokens/sample; token order is
    # [p0..p3, cls, pad*3] (attention is permutation-invariant; no causal mask)
    pos = params['pos_embed'][0]                                   # (5, D)
    tok_add = jnp.concatenate([
        pos[1:, :] + params['patch_b'][None, :],                   # patch tokens
        params['cls_token'] + pos[0:1, :],                         # cls token
        jnp.zeros((PADDED_TOK - N_TOK, EMBED_DIM), f32),           # padding
    ], axis=0)                                                     # (8, D)
    real = (jnp.arange(PADDED_TOK) < N_TOK).astype(f32)[None, :, None]
    add = (tok_add[None, :, :] + ele[:, None, :] * real).reshape(
        B * PADDED_TOK, EMBED_DIM)

    # pack the 15 tiny weight/bias tensors into 3 slabs (fewer DMA chains)
    wmat = jnp.concatenate(
        [params['qkv_w'], params['proj_w'], params['fc1_w']], axis=2)   # (DEPTH,32,256)
    wfc2 = params['fc2_w']                                              # (DEPTH,128,32)

    def _row(v):                                                   # (DEPTH,32)->(DEPTH,1,128)
        return jnp.concatenate(
            [v[:, None, :], jnp.zeros((DEPTH, 1, HIDDEN - EMBED_DIM), f32)], axis=2)

    norm_row = jnp.concatenate(
        [params['norm_w'], params['norm_b'],
         jnp.zeros((HIDDEN - 2 * EMBED_DIM,), f32)])[None, None, :]
    norm_rows = jnp.concatenate(
        [norm_row, jnp.zeros((DEPTH - 1, 1, HIDDEN), f32)], axis=0)
    vecs = jnp.concatenate([
        _row(params['ln1_w']), _row(params['ln1_b']), _row(params['proj_b']),
        _row(params['ln2_w']), _row(params['ln2_b']), _row(params['fc2_b']),
        params['fc1_b'][:, None, :], norm_rows,
    ], axis=1)                                                     # (DEPTH, 8, 128)

    TB = _pick_tile(B)
    grid = (B // TB,)

    out = pl.pallas_call(
        fused_vit_kernel,
        out_shape=jax.ShapeDtypeStruct((B, EMBED_DIM), f32),
        grid=grid,
        in_specs=[
            pl.BlockSpec((TB * NUM_PATCHES, K_PATCH), lambda i: (i, 0)),   # xp (pipelined)
            pl.BlockSpec((TB * PADDED_TOK, EMBED_DIM), lambda i: (i, 0)),  # add (pipelined)
            pl.BlockSpec((K_PATCH, EMBED_DIM), lambda i: (0, 0)),          # patch weight
            pl.BlockSpec((DEPTH, EMBED_DIM, 4 * EMBED_DIM + HIDDEN),
                         lambda i: (0, 0, 0)),                             # [qkv|proj|fc1]
            pl.BlockSpec((DEPTH, HIDDEN, EMBED_DIM), lambda i: (0, 0, 0)), # fc2
            pl.BlockSpec((DEPTH, PADDED_TOK, HIDDEN), lambda i: (0, 0, 0)),# LN/bias/norm slab
        ],
        out_specs=pl.BlockSpec((TB, EMBED_DIM), lambda i: (i, 0)),
        scratch_shapes=[pltpu.VMEM((TB, PADDED_TOK, EMBED_DIM), f32)],
        compiler_params=pltpu.CompilerParams(
            dimension_semantics=("parallel",),        # megacore split on v7x
            vmem_limit_bytes=32 * 1024 * 1024),
    )(xp, add, params['patch_w'], wmat, wfc2, vecs)
    return out                                                     # (B, D) cls output


# ---------------- deterministic parameter init ----------------
def _tn(key, shape, std=0.02):
    # stands in for trunc_normal_(std=0.02); deterministic synthetic init
    return jax.random.normal(key, shape, dtype=jnp.float32) * std


def init_params(key):
    ks = jax.random.split(key, 9)
    f32 = jnp.float32
    return {
        # conv weight pre-flattened/transposed to (C*p*p, D)
        'patch_w': _tn(ks[0], (K_PATCH, EMBED_DIM)),
        'patch_b': _tn(ks[1], (EMBED_DIM,)),
        'cls_token': _tn(ks[2], (1, EMBED_DIM)),
        'pos_embed': _tn(ks[3], (1, N_TOK, EMBED_DIM)),
        'eleva_embed': _tn(ks[4], (NUM_ELE_SLICE, EMBED_DIM)),
        'per_li': jnp.array(PER_LI, dtype=f32),
        'norm_w': jnp.ones((EMBED_DIM,), f32),
        'norm_b': jnp.zeros((EMBED_DIM,), f32),
        # per-depth block params stacked along a leading depth axis
        'ln1_w': jnp.ones((DEPTH, EMBED_DIM), f32),
        'ln1_b': jnp.zeros((DEPTH, EMBED_DIM), f32),
        'qkv_w': _tn(ks[5], (DEPTH, EMBED_DIM, 3 * EMBED_DIM)),   # qkv_bias=False
        'proj_w': _tn(ks[6], (DEPTH, EMBED_DIM, EMBED_DIM)),
        'proj_b': jnp.zeros((DEPTH, EMBED_DIM), f32),
        'ln2_w': jnp.ones((DEPTH, EMBED_DIM), f32),
        'ln2_b': jnp.zeros((DEPTH, EMBED_DIM), f32),
        'fc1_w': _tn(ks[7], (DEPTH, EMBED_DIM, HIDDEN)),
        'fc1_b': jnp.zeros((DEPTH, HIDDEN), f32),
        'fc2_w': _tn(ks[8], (DEPTH, HIDDEN, EMBED_DIM)),
        'fc2_b': jnp.zeros((DEPTH, EMBED_DIM), f32),
    }


if __name__ == "__main__":
    key = jax.random.PRNGKey(0)
    kp, kx, kg = jax.random.split(key, 3)
    params = init_params(kp)

    B = 2
    x = jax.random.normal(kx, (B, IN_CHANS, IMG, IMG), dtype=jnp.float32)
    x_g_norm = jax.random.normal(kg, (B, IN_CHANS, IMG, IMG), dtype=jnp.float32)

    fwd = jax.jit(elevation_transformer_forward)
    out = jax.block_until_ready(fwd(params, x, x_g_norm))
    assert out.shape == (B, EMBED_DIM) and out.dtype == jnp.float32
    assert bool(jnp.all(jnp.isfinite(out)))
    print("KERNEL_OK")
</pallas_src>

<mosaic_0001>
module attributes {stable_mosaic.version = 11 : i64} {
  func.func @fused_vit_kernel(%arg0: i32, %arg1: memref<8x768xf32, #tpu.memory_space<vmem>>, %arg2: memref<16x32xf32, #tpu.memory_space<vmem>>, %arg3: memref<768x32xf32, #tpu.memory_space<vmem>>, %arg4: memref<2x32x256xf32, #tpu.memory_space<vmem>>, %arg5: memref<2x128x32xf32, #tpu.memory_space<vmem>>, %arg6: memref<2x8x128xf32, #tpu.memory_space<vmem>>, %arg7: memref<2x32xf32, #tpu.memory_space<vmem>>, %arg8: memref<2x8x32xf32, #tpu.memory_space<vmem>>) attributes {dimension_semantics = [#tpu.dimension_semantics<parallel>], iteration_bounds = array<i64: 1>, scalar_prefetch = 0 : i64, scratch_operands = 1 : i64, tpu.core_type = #tpu.core_type<tc>, window_params = [{transform_indices = @transform_0, window_bounds = array<i64: 8, 768>}, {transform_indices = @transform_1, window_bounds = array<i64: 16, 32>}, {pipeline_mode = #tpu.pipeline_mode<synchronous>, transform_indices = @transform_2, window_bounds = array<i64: 768, 32>}, {pipeline_mode = #tpu.pipeline_mode<synchronous>, transform_indices = @transform_3, window_bounds = array<i64: 2, 32, 256>}, {pipeline_mode = #tpu.pipeline_mode<synchronous>, transform_indices = @transform_4, window_bounds = array<i64: 2, 128, 32>}, {pipeline_mode = #tpu.pipeline_mode<synchronous>, transform_indices = @transform_5, window_bounds = array<i64: 2, 8, 128>}, {transform_indices = @transform_6, window_bounds = array<i64: 2, 32>}]} {
    %c0 = arith.constant 0 : index
    %c0_0 = arith.constant 0 : index
    %0 = vector.load %arg1[%c0, %c0_0] : memref<8x768xf32, #tpu.memory_space<vmem>>, vector<8x768xf32>
    %c0_1 = arith.constant 0 : index
    %c0_2 = arith.constant 0 : index
    %1 = vector.load %arg3[%c0_1, %c0_2] : memref<768x32xf32, #tpu.memory_space<vmem>>, vector<768x32xf32>
    %cst = arith.constant dense<0.000000e+00> : vector<8x32xf32>
    %2 = tpu.matmul %0, %1, %cst {dimension_numbers = #tpu.dot_dimension_numbers<[1], [0], [0], [1], [0, 0, 1, 1], [], []>} : vector<8x768xf32>, vector<768x32xf32>, vector<8x32xf32> -> vector<8x32xf32>
    %cst_3 = arith.constant 0.000000e+00 : f32
    %3 = vector.broadcast %cst_3 : f32 to vector<2x8x32xf32>
    %c0_4 = arith.constant 0 : index
    %c0_5 = arith.constant 0 : index
    %c0_6 = arith.constant 0 : index
    %4 = vector.load %arg8[%c0_4, %c0_5, %c0_6] : memref<2x8x32xf32, #tpu.memory_space<vmem>>, vector<2x8x32xf32>
    tpu.vector_store %arg8[%c0_4, %c0_5, %c0_6], %3 {strides = array<i32>} : memref<2x8x32xf32, #tpu.memory_space<vmem>>, vector<2x8x32xf32>,
    %5 = vector.shape_cast %2 : vector<8x32xf32> to vector<2x4x32xf32>
    %c0_7 = arith.constant 0 : index
    %c0_8 = arith.constant 0 : index
    %c0_9 = arith.constant 0 : index
    %6 = vector.load %arg8[%c0_7, %c0_8, %c0_9] : memref<2x8x32xf32, #tpu.memory_space<vmem>>, vector<2x4x32xf32>
    tpu.vector_store %arg8[%c0_7, %c0_8, %c0_9], %5 {strides = array<i32>} : memref<2x8x32xf32, #tpu.memory_space<vmem>>, vector<2x4x32xf32>,
    %c0_10 = arith.constant 0 : index
    %c0_11 = arith.constant 0 : index
    %c0_12 = arith.constant 0 : index
    %7 = vector.load %arg8[%c0_10, %c0_11, %c0_12] : memref<2x8x32xf32, #tpu.memory_space<vmem>>, vector<2x8x32xf32>
    %8 = vector.shape_cast %7 : vector<2x8x32xf32> to vector<16x32xf32>
    %c0_13 = arith.constant 0 : index
    %c0_14 = arith.constant 0 : index
    %9 = vector.load %arg2[%c0_13, %c0_14] : memref<16x32xf32, #tpu.memory_space<vmem>>, vector<16x32xf32>
    %10 = arith.addf %8, %9 : vector<16x32xf32>
    %11 = tpu.iota {dimensions = array<i32: 2>} : vector<1x1x8xi32>
    %c5_i32 = arith.constant 5 : i32
    %12 = vector.broadcast %c5_i32 : i32 to vector<1x1x8xi32>
    %13 = arith.cmpi slt, %11, %12 : vector<1x1x8xi32>
    %cst_15 = arith.constant 0.000000e+00 : f32
    %cst_16 = arith.constant -1.000000e+30 : f32
    %14 = vector.broadcast %cst_15 : f32 to vector<1x1x8xf32>
    %15 = vector.broadcast %cst_16 : f32 to vector<1x1x8xf32>
    %16 = arith.select %13, %14, %15 : vector<1x1x8xi1>, vector<1x1x8xf32>
    %c0_17 = arith.constant 0 : index
    %c0_18 = arith.constant 0 : index
    %c0_19 = arith.constant 0 : index
    %17 = vector.load %arg6[%c0_17, %c0_18, %c0_19] : memref<2x8x128xf32, #tpu.memory_space<vmem>>, vector<1x8x128xf32>
    %18 = vector.shape_cast %17 : vector<1x8x128xf32> to vector<8x128xf32>
    %19 = vector.extract_strided_slice %18 {offsets = [0, 0], sizes = [1, 32], strides = [1, 1]} : vector<8x128xf32> to vector<1x32xf32>
    %20 = vector.extract_strided_slice %18 {offsets = [1, 0], sizes = [1, 32], strides = [1, 1]} : vector<8x128xf32> to vector<1x32xf32>
    %21 = vector.extract_strided_slice %18 {offsets = [2, 0], sizes = [1, 32], strides = [1, 1]} : vector<8x128xf32> to vector<1x32xf32>
    %22 = vector.extract_strided_slice %18 {offsets = [3, 0], sizes = [1, 32], strides = [1, 1]} : vector<8x128xf32> to vector<1x32xf32>
    %23 = vector.extract_strided_slice %18 {offsets = [4, 0], sizes = [1, 32], strides = [1, 1]} : vector<8x128xf32> to vector<1x32xf32>
    %24 = vector.extract_strided_slice %18 {offsets = [5, 0], sizes = [1, 32], strides = [1, 1]} : vector<8x128xf32> to vector<1x32xf32>
    %25 = vector.extract_strided_slice %18 {offsets = [6, 0], sizes = [1, 128], strides = [1, 1]} : vector<8x128xf32> to vector<1x128xf32>
    %c0_20 = arith.constant 0 : index
    %c0_21 = arith.constant 0 : index
    %c0_22 = arith.constant 0 : index
    %26 = vector.load %arg4[%c0_20, %c0_21, %c0_22] : memref<2x32x256xf32, #tpu.memory_space<vmem>>, vector<1x32x256xf32>
    %27 = vector.shape_cast %26 : vector<1x32x256xf32> to vector<32x256xf32>
    %cst_23 = arith.constant dense<0.000000e+00> : vector<16xf32>
    %28 = vector.multi_reduction <add>, %10, %cst_23 [1] : vector<16x32xf32> to vector<16xf32>
    %29 = vector.shape_cast %28 : vector<16xf32> to vector<16x1xf32>
    %cst_24 = arith.constant 3.200000e+01 : f32
    %30 = vector.broadcast %cst_24 : f32 to vector<16x1xf32>
    %31 = arith.divf %29, %30 : vector<16x1xf32>
    %32 = vector.broadcast %31 : vector<16x1xf32> to vector<16x32xf32>
    %33 = arith.subf %10, %32 : vector<16x32xf32>
    %34 = arith.mulf %33, %33 : vector<16x32xf32>
    %cst_25 = arith.constant dense<0.000000e+00> : vector<16xf32>
    %35 = vector.multi_reduction <add>, %34, %cst_25 [1] : vector<16x32xf32> to vector<16xf32>
    %36 = vector.shape_cast %35 : vector<16xf32> to vector<16x1xf32>
    %cst_26 = arith.constant 3.200000e+01 : f32
    %37 = vector.broadcast %cst_26 : f32 to vector<16x1xf32>
    %38 = arith.divf %36, %37 : vector<16x1xf32>
    %39 = vector.broadcast %31 : vector<16x1xf32> to vector<16x32xf32>
    %40 = arith.subf %10, %39 : vector<16x32xf32>
    %cst_27 = arith.constant 9.99999974E-6 : f32
    %41 = vector.broadcast %cst_27 : f32 to vector<16x1xf32>
    %42 = arith.addf %38, %41 : vector<16x1xf32>
    %43 = math.rsqrt %42 : vector<16x1xf32>
    %44 = vector.broadcast %43 : vector<16x1xf32> to vector<16x32xf32>
    %45 = arith.mulf %40, %44 : vector<16x32xf32>
    %46 = vector.broadcast %19 : vector<1x32xf32> to vector<16x32xf32>
    %47 = arith.mulf %45, %46 : vector<16x32xf32>
    %48 = vector.broadcast %20 : vector<1x32xf32> to vector<16x32xf32>
    %49 = arith.addf %47, %48 : vector<16x32xf32>
    %50 = vector.extract_strided_slice %27 {offsets = [0, 0], sizes = [32, 96], strides = [1, 1]} : vector<32x256xf32> to vector<32x96xf32>
    %cst_28 = arith.constant dense<0.000000e+00> : vector<16x96xf32>
    %51 = tpu.matmul %49, %50, %cst_28 {dimension_numbers = #tpu.dot_dimension_numbers<[1], [0], [0], [1], [0, 0, 1, 1], [], []>} : vector<16x32xf32>, vector<32x96xf32>, vector<16x96xf32> -> vector<16x96xf32>
    %52 = vector.shape_cast %51 : vector<16x96xf32> to vector<2x8x96xf32>
    %53 = vector.extract_strided_slice %52 {offsets = [0, 0, 0], sizes = [2, 8, 8], strides = [1, 1, 1]} : vector<2x8x96xf32> to vector<2x8x8xf32>
    %54 = vector.extract_strided_slice %52 {offsets = [0, 0, 32], sizes = [2, 8, 8], strides = [1, 1, 1]} : vector<2x8x96xf32> to vector<2x8x8xf32>
    %55 = vector.extract_strided_slice %52 {offsets = [0, 0, 64], sizes = [2, 8, 8], strides = [1, 1, 1]} : vector<2x8x96xf32> to vector<2x8x8xf32>
    "tpu.trace_start"() <{level = 10 : i32, message = "bqd,bkd->bqk"}> : () -> ()
    %cst_29 = arith.constant dense<0.000000e+00> : vector<2x8x8xf32>
    %56 = tpu.matmul %53, %54, %cst_29 {dimension_numbers = #tpu.dot_dimension_numbers<[2], [2], [1], [1], [0, 0, 0, 1, 1, 1], [0], [0]>} : vector<2x8x8xf32>, vector<2x8x8xf32>, vector<2x8x8xf32> -> vector<2x8x8xf32>
    "tpu.trace_stop"() : () -> ()
    %cst_30 = arith.constant 0.353553385 : f32
    %57 = vector.broadcast %cst_30 : f32 to vector<2x8x8xf32>
    %58 = arith.mulf %56, %57 : vector<2x8x8xf32>
    %59 = vector.broadcast %16 : vector<1x1x8xf32> to vector<2x8x8xf32>
    %60 = arith.addf %58, %59 : vector<2x8x8xf32>
    %cst_31 = arith.constant dense<0xFF800000> : vector<2x8xf32>
    %61 = vector.multi_reduction <maximumf>, %60, %cst_31 [2] : vector<2x8x8xf32> to vector<2x8xf32>
    %62 = vector.shape_cast %61 : vector<2x8xf32> to vector<2x8x1xf32>
    %63 = vector.broadcast %62 : vector<2x8x1xf32> to vector<2x8x8xf32>
    %64 = arith.subf %60, %63 : vector<2x8x8xf32>
    %65 = math.exp %64 : vector<2x8x8xf32>
    %cst_32 = arith.constant dense<0.000000e+00> : vector<2x8xf32>
    %66 = vector.multi_reduction <add>, %65, %cst_32 [2] : vector<2x8x8xf32> to vector<2x8xf32>
    %67 = vector.shape_cast %66 : vector<2x8xf32> to vector<2x8x1xf32>
    %68 = vector.broadcast %67 : vector<2x8x1xf32> to vector<2x8x8xf32>
    %69 = arith.divf %65, %68 : vector<2x8x8xf32>
    "tpu.trace_start"() <{level = 10 : i32, message = "bqk,bkd->bqd"}> : () -> ()
    %cst_33 = arith.constant dense<0.000000e+00> : vector<2x8x8xf32>
    %70 = tpu.matmul %69, %55, %cst_33 {dimension_numbers = #tpu.dot_dimension_numbers<[2], [1], [1], [2], [0, 0, 0, 1, 1, 2], [0], [0]>} : vector<2x8x8xf32>, vector<2x8x8xf32>, vector<2x8x8xf32> -> vector<2x8x8xf32>
    "tpu.trace_stop"() : () -> ()
    %c0_34 = arith.constant 0 : index
    %c0_35 = arith.constant 0 : index
    %c0_36 = arith.constant 0 : index
    %71 = vector.load %arg8[%c0_34, %c0_35, %c0_36] : memref<2x8x32xf32, #tpu.memory_space<vmem>>, vector<2x8x8xf32>
    tpu.vector_store %arg8[%c0_34, %c0_35, %c0_36], %70 {strides = array<i32>} : memref<2x8x32xf32, #tpu.memory_space<vmem>>, vector<2x8x8xf32>,
    %72 = vector.extract_strided_slice %52 {offsets = [0, 0, 8], sizes = [2, 8, 8], strides = [1, 1, 1]} : vector<2x8x96xf32> to vector<2x8x8xf32>
    %73 = vector.extract_strided_slice %52 {offsets = [0, 0, 40], sizes = [2, 8, 8], strides = [1, 1, 1]} : vector<2x8x96xf32> to vector<2x8x8xf32>
    %74 = vector.extract_strided_slice %52 {offsets = [0, 0, 72], sizes = [2, 8, 8], strides = [1, 1, 1]} : vector<2x8x96xf32> to vector<2x8x8xf32>
    "tpu.trace_start"() <{level = 10 : i32, message = "bqd,bkd->bqk"}> : () -> ()
    %cst_37 = arith.constant dense<0.000000e+00> : vector<2x8x8xf32>
    %75 = tpu.matmul %72, %73, %cst_37 {dimension_numbers = #tpu.dot_dimension_numbers<[2], [2], [1], [1], [0, 0, 0, 1, 1, 1], [0], [0]>} : vector<2x8x8xf32>, vector<2x8x8xf32>, vector<2x8x8xf32> -> vector<2x8x8xf32>
    "tpu.trace_stop"() : () -> ()
    %cst_38 = arith.constant 0.353553385 : f32
    %76 = vector.broadcast %cst_38 : f32 to vector<2x8x8xf32>
    %77 = arith.mulf %75, %76 : vector<2x8x8xf32>
    %78 = vector.broadcast %16 : vector<1x1x8xf32> to vector<2x8x8xf32>
    %79 = arith.addf %77, %78 : vector<2x8x8xf32>
    %cst_39 = arith.constant dense<0xFF800000> : vector<2x8xf32>
    %80 = vector.multi_reduction <maximumf>, %79, %cst_39 [2] : vector<2x8x8xf32> to vector<2x8xf32>
    %81 = vector.shape_cast %80 : vector<2x8xf32> to vector<2x8x1xf32>
    %82 = vector.broadcast %81 : vector<2x8x1xf32> to vector<2x8x8xf32>
    %83 = arith.subf %79, %82 : vector<2x8x8xf32>
    %84 = math.exp %83 : vector<2x8x8xf32>
    %cst_40 = arith.constant dense<0.000000e+00> : vector<2x8xf32>
    %85 = vector.multi_reduction <add>, %84, %cst_40 [2] : vector<2x8x8xf32> to vector<2x8xf32>
    %86 = vector.shape_cast %85 : vector<2x8xf32> to vector<2x8x1xf32>
    %87 = vector.broadcast %86 : vector<2x8x1xf32> to vector<2x8x8xf32>
    %88 = arith.divf %84, %87 : vector<2x8x8xf32>
    "tpu.trace_start"() <{level = 10 : i32, message = "bqk,bkd->bqd"}> : () -> ()
    %cst_41 = arith.constant dense<0.000000e+00> : vector<2x8x8xf32>
    %89 = tpu.matmul %88, %74, %cst_41 {dimension_numbers = #tpu.dot_dimension_numbers<[2], [1], [1], [2], [0, 0, 0, 1, 1, 2], [0], [0]>} : vector<2x8x8xf32>, vector<2x8x8xf32>, vector<2x8x8xf32> -> vector<2x8x8xf32>
    "tpu.trace_stop"() : () -> ()
    %c0_42 = arith.constant 0 : index
    %c0_43 = arith.constant 0 : index
    %c8 = arith.constant 8 : index
    %90 = vector.load %arg8[%c0_42, %c0_43, %c8] : memref<2x8x32xf32, #tpu.memory_space<vmem>>, vector<2x8x8xf32>
    tpu.vector_store %arg8[%c0_42, %c0_43, %c8], %89 {strides = array<i32>} : memref<2x8x32xf32, #tpu.memory_space<vmem>>, vector<2x8x8xf32>,
    %91 = vector.extract_strided_slice %52 {offsets = [0, 0, 16], sizes = [2, 8, 8], strides = [1, 1, 1]} : vector<2x8x96xf32> to vector<2x8x8xf32>
    %92 = vector.extract_strided_slice %52 {offsets = [0, 0, 48], sizes = [2, 8, 8], strides = [1, 1, 1]} : vector<2x8x96xf32> to vector<2x8x8xf32>
    %93 = vector.extract_strided_slice %52 {offsets = [0, 0, 80], sizes = [2, 8, 8], strides = [1, 1, 1]} : vector<2x8x96xf32> to vector<2x8x8xf32>
    "tpu.trace_start"() <{level = 10 : i32, message = "bqd,bkd->bqk"}> : () -> ()
    %cst_44 = arith.constant dense<0.000000e+00> : vector<2x8x8xf32>
    %94 = tpu.matmul %91, %92, %cst_44 {dimension_numbers = #tpu.dot_dimension_numbers<[2], [2], [1], [1], [0, 0, 0, 1, 1, 1], [0], [0]>} : vector<2x8x8xf32>, vector<2x8x8xf32>, vector<2x8x8xf32> -> vector<2x8x8xf32>
    "tpu.trace_stop"() : () -> ()
    %cst_45 = arith.constant 0.353553385 : f32
    %95 = vector.broadcast %cst_45 : f32 to vector<2x8x8xf32>
    %96 = arith.mulf %94, %95 : vector<2x8x8xf32>
    %97 = vector.broadcast %16 : vector<1x1x8xf32> to vector<2x8x8xf32>
    %98 = arith.addf %96, %97 : vector<2x8x8xf32>
    %cst_46 = arith.constant dense<0xFF800000> : vector<2x8xf32>
    %99 = vector.multi_reduction <maximumf>, %98, %cst_46 [2] : vector<2x8x8xf32> to vector<2x8xf32>
    %100 = vector.shape_cast %99 : vector<2x8xf32> to vector<2x8x1xf32>
    %101 = vector.broadcast %100 : vector<2x8x1xf32> to vector<2x8x8xf32>
    %102 = arith.subf %98, %101 : vector<2x8x8xf32>
    %103 = math.exp %102 : vector<2x8x8xf32>
    %cst_47 = arith.constant dense<0.000000e+00> : vector<2x8xf32>
    %104 = vector.multi_reduction <add>, %103, %cst_47 [2] : vector<2x8x8xf32> to vector<2x8xf32>
    %105 = vector.shape_cast %104 : vector<2x8xf32> to vector<2x8x1xf32>
    %106 = vector.broadcast %105 : vector<2x8x1xf32> to vector<2x8x8xf32>
    %107 = arith.divf %103, %106 : vector<2x8x8xf32>
    "tpu.trace_start"() <{level = 10 : i32, message = "bqk,bkd->bqd"}> : () -> ()
    %cst_48 = arith.constant dense<0.000000e+00> : vector<2x8x8xf32>
    %108 = tpu.matmul %107, %93, %cst_48 {dimension_numbers = #tpu.dot_dimension_numbers<[2], [1], [1], [2], [0, 0, 0, 1, 1, 2], [0], [0]>} : vector<2x8x8xf32>, vector<2x8x8xf32>, vector<2x8x8xf32> -> vector<2x8x8xf32>
    "tpu.trace_stop"() : () -> ()
    %c0_49 = arith.constant 0 : index
    %c0_50 = arith.constant 0 : index
    %c16 = arith.constant 16 : index
    %109 = vector.load %arg8[%c0_49, %c0_50, %c16] : memref<2x8x32xf32, #tpu.memory_space<vmem>>, vector<2x8x8xf32>
    tpu.vector_store %arg8[%c0_49, %c0_50, %c16], %108 {strides = array<i32>} : memref<2x8x32xf32, #tpu.memory_space<vmem>>, vector<2x8x8xf32>,
    %110 = vector.extract_strided_slice %52 {offsets = [0, 0, 24], sizes = [2, 8, 8], strides = [1, 1, 1]} : vector<2x8x96xf32> to vector<2x8x8xf32>
    %111 = vector.extract_strided_slice %52 {offsets = [0, 0, 56], sizes = [2, 8, 8], strides = [1, 1, 1]} : vector<2x8x96xf32> to vector<2x8x8xf32>
    %112 = vector.extract_strided_slice %52 {offsets = [0, 0, 88], sizes = [2, 8, 8], strides = [1, 1, 1]} : vector<2x8x96xf32> to vector<2x8x8xf32>
    "tpu.trace_start"() <{level = 10 : i32, message = "bqd,bkd->bqk"}> : () -> ()
    %cst_51 = arith.constant dense<0.000000e+00> : vector<2x8x8xf32>
    %113 = tpu.matmul %110, %111, %cst_51 {dimension_numbers = #tpu.dot_dimension_numbers<[2], [2], [1], [1], [0, 0, 0, 1, 1, 1], [0], [0]>} : vector<2x8x8xf32>, vector<2x8x8xf32>, vector<2x8x8xf32> -> vector<2x8x8xf32>
    "tpu.trace_stop"() : () -> ()
    %cst_52 = arith.constant 0.353553385 : f32
    %114 = vector.broadcast %cst_52 : f32 to vector<2x8x8xf32>
    %115 = arith.mulf %113, %114 : vector<2x8x8xf32>
    %116 = vector.broadcast %16 : vector<1x1x8xf32> to vector<2x8x8xf32>
    %117 = arith.addf %115, %116 : vector<2x8x8xf32>
    %cst_53 = arith.constant dense<0xFF800000> : vector<2x8xf32>
    %118 = vector.multi_reduction <maximumf>, %117, %cst_53 [2] : vector<2x8x8xf32> to vector<2x8xf32>
    %119 = vector.shape_cast %118 : vector<2x8xf32> to vector<2x8x1xf32>
    %120 = vector.broadcast %119 : vector<2x8x1xf32> to vector<2x8x8xf32>
    %121 = arith.subf %117, %120 : vector<2x8x8xf32>
    %122 = math.exp %121 : vector<2x8x8xf32>
    %cst_54 = arith.constant dense<0.000000e+00> : vector<2x8xf32>
    %123 = vector.multi_reduction <add>, %122, %cst_54 [2] : vector<2x8x8xf32> to vector<2x8xf32>
    %124 = vector.shape_cast %123 : vector<2x8xf32> to vector<2x8x1xf32>
    %125 = vector.broadcast %124 : vector<2x8x1xf32> to vector<2x8x8xf32>
    %126 = arith.divf %122, %125 : vector<2x8x8xf32>
    "tpu.trace_start"() <{level = 10 : i32, message = "bqk,bkd->bqd"}> : () -> ()
    %cst_55 = arith.constant dense<0.000000e+00> : vector<2x8x8xf32>
    %127 = tpu.matmul %126, %112, %cst_55 {dimension_numbers = #tpu.dot_dimension_numbers<[2], [1], [1], [2], [0, 0, 0, 1, 1, 2], [0], [0]>} : vector<2x8x8xf32>, vector<2x8x8xf32>, vector<2x8x8xf32> -> vector<2x8x8xf32>
    "tpu.trace_stop"() : () -> ()
    %c0_56 = arith.constant 0 : index
    %c0_57 = arith.constant 0 : index
    %c24 = arith.constant 24 : index
    %128 = vector.load %arg8[%c0_56, %c0_57, %c24] : memref<2x8x32xf32, #tpu.memory_space<vmem>>, vector<2x8x8xf32>
    tpu.vector_store %arg8[%c0_56, %c0_57, %c24], %127 {strides = array<i32>} : memref<2x8x32xf32, #tpu.memory_space<vmem>>, vector<2x8x8xf32>,
    %c0_58 = arith.constant 0 : index
    %c0_59 = arith.constant 0 : index
    %c0_60 = arith.constant 0 : index
    %129 = vector.load %arg8[%c0_58, %c0_59, %c0_60] : memref<2x8x32xf32, #tpu.memory_space<vmem>>, vector<2x8x32xf32>
    %130 = vector.shape_cast %129 : vector<2x8x32xf32> to vector<16x32xf32>
    %131 = vector.extract_strided_slice %27 {offsets = [0, 96], sizes = [32, 32], strides = [1, 1]} : vector<32x256xf32> to vector<32x32xf32>
    %cst_61 = arith.constant dense<0.000000e+00> : vector<16x32xf32>
    %132 = tpu.matmul %130, %131, %cst_61 {dimension_numbers = #tpu.dot_dimension_numbers<[1], [0], [0], [1], [0, 0, 1, 1], [], []>} : vector<16x32xf32>, vector<32x32xf32>, vector<16x32xf32> -> vector<16x32xf32>
    %133 = arith.addf %10, %132 : vector<16x32xf32>
    %134 = vector.broadcast %21 : vector<1x32xf32> to vector<16x32xf32>
    %135 = arith.addf %133, %134 : vector<16x32xf32>
    %cst_62 = arith.constant dense<0.000000e+00> : vector<16xf32>
    %136 = vector.multi_reduction <add>, %135, %cst_62 [1] : vector<16x32xf32> to vector<16xf32>
    %137 = vector.shape_cast %136 : vector<16xf32> to vector<16x1xf32>
    %cst_63 = arith.constant 3.200000e+01 : f32
    %138 = vector.broadcast %cst_63 : f32 to vector<16x1xf32>
    %139 = arith.divf %137, %138 : vector<16x1xf32>
    %140 = vector.broadcast %139 : vector<16x1xf32> to vector<16x32xf32>
    %141 = arith.subf %135, %140 : vector<16x32xf32>
    %142 = arith.mulf %141, %141 : vector<16x32xf32>
    %cst_64 = arith.constant dense<0.000000e+00> : vector<16xf32>
    %143 = vector.multi_reduction <add>, %142, %cst_64 [1] : vector<16x32xf32> to vector<16xf32>
    %144 = vector.shape_cast %143 : vector<16xf32> to vector<16x1xf32>
    %cst_65 = arith.constant 3.200000e+01 : f32
    %145 = vector.broadcast %cst_65 : f32 to vector<16x1xf32>
    %146 = arith.divf %144, %145 : vector<16x1xf32>
    %147 = vector.broadcast %139 : vector<16x1xf32> to vector<16x32xf32>
    %148 = arith.subf %135, %147 : vector<16x32xf32>
    %cst_66 = arith.constant 9.99999974E-6 : f32
    %149 = vector.broadcast %cst_66 : f32 to vector<16x1xf32>
    %150 = arith.addf %146, %149 : vector<16x1xf32>
    %151 = math.rsqrt %150 : vector<16x1xf32>
    %152 = vector.broadcast %151 : vector<16x1xf32> to vector<16x32xf32>
    %153 = arith.mulf %148, %152 : vector<16x32xf32>
    %154 = vector.broadcast %22 : vector<1x32xf32> to vector<16x32xf32>
    %155 = arith.mulf %153, %154 : vector<16x32xf32>
    %156 = vector.broadcast %23 : vector<1x32xf32> to vector<16x32xf32>
    %157 = arith.addf %155, %156 : vector<16x32xf32>
    %158 = vector.extract_strided_slice %27 {offsets = [0, 128], sizes = [32, 128], strides = [1, 1]} : vector<32x256xf32> to vector<32x128xf32>
    %cst_67 = arith.constant dense<0.000000e+00> : vector<16x128xf32>
    %159 = tpu.matmul %157, %158, %cst_67 {dimension_numbers = #tpu.dot_dimension_numbers<[1], [0], [0], [1], [0, 0, 1, 1], [], []>} : vector<16x32xf32>, vector<32x128xf32>, vector<16x128xf32> -> vector<16x128xf32>
    %160 = vector.broadcast %25 : vector<1x128xf32> to vector<16x128xf32>
    %161 = arith.addf %159, %160 : vector<16x128xf32>
    %cst_68 = arith.constant 5.000000e-01 : f32
    %162 = vector.broadcast %cst_68 : f32 to vector<16x128xf32>
    %163 = arith.mulf %162, %161 : vector<16x128xf32>
    %cst_69 = arith.constant 4.471500e-02 : f32
    %164 = vector.broadcast %cst_69 : f32 to vector<16x128xf32>
    %165 = arith.mulf %164, %161 : vector<16x128xf32>
    %166 = arith.mulf %165, %161 : vector<16x128xf32>
    %167 = arith.mulf %166, %161 : vector<16x128xf32>
    %168 = arith.addf %161, %167 : vector<16x128xf32>
    %cst_70 = arith.constant 0.797884583 : f32
    %169 = vector.broadcast %cst_70 : f32 to vector<16x128xf32>
    %170 = arith.mulf %169, %168 : vector<16x128xf32>
    %171 = math.tanh %170 : vector<16x128xf32>
    %cst_71 = arith.constant 1.000000e+00 : f32
    %172 = vector.broadcast %cst_71 : f32 to vector<16x128xf32>
    %173 = arith.addf %172, %171 : vector<16x128xf32>
    %174 = arith.mulf %163, %173 : vector<16x128xf32>
    %c0_72 = arith.constant 0 : index
    %c0_73 = arith.constant 0 : index
    %c0_74 = arith.constant 0 : index
    %175 = vector.load %arg5[%c0_72, %c0_73, %c0_74] : memref<2x128x32xf32, #tpu.memory_space<vmem>>, vector<1x128x32xf32>
    %176 = vector.shape_cast %175 : vector<1x128x32xf32> to vector<128x32xf32>
    %cst_75 = arith.constant dense<0.000000e+00> : vector<16x32xf32>
    %177 = tpu.matmul %174, %176, %cst_75 {dimension_numbers = #tpu.dot_dimension_numbers<[1], [0], [0], [1], [0, 0, 1, 1], [], []>} : vector<16x128xf32>, vector<128x32xf32>, vector<16x32xf32> -> vector<16x32xf32>
    %178 = vector.broadcast %24 : vector<1x32xf32> to vector<16x32xf32>
    %179 = arith.addf %177, %178 : vector<16x32xf32>
    %180 = arith.addf %135, %179 : vector<16x32xf32>
    %c1 = arith.constant 1 : index
    %c0_76 = arith.constant 0 : index
    %c0_77 = arith.constant 0 : index
    %181 = vector.load %arg6[%c1, %c0_76, %c0_77] : memref<2x8x128xf32, #tpu.memory_space<vmem>>, vector<1x8x128xf32>
    %182 = vector.shape_cast %181 : vector<1x8x128xf32> to vector<8x128xf32>
    %183 = vector.extract_strided_slice %182 {offsets = [0, 0], sizes = [1, 32], strides = [1, 1]} : vector<8x128xf32> to vector<1x32xf32>
    %184 = vector.extract_strided_slice %182 {offsets = [1, 0], sizes = [1, 32], strides = [1, 1]} : vector<8x128xf32> to vector<1x32xf32>
    %185 = vector.extract_strided_slice %182 {offsets = [2, 0], sizes = [1, 32], strides = [1, 1]} : vector<8x128xf32> to vector<1x32xf32>
    %186 = vector.extract_strided_slice %182 {offsets = [3, 0], sizes = [1, 32], strides = [1, 1]} : vector<8x128xf32> to vector<1x32xf32>
    %187 = vector.extract_strided_slice %182 {offsets = [4, 0], sizes = [1, 32], strides = [1, 1]} : vector<8x128xf32> to vector<1x32xf32>
    %188 = vector.extract_strided_slice %182 {offsets = [5, 0], sizes = [1, 32], strides = [1, 1]} : vector<8x128xf32> to vector<1x32xf32>
    %189 = vector.extract_strided_slice %182 {offsets = [6, 0], sizes = [1, 128], strides = [1, 1]} : vector<8x128xf32> to vector<1x128xf32>
    %c1_78 = arith.constant 1 : index
    %c0_79 = arith.constant 0 : index
    %c0_80 = arith.constant 0 : index
    %190 = vector.load %arg4[%c1_78, %c0_79, %c0_80] : memref<2x32x256xf32, #tpu.memory_space<vmem>>, vector<1x32x256xf32>
    %191 = vector.shape_cast %190 : vector<1x32x256xf32> to vector<32x256xf32>
    %cst_81 = arith.constant dense<0.000000e+00> : vector<16xf32>
    %192 = vector.multi_reduction <add>, %180, %cst_81 [1] : vector<16x32xf32> to vector<16xf32>
    %193 = vector.shape_cast %192 : vector<16xf32> to vector<16x1xf32>
    %cst_82 = arith.constant 3.200000e+01 : f32
    %194 = vector.broadcast %cst_82 : f32 to vector<16x1xf32>
    %195 = arith.divf %193, %194 : vector<16x1xf32>
    %196 = vector.broadcast %195 : vector<16x1xf32> to vector<16x32xf32>
    %197 = arith.subf %180, %196 : vector<16x32xf32>
    %198 = arith.mulf %197, %197 : vector<16x32xf32>
    %cst_83 = arith.constant dense<0.000000e+00> : vector<16xf32>
    %199 = vector.multi_reduction <add>, %198, %cst_83 [1] : vector<16x32xf32> to vector<16xf32>
    %200 = vector.shape_cast %199 : vector<16xf32> to vector<16x1xf32>
    %cst_84 = arith.constant 3.200000e+01 : f32
    %201 = vector.broadcast %cst_84 : f32 to vector<16x1xf32>
    %202 = arith.divf %200, %201 : vector<16x1xf32>
    %203 = vector.broadcast %195 : vector<16x1xf32> to vector<16x32xf32>
    %204 = arith.subf %180, %203 : vector<16x32xf32>
    %cst_85 = arith.constant 9.99999974E-6 : f32
    %205 = vector.broadcast %cst_85 : f32 to vector<16x1xf32>
    %206 = arith.addf %202, %205 : vector<16x1xf32>
    %207 = math.rsqrt %206 : vector<16x1xf32>
    %208 = vector.broadcast %207 : vector<16x1xf32> to vector<16x32xf32>
    %209 = arith.mulf %204, %208 : vector<16x32xf32>
    %210 = vector.broadcast %183 : vector<1x32xf32> to vector<16x32xf32>
    %211 = arith.mulf %209, %210 : vector<16x32xf32>
    %212 = vector.broadcast %184 : vector<1x32xf32> to vector<16x32xf32>
    %213 = arith.addf %211, %212 : vector<16x32xf32>
    %214 = vector.extract_strided_slice %191 {offsets = [0, 0], sizes = [32, 96], strides = [1, 1]} : vector<32x256xf32> to vector<32x96xf32>
    %cst_86 = arith.constant dense<0.000000e+00> : vector<16x96xf32>
    %215 = tpu.matmul %213, %214, %cst_86 {dimension_numbers = #tpu.dot_dimension_numbers<[1], [0], [0], [1], [0, 0, 1, 1], [], []>} : vector<16x32xf32>, vector<32x96xf32>, vector<16x96xf32> -> vector<16x96xf32>
    %216 = vector.shape_cast %215 : vector<16x96xf32> to vector<2x8x96xf32>
    %217 = vector.extract_strided_slice %216 {offsets = [0, 0, 0], sizes = [2, 8, 8], strides = [1, 1, 1]} : vector<2x8x96xf32> to vector<2x8x8xf32>
    %218 = vector.extract_strided_slice %216 {offsets = [0, 0, 32], sizes = [2, 8, 8], strides = [1, 1, 1]} : vector<2x8x96xf32> to vector<2x8x8xf32>
    %219 = vector.extract_strided_slice %216 {offsets = [0, 0, 64], sizes = [2, 8, 8], strides = [1, 1, 1]} : vector<2x8x96xf32> to vector<2x8x8xf32>
    "tpu.trace_start"() <{level = 10 : i32, message = "bqd,bkd->bqk"}> : () -> ()
    %cst_87 = arith.constant dense<0.000000e+00> : vector<2x8x8xf32>
    %220 = tpu.matmul %217, %218, %cst_87 {dimension_numbers = #tpu.dot_dimension_numbers<[2], [2], [1], [1], [0, 0, 0, 1, 1, 1], [0], [0]>} : vector<2x8x8xf32>, vector<2x8x8xf32>, vector<2x8x8xf32> -> vector<2x8x8xf32>
    "tpu.trace_stop"() : () -> ()
    %cst_88 = arith.constant 0.353553385 : f32
    %221 = vector.broadcast %cst_88 : f32 to vector<2x8x8xf32>
    %222 = arith.mulf %220, %221 : vector<2x8x8xf32>
    %223 = vector.broadcast %16 : vector<1x1x8xf32> to vector<2x8x8xf32>
    %224 = arith.addf %222, %223 : vector<2x8x8xf32>
    %cst_89 = arith.constant dense<0xFF800000> : vector<2x8xf32>
    %225 = vector.multi_reduction <maximumf>, %224, %cst_89 [2] : vector<2x8x8xf32> to vector<2x8xf32>
    %226 = vector.shape_cast %225 : vector<2x8xf32> to vector<2x8x1xf32>
    %227 = vector.broadcast %226 : vector<2x8x1xf32> to vector<2x8x8xf32>
    %228 = arith.subf %224, %227 : vector<2x8x8xf32>
    %229 = math.exp %228 : vector<2x8x8xf32>
    %cst_90 = arith.constant dense<0.000000e+00> : vector<2x8xf32>
    %230 = vector.multi_reduction <add>, %229, %cst_90 [2] : vector<2x8x8xf32> to vector<2x8xf32>
    %231 = vector.shape_cast %230 : vector<2x8xf32> to vector<2x8x1xf32>
    %232 = vector.broadcast %231 : vector<2x8x1xf32> to vector<2x8x8xf32>
    %233 = arith.divf %229, %232 : vector<2x8x8xf32>
    "tpu.trace_start"() <{level = 10 : i32, message = "bqk,bkd->bqd"}> : () -> ()
    %cst_91 = arith.constant dense<0.000000e+00> : vector<2x8x8xf32>
    %234 = tpu.matmul %233, %219, %cst_91 {dimension_numbers = #tpu.dot_dimension_numbers<[2], [1], [1], [2], [0, 0, 0, 1, 1, 2], [0], [0]>} : vector<2x8x8xf32>, vector<2x8x8xf32>, vector<2x8x8xf32> -> vector<2x8x8xf32>
    "tpu.trace_stop"() : () -> ()
    %c0_92 = arith.constant 0 : index
    %c0_93 = arith.constant 0 : index
    %c0_94 = arith.constant 0 : index
    %235 = vector.load %arg8[%c0_92, %c0_93, %c0_94] : memref<2x8x32xf32, #tpu.memory_space<vmem>>, vector<2x8x8xf32>
    tpu.vector_store %arg8[%c0_92, %c0_93, %c0_94], %234 {strides = array<i32>} : memref<2x8x32xf32, #tpu.memory_space<vmem>>, vector<2x8x8xf32>,
    %236 = vector.extract_strided_slice %216 {offsets = [0, 0, 8], sizes = [2, 8, 8], strides = [1, 1, 1]} : vector<2x8x96xf32> to vector<2x8x8xf32>
    %237 = vector.extract_strided_slice %216 {offsets = [0, 0, 40], sizes = [2, 8, 8], strides = [1, 1, 1]} : vector<2x8x96xf32> to vector<2x8x8xf32>
    %238 = vector.extract_strided_slice %216 {offsets = [0, 0, 72], sizes = [2, 8, 8], strides = [1, 1, 1]} : vector<2x8x96xf32> to vector<2x8x8xf32>
    "tpu.trace_start"() <{level = 10 : i32, message = "bqd,bkd->bqk"}> : () -> ()
    %cst_95 = arith.constant dense<0.000000e+00> : vector<2x8x8xf32>
    %239 = tpu.matmul %236, %237, %cst_95 {dimension_numbers = #tpu.dot_dimension_numbers<[2], [2], [1], [1], [0, 0, 0, 1, 1, 1], [0], [0]>} : vector<2x8x8xf32>, vector<2x8x8xf32>, vector<2x8x8xf32> -> vector<2x8x8xf32>
    "tpu.trace_stop"() : () -> ()
    %cst_96 = arith.constant 0.353553385 : f32
    %240 = vector.broadcast %cst_96 : f32 to vector<2x8x8xf32>
    %241 = arith.mulf %239, %240 : vector<2x8x8xf32>
    %242 = vector.broadcast %16 : vector<1x1x8xf32> to vector<2x8x8xf32>
    %243 = arith.addf %241, %242 : vector<2x8x8xf32>
    %cst_97 = arith.constant dense<0xFF800000> : vector<2x8xf32>
    %244 = vector.multi_reduction <maximumf>, %243, %cst_97 [2] : vector<2x8x8xf32> to vector<2x8xf32>
    %245 = vector.shape_cast %244 : vector<2x8xf32> to vector<2x8x1xf32>
    %246 = vector.broadcast %245 : vector<2x8x1xf32> to vector<2x8x8xf32>
    %247 = arith.subf %243, %246 : vector<2x8x8xf32>
    %248 = math.exp %247 : vector<2x8x8xf32>
    %cst_98 = arith.constant dense<0.000000e+00> : vector<2x8xf32>
    %249 = vector.multi_reduction <add>, %248, %cst_98 [2] : vector<2x8x8xf32> to vector<2x8xf32>
    %250 = vector.shape_cast %249 : vector<2x8xf32> to vector<2x8x1xf32>
    %251 = vector.broadcast %250 : vector<2x8x1xf32> to vector<2x8x8xf32>
    %252 = arith.divf %248, %251 : vector<2x8x8xf32>
    "tpu.trace_start"() <{level = 10 : i32, message = "bqk,bkd->bqd"}> : () -> ()
    %cst_99 = arith.constant dense<0.000000e+00> : vector<2x8x8xf32>
    %253 = tpu.matmul %252, %238, %cst_99 {dimension_numbers = #tpu.dot_dimension_numbers<[2], [1], [1], [2], [0, 0, 0, 1, 1, 2], [0], [0]>} : vector<2x8x8xf32>, vector<2x8x8xf32>, vector<2x8x8xf32> -> vector<2x8x8xf32>
    "tpu.trace_stop"() : () -> ()
    %c0_100 = arith.constant 0 : index
    %c0_101 = arith.constant 0 : index
    %c8_102 = arith.constant 8 : index
    %254 = vector.load %arg8[%c0_100, %c0_101, %c8_102] : memref<2x8x32xf32, #tpu.memory_space<vmem>>, vector<2x8x8xf32>
    tpu.vector_store %arg8[%c0_100, %c0_101, %c8_102], %253 {strides = array<i32>} : memref<2x8x32xf32, #tpu.memory_space<vmem>>, vector<2x8x8xf32>,
    %255 = vector.extract_strided_slice %216 {offsets = [0, 0, 16], sizes = [2, 8, 8], strides = [1, 1, 1]} : vector<2x8x96xf32> to vector<2x8x8xf32>
    %256 = vector.extract_strided_slice %216 {offsets = [0, 0, 48], sizes = [2, 8, 8], strides = [1, 1, 1]} : vector<2x8x96xf32> to vector<2x8x8xf32>
    %257 = vector.extract_strided_slice %216 {offsets = [0, 0, 80], sizes = [2, 8, 8], strides = [1, 1, 1]} : vector<2x8x96xf32> to vector<2x8x8xf32>
    "tpu.trace_start"() <{level = 10 : i32, message = "bqd,bkd->bqk"}> : () -> ()
    %cst_103 = arith.constant dense<0.000000e+00> : vector<2x8x8xf32>
    %258 = tpu.matmul %255, %256, %cst_103 {dimension_numbers = #tpu.dot_dimension_numbers<[2], [2], [1], [1], [0, 0, 0, 1, 1, 1], [0], [0]>} : vector<2x8x8xf32>, vector<2x8x8xf32>, vector<2x8x8xf32> -> vector<2x8x8xf32>
    "tpu.trace_stop"() : () -> ()
    %cst_104 = arith.constant 0.353553385 : f32
    %259 = vector.broadcast %cst_104 : f32 to vector<2x8x8xf32>
    %260 = arith.mulf %258, %259 : vector<2x8x8xf32>
    %261 = vector.broadcast %16 : vector<1x1x8xf32> to vector<2x8x8xf32>
    %262 = arith.addf %260, %261 : vector<2x8x8xf32>
    %cst_105 = arith.constant dense<0xFF800000> : vector<2x8xf32>
    %263 = vector.multi_reduction <maximumf>, %262, %cst_105 [2] : vector<2x8x8xf32> to vector<2x8xf32>
    %264 = vector.shape_cast %263 : vector<2x8xf32> to vector<2x8x1xf32>
    %265 = vector.broadcast %264 : vector<2x8x1xf32> to vector<2x8x8xf32>
    %266 = arith.subf %262, %265 : vector<2x8x8xf32>
    %267 = math.exp %266 : vector<2x8x8xf32>
    %cst_106 = arith.constant dense<0.000000e+00> : vector<2x8xf32>
    %268 = vector.multi_reduction <add>, %267, %cst_106 [2] : vector<2x8x8xf32> to vector<2x8xf32>
    %269 = vector.shape_cast %268 : vector<2x8xf32> to vector<2x8x1xf32>
    %270 = vector.broadcast %269 : vector<2x8x1xf32> to vector<2x8x8xf32>
    %271 = arith.divf %267, %270 : vector<2x8x8xf32>
    "tpu.trace_start"() <{level = 10 : i32, message = "bqk,bkd->bqd"}> : () -> ()
    %cst_107 = arith.constant dense<0.000000e+00> : vector<2x8x8xf32>
    %272 = tpu.matmul %271, %257, %cst_107 {dimension_numbers = #tpu.dot_dimension_numbers<[2], [1], [1], [2], [0, 0, 0, 1, 1, 2], [0], [0]>} : vector<2x8x8xf32>, vector<2x8x8xf32>, vector<2x8x8xf32> -> vector<2x8x8xf32>
    "tpu.trace_stop"() : () -> ()
    %c0_108 = arith.constant 0 : index
    %c0_109 = arith.constant 0 : index
    %c16_110 = arith.constant 16 : index
    %273 = vector.load %arg8[%c0_108, %c0_109, %c16_110] : memref<2x8x32xf32, #tpu.memory_space<vmem>>, vector<2x8x8xf32>
    tpu.vector_store %arg8[%c0_108, %c0_109, %c16_110], %272 {strides = array<i32>} : memref<2x8x32xf32, #tpu.memory_space<vmem>>, vector<2x8x8xf32>,
    %274 = vector.extract_strided_slice %216 {offsets = [0, 0, 24], sizes = [2, 8, 8], strides = [1, 1, 1]} : vector<2x8x96xf32> to vector<2x8x8xf32>
    %275 = vector.extract_strided_slice %216 {offsets = [0, 0, 56], sizes = [2, 8, 8], strides = [1, 1, 1]} : vector<2x8x96xf32> to vector<2x8x8xf32>
    %276 = vector.extract_strided_slice %216 {offsets = [0, 0, 88], sizes = [2, 8, 8], strides = [1, 1, 1]} : vector<2x8x96xf32> to vector<2x8x8xf32>
    "tpu.trace_start"() <{level = 10 : i32, message = "bqd,bkd->bqk"}> : () -> ()
    %cst_111 = arith.constant dense<0.000000e+00> : vector<2x8x8xf32>
    %277 = tpu.matmul %274, %275, %cst_111 {dimension_numbers = #tpu.dot_dimension_numbers<[2], [2], [1], [1], [0, 0, 0, 1, 1, 1], [0], [0]>} : vector<2x8x8xf32>, vector<2x8x8xf32>, vector<2x8x8xf32> -> vector<2x8x8xf32>
    "tpu.trace_stop"() : () -> ()
    %cst_112 = arith.constant 0.353553385 : f32
    %278 = vector.broadcast %cst_112 : f32 to vector<2x8x8xf32>
    %279 = arith.mulf %277, %278 : vector<2x8x8xf32>
    %280 = vector.broadcast %16 : vector<1x1x8xf32> to vector<2x8x8xf32>
    %281 = arith.addf %279, %280 : vector<2x8x8xf32>
    %cst_113 = arith.constant dense<0xFF800000> : vector<2x8xf32>
    %282 = vector.multi_reduction <maximumf>, %281, %cst_113 [2] : vector<2x8x8xf32> to vector<2x8xf32>
    %283 = vector.shape_cast %282 : vector<2x8xf32> to vector<2x8x1xf32>
    %284 = vector.broadcast %283 : vector<2x8x1xf32> to vector<2x8x8xf32>
    %285 = arith.subf %281, %284 : vector<2x8x8xf32>
    %286 = math.exp %285 : vector<2x8x8xf32>
    %cst_114 = arith.constant dense<0.000000e+00> : vector<2x8xf32>
    %287 = vector.multi_reduction <add>, %286, %cst_114 [2] : vector<2x8x8xf32> to vector<2x8xf32>
    %288 = vector.shape_cast %287 : vector<2x8xf32> to vector<2x8x1xf32>
    %289 = vector.broadcast %288 : vector<2x8x1xf32> to vector<2x8x8xf32>
    %290 = arith.divf %286, %289 : vector<2x8x8xf32>
    "tpu.trace_start"() <{level = 10 : i32, message = "bqk,bkd->bqd"}> : () -> ()
    %cst_115 = arith.constant dense<0.000000e+00> : vector<2x8x8xf32>
    %291 = tpu.matmul %290, %276, %cst_115 {dimension_numbers = #tpu.dot_dimension_numbers<[2], [1], [1], [2], [0, 0, 0, 1, 1, 2], [0], [0]>} : vector<2x8x8xf32>, vector<2x8x8xf32>, vector<2x8x8xf32> -> vector<2x8x8xf32>
    "tpu.trace_stop"() : () -> ()
    %c0_116 = arith.constant 0 : index
    %c0_117 = arith.constant 0 : index
    %c24_118 = arith.constant 24 : index
    %292 = vector.load %arg8[%c0_116, %c0_117, %c24_118] : memref<2x8x32xf32, #tpu.memory_space<vmem>>, vector<2x8x8xf32>
    tpu.vector_store %arg8[%c0_116, %c0_117, %c24_118], %291 {strides = array<i32>} : memref<2x8x32xf32, #tpu.memory_space<vmem>>, vector<2x8x8xf32>,
    %c0_119 = arith.constant 0 : index
    %c0_120 = arith.constant 0 : index
    %c0_121 = arith.constant 0 : index
    %293 = vector.load %arg8[%c0_119, %c0_120, %c0_121] : memref<2x8x32xf32, #tpu.memory_space<vmem>>, vector<2x8x32xf32>
    %294 = vector.shape_cast %293 : vector<2x8x32xf32> to vector<16x32xf32>
    %295 = vector.extract_strided_slice %191 {offsets = [0, 96], sizes = [32, 32], strides = [1, 1]} : vector<32x256xf32> to vector<32x32xf32>
    %cst_122 = arith.constant dense<0.000000e+00> : vector<16x32xf32>
    %296 = tpu.matmul %294, %295, %cst_122 {dimension_numbers = #tpu.dot_dimension_numbers<[1], [0], [0], [1], [0, 0, 1, 1], [], []>} : vector<16x32xf32>, vector<32x32xf32>, vector<16x32xf32> -> vector<16x32xf32>
    %297 = arith.addf %180, %296 : vector<16x32xf32>
    %298 = vector.broadcast %185 : vector<1x32xf32> to vector<16x32xf32>
    %299 = arith.addf %297, %298 : vector<16x32xf32>
    %cst_123 = arith.constant dense<0.000000e+00> : vector<16xf32>
    %300 = vector.multi_reduction <add>, %299, %cst_123 [1] : vector<16x32xf32> to vector<16xf32>
    %301 = vector.shape_cast %300 : vector<16xf32> to vector<16x1xf32>
    %cst_124 = arith.constant 3.200000e+01 : f32
    %302 = vector.broadcast %cst_124 : f32 to vector<16x1xf32>
    %303 = arith.divf %301, %302 : vector<16x1xf32>
    %304 = vector.broadcast %303 : vector<16x1xf32> to vector<16x32xf32>
    %305 = arith.subf %299, %304 : vector<16x32xf32>
    %306 = arith.mulf %305, %305 : vector<16x32xf32>
    %cst_125 = arith.constant dense<0.000000e+00> : vector<16xf32>
    %307 = vector.multi_reduction <add>, %306, %cst_125 [1] : vector<16x32xf32> to vector<16xf32>
    %308 = vector.shape_cast %307 : vector<16xf32> to vector<16x1xf32>
    %cst_126 = arith.constant 3.200000e+01 : f32
    %309 = vector.broadcast %cst_126 : f32 to vector<16x1xf32>
    %310 = arith.divf %308, %309 : vector<16x1xf32>
    %311 = vector.broadcast %303 : vector<16x1xf32> to vector<16x32xf32>
    %312 = arith.subf %299, %311 : vector<16x32xf32>
    %cst_127 = arith.constant 9.99999974E-6 : f32
    %313 = vector.broadcast %cst_127 : f32 to vector<16x1xf32>
    %314 = arith.addf %310, %313 : vector<16x1xf32>
    %315 = math.rsqrt %314 : vector<16x1xf32>
    %316 = vector.broadcast %315 : vector<16x1xf32> to vector<16x32xf32>
    %317 = arith.mulf %312, %316 : vector<16x32xf32>
    %318 = vector.broadcast %186 : vector<1x32xf32> to vector<16x32xf32>
    %319 = arith.mulf %317, %318 : vector<16x32xf32>
    %320 = vector.broadcast %187 : vector<1x32xf32> to vector<16x32xf32>
    %321 = arith.addf %319, %320 : vector<16x32xf32>
    %322 = vector.extract_strided_slice %191 {offsets = [0, 128], sizes = [32, 128], strides = [1, 1]} : vector<32x256xf32> to vector<32x128xf32>
    %cst_128 = arith.constant dense<0.000000e+00> : vector<16x128xf32>
    %323 = tpu.matmul %321, %322, %cst_128 {dimension_numbers = #tpu.dot_dimension_numbers<[1], [0], [0], [1], [0, 0, 1, 1], [], []>} : vector<16x32xf32>, vector<32x128xf32>, vector<16x128xf32> -> vector<16x128xf32>
    %324 = vector.broadcast %189 : vector<1x128xf32> to vector<16x128xf32>
    %325 = arith.addf %323, %324 : vector<16x128xf32>
    %cst_129 = arith.constant 5.000000e-01 : f32
    %326 = vector.broadcast %cst_129 : f32 to vector<16x128xf32>
    %327 = arith.mulf %326, %325 : vector<16x128xf32>
    %cst_130 = arith.constant 4.471500e-02 : f32
    %328 = vector.broadcast %cst_130 : f32 to vector<16x128xf32>
    %329 = arith.mulf %328, %325 : vector<16x128xf32>
    %330 = arith.mulf %329, %325 : vector<16x128xf32>
    %331 = arith.mulf %330, %325 : vector<16x128xf32>
    %332 = arith.addf %325, %331 : vector<16x128xf32>
    %cst_131 = arith.constant 0.797884583 : f32
    %333 = vector.broadcast %cst_131 : f32 to vector<16x128xf32>
    %334 = arith.mulf %333, %332 : vector<16x128xf32>
    %335 = math.tanh %334 : vector<16x128xf32>
    %cst_132 = arith.constant 1.000000e+00 : f32
    %336 = vector.broadcast %cst_132 : f32 to vector<16x128xf32>
    %337 = arith.addf %336, %335 : vector<16x128xf32>
    %338 = arith.mulf %327, %337 : vector<16x128xf32>
    %c1_133 = arith.constant 1 : index
    %c0_134 = arith.constant 0 : index
    %c0_135 = arith.constant 0 : index
    %339 = vector.load %arg5[%c1_133, %c0_134, %c0_135] : memref<2x128x32xf32, #tpu.memory_space<vmem>>, vector<1x128x32xf32>
    %340 = vector.shape_cast %339 : vector<1x128x32xf32> to vector<128x32xf32>
    %cst_136 = arith.constant dense<0.000000e+00> : vector<16x32xf32>
    %341 = tpu.matmul %338, %340, %cst_136 {dimension_numbers = #tpu.dot_dimension_numbers<[1], [0], [0], [1], [0, 0, 1, 1], [], []>} : vector<16x128xf32>, vector<128x32xf32>, vector<16x32xf32> -> vector<16x32xf32>
    %342 = vector.broadcast %188 : vector<1x32xf32> to vector<16x32xf32>
    %343 = arith.addf %341, %342 : vector<16x32xf32>
    %344 = arith.addf %299, %343 : vector<16x32xf32>
    %c0_137 = arith.constant 0 : index
    %c0_138 = arith.constant 0 : index
    %c0_139 = arith.constant 0 : index
    %345 = vector.load %arg6[%c0_137, %c0_138, %c0_139] : memref<2x8x128xf32, #tpu.memory_space<vmem>>, vector<1x8x128xf32>
    %346 = vector.shape_cast %345 : vector<1x8x128xf32> to vector<8x128xf32>
    %347 = vector.extract_strided_slice %346 {offsets = [7, 0], sizes = [1, 32], strides = [1, 1]} : vector<8x128xf32> to vector<1x32xf32>
    %348 = vector.extract_strided_slice %346 {offsets = [7, 32], sizes = [1, 32], strides = [1, 1]} : vector<8x128xf32> to vector<1x32xf32>
    %349 = vector.shape_cast %344 : vector<16x32xf32> to vector<2x8x32xf32>
    %350 = vector.extract_strided_slice %349 {offsets = [0, 4, 0], sizes = [2, 1, 32], strides = [1, 1, 1]} : vector<2x8x32xf32> to vector<2x1x32xf32>
    %351 = vector.shape_cast %350 : vector<2x1x32xf32> to vector<2x32xf32>
    %cst_140 = arith.constant dense<0.000000e+00> : vector<2xf32>
    %352 = vector.multi_reduction <add>, %351, %cst_140 [1] : vector<2x32xf32> to vector<2xf32>
    %353 = vector.shape_cast %352 : vector<2xf32> to vector<2x1xf32>
    %cst_141 = arith.constant 3.200000e+01 : f32
    %354 = vector.broadcast %cst_141 : f32 to vector<2x1xf32>
    %355 = arith.divf %353, %354 : vector<2x1xf32>
    %356 = vector.broadcast %355 : vector<2x1xf32> to vector<2x32xf32>
    %357 = arith.subf %351, %356 : vector<2x32xf32>
    %358 = arith.mulf %357, %357 : vector<2x32xf32>
    %cst_142 = arith.constant dense<0.000000e+00> : vector<2xf32>
    %359 = vector.multi_reduction <add>, %358, %cst_142 [1] : vector<2x32xf32> to vector<2xf32>
    %360 = vector.shape_cast %359 : vector<2xf32> to vector<2x1xf32>
    %cst_143 = arith.constant 3.200000e+01 : f32
    %361 = vector.broadcast %cst_143 : f32 to vector<2x1xf32>
    %362 = arith.divf %360, %361 : vector<2x1xf32>
    %363 = vector.broadcast %355 : vector<2x1xf32> to vector<2x32xf32>
    %364 = arith.subf %351, %363 : vector<2x32xf32>
    %cst_144 = arith.constant 9.99999974E-6 : f32
    %365 = vector.broadcast %cst_144 : f32 to vector<2x1xf32>
    %366 = arith.addf %362, %365 : vector<2x1xf32>
    %367 = math.rsqrt %366 : vector<2x1xf32>
    %368 = vector.broadcast %367 : vector<2x1xf32> to vector<2x32xf32>
    %369 = arith.mulf %364, %368 : vector<2x32xf32>
    %370 = vector.broadcast %347 : vector<1x32xf32> to vector<2x32xf32>
    %371 = arith.mulf %369, %370 : vector<2x32xf32>
    %372 = vector.broadcast %348 : vector<1x32xf32> to vector<2x32xf32>
    %373 = arith.addf %371, %372 : vector<2x32xf32>
    %c0_145 = arith.constant 0 : index
    %c0_146 = arith.constant 0 : index
    %374 = vector.load %arg7[%c0_145, %c0_146] : memref<2x32xf32, #tpu.memory_space<vmem>>, vector<2x32xf32>
    tpu.vector_store %arg7[%c0_145, %c0_146], %373 {strides = array<i32>} : memref<2x32xf32, #tpu.memory_space<vmem>>, vector<2x32xf32>,
    return
  }
  func.func @transform_0(%arg0: i32) -> (i32, i32) {
    %c0_i32 = arith.constant 0 : i32
    %c0_i32_0 = arith.constant 0 : i32
    return %arg0, %c0_i32 : i32, i32
  }
  func.func @transform_1(%arg0: i32) -> (i32, i32) {
    %c0_i32 = arith.constant 0 : i32
    %c0_i32_0 = arith.constant 0 : i32
    return %arg0, %c0_i32 : i32, i32
  }
  func.func @transform_2(%arg0: i32) -> (i32, i32) {
    %c0_i32 = arith.constant 0 : i32
    %c0_i32_0 = arith.constant 0 : i32
    %c0_i32_1 = arith.constant 0 : i32
    return %c0_i32, %c0_i32_0 : i32, i32
  }
  func.func @transform_3(%arg0: i32) -> (i32, i32, i32) {
    %c0_i32 = arith.constant 0 : i32
    %c0_i32_0 = arith.constant 0 : i32
    %c0_i32_1 = arith.constant 0 : i32
    %c0_i32_2 = arith.constant 0 : i32
    return %c0_i32, %c0_i32_0, %c0_i32_1 : i32, i32, i32
  }
  func.func @transform_4(%arg0: i32) -> (i32, i32, i32) {
    %c0_i32 = arith.constant 0 : i32
    %c0_i32_0 = arith.constant 0 : i32
    %c0_i32_1 = arith.constant 0 : i32
    %c0_i32_2 = arith.constant 0 : i32
    return %c0_i32, %c0_i32_0, %c0_i32_1 : i32, i32, i32
  }
  func.func @transform_5(%arg0: i32) -> (i32, i32, i32) {
    %c0_i32 = arith.constant 0 : i32
    %c0_i32_0 = arith.constant 0 : i32
    %c0_i32_1 = arith.constant 0 : i32
    %c0_i32_2 = arith.constant 0 : i32
    return %c0_i32, %c0_i32_0, %c0_i32_1 : i32, i32, i32
  }
  func.func @transform_6(%arg0: i32) -> (i32, i32) {
    %c0_i32 = arith.constant 0 : i32
    %c0_i32_0 = arith.constant 0 : i32
    return %arg0, %c0_i32 : i32, i32
  }
}

</mosaic_0001>

<llo_original>
// kernel: custom-call.1
$region0: #{custom-call.1}
  %s0 = inlined_call_operand.vmem [shape: u32[2], index: 0, kind: output, shape index: {}]

// kernel: elevation_transformer_forward.1
$region0: #{elevation_transformer_forward.1}
  #allocation0 [shape = 'u32[]', space=smem, size = 0x4, offset = 0x4, fixed_abs, tag = 'smem constant byte address 0x4 - core index']
  #allocation1 [shape = 'u32[144,128]{1,0:T(1,128)}', space=vmem, size = 0x12000, scoped, tag = 'internal scratch']
  #allocation2 [shape = 'f32[2,8,32]{2,1,0:T(8,128)}', space=vmem, size = 0x2000, scoped, tag = 'scratch operand']
  %s0 = inlined_call_operand.vmem [shape: f32[8,768], index: 0, kind: input, shape index: {}]
  %s1 = inlined_call_operand.vmem [shape: f32[16,32], index: 1, kind: input, shape index: {}]
  %s2 = inlined_call_operand.vmem [shape: f32[768,32], index: 2, kind: input, shape index: {}]
  %s3 = inlined_call_operand.vmem [shape: f32[2,32,256], index: 3, kind: input, shape index: {}]
  %s4 = inlined_call_operand.vmem [shape: f32[2,128,32], index: 4, kind: input, shape index: {}]
  %s5 = inlined_call_operand.vmem [shape: f32[2,8,128], index: 5, kind: input, shape index: {}]
  %s6 = inlined_call_operand.hbm [shape: f32[2,32], index: 6, kind: output, shape index: {}]
  %s7 = sld [smem:[#allocation0]]
  $region34: #{elevation_transformer_forward.1} parent=0
    _
  %s9 = ssub.s32 1, %s7
  %s10 = scalar_select 0, %s9, %s7
  $region1: #{elevation_transformer_forward.1} parent=0
    #allocation3 [shape = 'u8[1024]{0}', space=vmem, size = 0x400, scoped, tag = 'output window, operand 0, single buffered']
    #allocation4 [shape = 's32[1]{0}', space=sflag, size = 0x4, scoped, tag = 'scoped memory for elevation_transformer_forward.1']
    %11 = vsyncpa [#allocation4], 0
    // Predicated region
    $region2: #{elevation_transformer_forward.1} parent=1 // pred_check
      _
    $region3: #{elevation_transformer_forward.1} parent=1 // pred_check_branch
      %13 = sbr.rel (0) target = $region5
    $region4: #{elevation_transformer_forward.1} parent=1 // pred_region
      _
    $region5: #{elevation_transformer_forward.1} parent=1 // pred_fallthru
      _
    // Predicated region
    $region6: #{elevation_transformer_forward.1} parent=1 // pred_check
      _
    $region7: #{elevation_transformer_forward.1} parent=1 // pred_check_branch
      %15 = sbr.rel (0) target = $region9
    $region8: #{elevation_transformer_forward.1} parent=1 // pred_region
      _
    $region9: #{elevation_transformer_forward.1} parent=1 // pred_fallthru
      _
    // Predicated region
    $region10: #{elevation_transformer_forward.1} parent=1 // pred_check
      _
    $region11: #{elevation_transformer_forward.1} parent=1 // pred_check_branch
      %17 = sbr.rel (0) target = $region13
    $region12: #{elevation_transformer_forward.1} parent=1 // pred_region
      _
    $region13: #{elevation_transformer_forward.1} parent=1 // pred_fallthru
      _
    // Predicated region
    $region14: #{elevation_transformer_forward.1} parent=1 // pred_check
      _
    $region15: #{elevation_transformer_forward.1} parent=1 // pred_check_branch
      %19 = sbr.rel (0) target = $region17
    $region16: #{elevation_transformer_forward.1} parent=1 // pred_region
      _
    $region17: #{elevation_transformer_forward.1} parent=1 // pred_fallthru
      _
    // Predicated region
    $region18: #{elevation_transformer_forward.1} parent=1 // pred_check
      _
    $region19: #{elevation_transformer_forward.1} parent=1 // pred_check_branch
      %21 = sbr.rel (0) target = $region21
    $region20: #{elevation_transformer_forward.1} parent=1 // pred_region
      _
    $region21: #{elevation_transformer_forward.1} parent=1 // pred_fallthru
      _
    // Predicated region
    $region22: #{elevation_transformer_forward.1} parent=1 // pred_check
      _
    $region23: #{elevation_transformer_forward.1} parent=1 // pred_check_branch
      %23 = sbr.rel (0) target = $region25
    $region24: #{elevation_transformer_forward.1} parent=1 // pred_region
      _
    $region25: #{elevation_transformer_forward.1} parent=1 // pred_fallthru
      _
    %v24 = vld [vmem:[%s0] sm:$0xff]
    %v25 = vld [vmem:[%s0 + $0x8] sm:$0xff]
    %v26 = vld [vmem:[%s0 + $0x10] sm:$0xff]
    %v27 = vld [vmem:[%s0 + $0x18] sm:$0xff]
    %v28 = vld [vmem:[%s0 + $0x20] sm:$0xff]
    %v29 = vld [vmem:[%s0 + $0x28] sm:$0xff]
    %v30 = vld [vmem:[%s2] sm:$0xff]
    %v31 = vld [vmem:[%s2 + $0x8] sm:$0xff]
    %v32 = vld [vmem:[%s2 + $0x10] sm:$0xff]
    %v33 = vld [vmem:[%s2 + $0x18] sm:$0xff]
    %v34 = vld [vmem:[%s2 + $0x20] sm:$0xff]
    %v35 = vld [vmem:[%s2 + $0x28] sm:$0xff]
    %v36 = vld [vmem:[%s2 + $0x30] sm:$0xff]
    %v37 = vld [vmem:[%s2 + $0x38] sm:$0xff]
    %v38 = vld [vmem:[%s2 + $0x40] sm:$0xff]
    %v39 = vld [vmem:[%s2 + $0x48] sm:$0xff]
    %v40 = vld [vmem:[%s2 + $0x50] sm:$0xff]
    %v41 = vld [vmem:[%s2 + $0x58] sm:$0xff]
    %v42 = vld [vmem:[%s2 + $0x60] sm:$0xff]
    %v43 = vld [vmem:[%s2 + $0x68] sm:$0xff]
    %v44 = vld [vmem:[%s2 + $0x70] sm:$0xff]
    %v45 = vld [vmem:[%s2 + $0x78] sm:$0xff]
    %v46 = vld [vmem:[%s2 + $0x80] sm:$0xff]
    %v47 = vld [vmem:[%s2 + $0x88] sm:$0xff]
    %v48 = vld [vmem:[%s2 + $0x90] sm:$0xff]
    %v49 = vld [vmem:[%s2 + $0x98] sm:$0xff]
    %v50 = vld [vmem:[%s2 + $0xa0] sm:$0xff]
    %v51 = vld [vmem:[%s2 + $0xa8] sm:$0xff]
    %v52 = vld [vmem:[%s2 + $0xb0] sm:$0xff]
    %v53 = vld [vmem:[%s2 + $0xb8] sm:$0xff]
    %v54 = vld [vmem:[%s2 + $0xc0] sm:$0xff]
    %v55 = vld [vmem:[%s2 + $0xc8] sm:$0xff]
    %v56 = vld [vmem:[%s2 + $0xd0] sm:$0xff]
    %v57 = vld [vmem:[%s2 + $0xd8] sm:$0xff]
    %v58 = vld [vmem:[%s2 + $0xe0] sm:$0xff]
    %v59 = vld [vmem:[%s2 + $0xe8] sm:$0xff]
    %v60 = vld [vmem:[%s2 + $0xf0] sm:$0xff]
    %v61 = vld [vmem:[%s2 + $0xf8] sm:$0xff]
    %v62 = vld [vmem:[%s2 + $0x100] sm:$0xff]
    %v63 = vld [vmem:[%s2 + $0x108] sm:$0xff]
    %v64 = vld [vmem:[%s2 + $0x110] sm:$0xff]
    %v65 = vld [vmem:[%s2 + $0x118] sm:$0xff]
    %v66 = vld [vmem:[%s2 + $0x120] sm:$0xff]
    %v67 = vld [vmem:[%s2 + $0x128] sm:$0xff]
    %v68 = vld [vmem:[%s2 + $0x130] sm:$0xff]
    %v69 = vld [vmem:[%s2 + $0x138] sm:$0xff]
    %v70 = vld [vmem:[%s2 + $0x140] sm:$0xff]
    %v71 = vld [vmem:[%s2 + $0x148] sm:$0xff]
    %v72 = vld [vmem:[%s2 + $0x150] sm:$0xff]
    %v73 = vld [vmem:[%s2 + $0x158] sm:$0xff]
    %v74 = vld [vmem:[%s2 + $0x160] sm:$0xff]
    %v75 = vld [vmem:[%s2 + $0x168] sm:$0xff]
    %v76 = vld [vmem:[%s2 + $0x170] sm:$0xff]
    %v77 = vld [vmem:[%s2 + $0x178] sm:$0xff]
    %v78 = vld [vmem:[%s2 + $0x180] sm:$0xff]
    %v79 = vld [vmem:[%s2 + $0x188] sm:$0xff]
    %v80 = vld [vmem:[%s2 + $0x190] sm:$0xff]
    %v81 = vld [vmem:[%s2 + $0x198] sm:$0xff]
    %v82 = vld [vmem:[%s2 + $0x1a0] sm:$0xff]
    %v83 = vld [vmem:[%s2 + $0x1a8] sm:$0xff]
    %v84 = vld [vmem:[%s2 + $0x1b0] sm:$0xff]
    %v85 = vld [vmem:[%s2 + $0x1b8] sm:$0xff]
    %v86 = vld [vmem:[%s2 + $0x1c0] sm:$0xff]
    %v87 = vld [vmem:[%s2 + $0x1c8] sm:$0xff]
    %v88 = vld [vmem:[%s2 + $0x1d0] sm:$0xff]
    %v89 = vld [vmem:[%s2 + $0x1d8] sm:$0xff]
    %v90 = vld [vmem:[%s2 + $0x1e0] sm:$0xff]
    %v91 = vld [vmem:[%s2 + $0x1e8] sm:$0xff]
    %v92 = vld [vmem:[%s2 + $0x1f0] sm:$0xff]
    %v93 = vld [vmem:[%s2 + $0x1f8] sm:$0xff]
    %v94 = vld [vmem:[%s2 + $0x200] sm:$0xff]
    %v95 = vld [vmem:[%s2 + $0x208] sm:$0xff]
    %v96 = vld [vmem:[%s2 + $0x210] sm:$0xff]
    %v97 = vld [vmem:[%s2 + $0x218] sm:$0xff]
    %v98 = vld [vmem:[%s2 + $0x220] sm:$0xff]
    %v99 = vld [vmem:[%s2 + $0x228] sm:$0xff]
    %v100 = vld [vmem:[%s2 + $0x230] sm:$0xff]
    %v101 = vld [vmem:[%s2 + $0x238] sm:$0xff]
    %v102 = vld [vmem:[%s2 + $0x240] sm:$0xff]
    %v103 = vld [vmem:[%s2 + $0x248] sm:$0xff]
    %v104 = vld [vmem:[%s2 + $0x250] sm:$0xff]
    %v105 = vld [vmem:[%s2 + $0x258] sm:$0xff]
    %v106 = vld [vmem:[%s2 + $0x260] sm:$0xff]
    %v107 = vld [vmem:[%s2 + $0x268] sm:$0xff]
    %v108 = vld [vmem:[%s2 + $0x270] sm:$0xff]
    %v109 = vld [vmem:[%s2 + $0x278] sm:$0xff]
    %v110 = vld [vmem:[%s2 + $0x280] sm:$0xff]
    %v111 = vld [vmem:[%s2 + $0x288] sm:$0xff]
    %v112 = vld [vmem:[%s2 + $0x290] sm:$0xff]
    %v113 = vld [vmem:[%s2 + $0x298] sm:$0xff]
    %v114 = vld [vmem:[%s2 + $0x2a0] sm:$0xff]
    %v115 = vld [vmem:[%s2 + $0x2a8] sm:$0xff]
    %v116 = vld [vmem:[%s2 + $0x2b0] sm:$0xff]
    %v117 = vld [vmem:[%s2 + $0x2b8] sm:$0xff]
    %v118 = vld [vmem:[%s2 + $0x2c0] sm:$0xff]
    %v119 = vld [vmem:[%s2 + $0x2c8] sm:$0xff]
    %v120 = vld [vmem:[%s2 + $0x2d0] sm:$0xff]
    %v121 = vld [vmem:[%s2 + $0x2d8] sm:$0xff]
    %v122 = vld [vmem:[%s2 + $0x2e0] sm:$0xff]
    %v123 = vld [vmem:[%s2 + $0x2e8] sm:$0xff]
    %v124 = vld [vmem:[%s2 + $0x2f0] sm:$0xff]
    %v125 = vld [vmem:[%s2 + $0x2f8] sm:$0xff]
    %126 = vmatprep.subr.mxu0 0.0
    %127 = vmatpush1.msra.mxu0 %v30
    %128 = vmatprep.subr.mxu0 0.0
    %129 = vmatpush1.msra.mxu0 %v31
    %130 = vmatprep.subr.mxu0 0.0
    %131 = vmatpush1.msra.mxu0 %v32
    %132 = vmatprep.subr.mxu0 0.0
    %133 = vmatpush1.msra.mxu0 %v33
    %134 = vmatprep.subr.mxu0 0.0
    %135 = vmatpush1.msra.mxu0 %v34
    %136 = vmatprep.subr.mxu0 0.0
    %137 = vmatpush1.msra.mxu0 %v35
    %138 = vmatprep.subr.mxu0 0.0
    %139 = vmatpush1.msra.mxu0 %v36
    %140 = vmatprep.subr.mxu0 0.0
    %141 = vmatpush1.msra.mxu0 %v37
    %142 = vmatprep.subr.mxu0 0.0
    %143 = vmatpush1.msra.mxu0 %v38
    %144 = vmatprep.subr.mxu0 0.0
    %145 = vmatpush1.msra.mxu0 %v39
    %146 = vmatprep.subr.mxu0 0.0
    %147 = vmatpush1.msra.mxu0 %v40
    %148 = vmatprep.subr.mxu0 0.0
    %149 = vmatpush1.msra.mxu0 %v41
    %150 = vmatprep.subr.mxu0 0.0
    %151 = vmatpush1.msra.mxu0 %v42
    %152 = vmatprep.subr.mxu0 0.0
    %153 = vmatpush1.msra.mxu0 %v43
    %154 = vmatprep.subr.mxu0 0.0
    %155 = vmatpush1.msra.mxu0 %v44
    %156 = vmatprep.subr.mxu0 0.0
    %157 = vmatpush1.msra.mxu0 %v45
    %158 = vmatprep.subr.mxu0 0.0
    %159 = vmatpush1.msra.mxu0 %v46
    %160 = vmatprep.subr.mxu0 0.0
    %161 = vmatpush1.msra.mxu0 %v47
    %162 = vmatprep.subr.mxu0 0.0
    %163 = vmatpush1.msra.mxu0 %v48
    %164 = vmatprep.subr.mxu0 0.0
    %165 = vmatpush1.msra.mxu0 %v49
    %166 = vmatprep.subr.mxu0 0.0
    %167 = vmatpush1.msra.mxu0 %v50
    %168 = vmatprep.subr.mxu0 0.0
    %169 = vmatpush1.msra.mxu0 %v51
    %170 = vmatprep.subr.mxu0 0.0
    %171 = vmatpush1.msra.mxu0 %v52
    %172 = vmatprep.subr.mxu0 0.0
    %173 = vmatpush1.msra.mxu0 %v53
    %174 = vmatprep.subr.mxu0 0.0
    %175 = vmatpush1.msra.mxu0 %v54
    %176 = vmatprep.subr.mxu0 0.0
    %177 = vmatpush1.msra.mxu0 %v55
    %178 = vmatprep.subr.mxu0 0.0
    %179 = vmatpush1.msra.mxu0 %v56
    %180 = vmatprep.subr.mxu0 0.0
    %181 = vmatpush1.msra.mxu0 %v57
    %182 = vmatprep.subr.mxu0 0.0
    %183 = vmatpush1.msra.mxu0 %v58
    %184 = vmatprep.subr.mxu0 0.0
    %185 = vmatpush1.msra.mxu0 %v59
    %186 = vmatprep.subr.mxu0 0.0
    %187 = vmatpush1.msra.mxu0 %v60
    %188 = vmatprep.subr.mxu0 0.0
    %189 = vmatpush1.msra.mxu0 %v61
    %190 = vmatprep.mubr.f32.mxu0 %v25
    %191 = vmatmul.mubr.f32.gmra.mrb[0].mxu0 %v24
    %v192 = vpop.f32.mrb[0].mxu0
    %v193 = vadd.f32 0.0, %v192
    %v194 = vpop.f32.mrb[0].mxu0
    %195 = vdwg.mxu0
    %196 = vmatprep.subr.mxu0 0.0
    %197 = vmatpush1.msra.mxu0 %v62
    %198 = vmatprep.subr.mxu0 0.0
    %199 = vmatpush1.msra.mxu0 %v63
    %200 = vmatprep.subr.mxu0 0.0
    %201 = vmatpush1.msra.mxu0 %v64
    %202 = vmatprep.subr.mxu0 0.0
    %203 = vmatpush1.msra.mxu0 %v65
    %204 = vmatprep.subr.mxu0 0.0
    %205 = vmatpush1.msra.mxu0 %v66
    %206 = vmatprep.subr.mxu0 0.0
    %207 = vmatpush1.msra.mxu0 %v67
    %208 = vmatprep.subr.mxu0 0.0
    %209 = vmatpush1.msra.mxu0 %v68
    %210 = vmatprep.subr.mxu0 0.0
    %211 = vmatpush1.msra.mxu0 %v69
    %212 = vmatprep.subr.mxu0 0.0
    %213 = vmatpush1.msra.mxu0 %v70
    %214 = vmatprep.subr.mxu0 0.0
    %215 = vmatpush1.msra.mxu0 %v71
    %216 = vmatprep.subr.mxu0 0.0
    %217 = vmatpush1.msra.mxu0 %v72
    %218 = vmatprep.subr.mxu0 0.0
    %219 = vmatpush1.msra.mxu0 %v73
    %220 = vmatprep.subr.mxu0 0.0
    %221 = vmatpush1.msra.mxu0 %v74
    %222 = vmatprep.subr.mxu0 0.0
    %223 = vmatpush1.msra.mxu0 %v75
    %224 = vmatprep.subr.mxu0 0.0
    %225 = vmatpush1.msra.mxu0 %v76
    %226 = vmatprep.subr.mxu0 0.0
    %227 = vmatpush1.msra.mxu0 %v77
    %228 = vmatprep.subr.mxu0 0.0
    %229 = vmatpush1.msra.mxu0 %v78
    %230 = vmatprep.subr.mxu0 0.0
    %231 = vmatpush1.msra.mxu0 %v79
    %232 = vmatprep.subr.mxu0 0.0
    %233 = vmatpush1.msra.mxu0 %v80
    %234 = vmatprep.subr.mxu0 0.0
    %235 = vmatpush1.msra.mxu0 %v81
    %236 = vmatprep.subr.mxu0 0.0
    %237 = vmatpush1.msra.mxu0 %v82
    %238 = vmatprep.subr.mxu0 0.0
    %239 = vmatpush1.msra.mxu0 %v83
    %240 = vmatprep.subr.mxu0 0.0
    %241 = vmatpush1.msra.mxu0 %v84
    %242 = vmatprep.subr.mxu0 0.0
    %243 = vmatpush1.msra.mxu0 %v85
    %244 = vmatprep.subr.mxu0 0.0
    %245 = vmatpush1.msra.mxu0 %v86
    %246 = vmatprep.subr.mxu0 0.0
    %247 = vmatpush1.msra.mxu0 %v87
    %248 = vmatprep.subr.mxu0 0.0
    %249 = vmatpush1.msra.mxu0 %v88
    %250 = vmatprep.subr.mxu0 0.0
    %251 = vmatpush1.msra.mxu0 %v89
    %252 = vmatprep.subr.mxu0 0.0
    %253 = vmatpush1.msra.mxu0 %v90
    %254 = vmatprep.subr.mxu0 0.0
    %255 = vmatpush1.msra.mxu0 %v91
    %256 = vmatprep.subr.mxu0 0.0
    %257 = vmatpush1.msra.mxu0 %v92
    %258 = vmatprep.subr.mxu0 0.0
    %259 = vmatpush1.msra.mxu0 %v93
    %260 = vmatprep.mubr.f32.mxu0 %v27
    %261 = vmatmul.mubr.f32.gmra.mrb[0].mxu0 %v26
    %v262 = vpop.f32.mrb[0].mxu0
    %v263 = vadd.f32 %v193, %v262
    %v264 = vpop.f32.mrb[0].mxu0
    %265 = vdwg.mxu0
    %266 = vmatprep.subr.mxu0 0.0
    %267 = vmatpush1.msra.mxu0 %v94
    %268 = vmatprep.subr.mxu0 0.0
    %269 = vmatpush1.msra.mxu0 %v95
    %270 = vmatprep.subr.mxu0 0.0
    %271 = vmatpush1.msra.mxu0 %v96
    %272 = vmatprep.subr.mxu0 0.0
    %273 = vmatpush1.msra.mxu0 %v97
    %274 = vmatprep.subr.mxu0 0.0
    %275 = vmatpush1.msra.mxu0 %v98
    %276 = vmatprep.subr.mxu0 0.0
    %277 = vmatpush1.msra.mxu0 %v99
    %278 = vmatprep.subr.mxu0 0.0
    %279 = vmatpush1.msra.mxu0 %v100
    %280 = vmatprep.subr.mxu0 0.0
    %281 = vmatpush1.msra.mxu0 %v101
    %282 = vmatprep.subr.mxu0 0.0
    %283 = vmatpush1.msra.mxu0 %v102
    %284 = vmatprep.subr.mxu0 0.0
    %285 = vmatpush1.msra.mxu0 %v103
    %286 = vmatprep.subr.mxu0 0.0
    %287 = vmatpush1.msra.mxu0 %v104
    %288 = vmatprep.subr.mxu0 0.0
    %289 = vmatpush1.msra.mxu0 %v105
    %290 = vmatprep.subr.mxu0 0.0
    %291 = vmatpush1.msra.mxu0 %v106
    %292 = vmatprep.subr.mxu0 0.0
    %293 = vmatpush1.msra.mxu0 %v107
    %294 = vmatprep.subr.mxu0 0.0
    %295 = vmatpush1.msra.mxu0 %v108
    %296 = vmatprep.subr.mxu0 0.0
    %297 = vmatpush1.msra.mxu0 %v109
    %298 = vmatprep.subr.mxu0 0.0
    %299 = vmatpush1.msra.mxu0 %v110
    %300 = vmatprep.subr.mxu0 0.0
    %301 = vmatpush1.msra.mxu0 %v111
    %302 = vmatprep.subr.mxu0 0.0
    %303 = vmatpush1.msra.mxu0 %v112
    %304 = vmatprep.subr.mxu0 0.0
    %305 = vmatpush1.msra.mxu0 %v113
    %306 = vmatprep.subr.mxu0 0.0
    %307 = vmatpush1.msra.mxu0 %v114
    %308 = vmatprep.subr.mxu0 0.0
    %309 = vmatpush1.msra.mxu0 %v115
    %310 = vmatprep.subr.mxu0 0.0
    %311 = vmatpush1.msra.mxu0 %v116
    %312 = vmatprep.subr.mxu0 0.0
    %313 = vmatpush1.msra.mxu0 %v117
    %314 = vmatprep.subr.mxu0 0.0
    %315 = vmatpush1.msra.mxu0 %v118
    %316 = vmatprep.subr.mxu0 0.0
    %317 = vmatpush1.msra.mxu0 %v119
    %318 = vmatprep.subr.mxu0 0.0
    %319 = vmatpush1.msra.mxu0 %v120
    %320 = vmatprep.subr.mxu0 0.0
    %321 = vmatpush1.msra.mxu0 %v121
    %322 = vmatprep.subr.mxu0 0.0
    %323 = vmatpush1.msra.mxu0 %v122
    %324 = vmatprep.subr.mxu0 0.0
    %325 = vmatpush1.msra.mxu0 %v123
    %326 = vmatprep.subr.mxu0 0.0
    %327 = vmatpush1.msra.mxu0 %v124
    %328 = vmatprep.subr.mxu0 0.0
    %329 = vmatpush1.msra.mxu0 %v125
    %330 = vmatprep.mubr.f32.mxu0 %v29
    %331 = vmatmul.mubr.f32.gmra.mrb[0].mxu0 %v28
    %v332 = vpop.f32.mrb[0].mxu0
    %v333 = vadd.f32 %v263, %v332
    %v334 = vpop.f32.mrb[0].mxu0
    %335 = vdwg.mxu0
    %vm336 = vcmask 261120
    %337 = vst.msk [vmem:[#allocation2] sm:$0xff] %vm336, 0.0
    %338 = vst.msk [vmem:[#allocation2 + $0x8] sm:$0xff] %vm336, 0.0
    %v340 = vcombine.high %v333, %v333
    %vm342 = vcmask 257024
    %343 = vst.msk [vmem:[#allocation2] sm:$0xf] %vm342, %v333
    %344 = vst.msk [vmem:[#allocation2 + $0x8] sm:$0xf] %vm342, %v340
    %v345 = vld [vmem:[#allocation2] sm:$0xff]
    %v346 = vld [vmem:[#allocation2 + $0x8] sm:$0xff]
    %v347 = vld [vmem:[%s1] sm:$0xff]
    %v348 = vld [vmem:[%s1 + $0x8] sm:$0xff]
    %v349 = vadd.f32 %v345, %v347
    %v350 = vadd.f32 %v346, %v348
    %v351 = vlaneseq
    %v352 = vand.u32 %v351, 127
    %vm353 = vcmp.lt.s32.totalorder %v352, 5
    %v354 = vsel %vm353, 0.0, -1e+30
    %v355 = vld [vmem:[%s5] sm:$0xff]
    %v356 = vld [vmem:[%s3] sm:$0xff]
    %v357 = vld [vmem:[%s3 + $0x8] sm:$0xff]
    %v358 = vld [vmem:[%s3 + $0x10] sm:$0xff]
    %v359 = vld [vmem:[%s3 + $0x18] sm:$0xff]
    %v360 = vld [vmem:[%s3 + $0x20] sm:$0xff]
    %v361 = vld [vmem:[%s3 + $0x28] sm:$0xff]
    %v362 = vld [vmem:[%s3 + $0x30] sm:$0xff]
    %v363 = vld [vmem:[%s3 + $0x38] sm:$0xff]
    %v364 = vsel %vm336, %v349, 0.0
    %365 = vadd.xlane.f32.xlu0 %v364
    %v366 = vpop.xlane.xlu0 %365
    %v367 = vsel %vm336, %v350, 0.0
    %368 = vadd.xlane.f32.xlu0 %v367
    %v369 = vpop.xlane.xlu0 %368
    %v370 = vrcp.pop 32.0
    %v371 = vmul.f32 %v366, %v370
    %v372 = vmul.f32 %v369, %v370
    %v373 = vsub.f32 %v349, %v371
    %v374 = vsub.f32 %v350, %v372
    %v375 = vmul.f32 %v373, %v373
    %v376 = vmul.f32 %v374, %v374
    %v377 = vsel %vm336, %v375, 0.0
    %378 = vadd.xlane.f32.xlu0 %v377
    %v379 = vpop.xlane.xlu0 %378
    %v380 = vsel %vm336, %v376, 0.0
    %381 = vadd.xlane.f32.xlu0 %v380
    %v382 = vpop.xlane.xlu0 %381
    %v383 = vmul.f32 %v379, %v370
    %v384 = vmul.f32 %v382, %v370
    %v385 = vadd.f32 %v383, 1e-05
    %v386 = vadd.f32 %v384, 1e-05
    %v387 = vrsqrt.pop %v385
    %v388 = vrsqrt.pop %v386
    %v389 = vmul.f32 %v373, %v387
    %v390 = vmul.f32 %v374, %v388
    %v391 = vlaneseq
    %v392 = vshrl.u32 %v391, 7
    %v393 = vsub.s32 0, %v392
    %v394 = vrot.slane %v355, %v393
    %v395 = vmul.f32 %v389, %v394
    %v396 = vmul.f32 %v390, %v394
    %v397 = vlaneseq
    %v398 = vshrl.u32 %v397, 7
    %v399 = vsub.s32 1, %v398
    %v400 = vrot.slane %v355, %v399
    %v401 = vadd.f32 %v395, %v400
    %v402 = vadd.f32 %v396, %v400
    %v404 = vsel %vm336, %v401, 0
    %v407 = vsel %vm336, %v402, 0
    %409 = vmatprep.subr.mxu0 0.0
    %410 = vmatpush1.msra.mxu0 %v356
    %411 = vmatprep.subr.mxu0 0.0
    %412 = vmatpush1.msra.mxu0 %v358
    %413 = vmatprep.subr.mxu0 0.0
    %414 = vmatpush1.msra.mxu0 %v360
    %415 = vmatprep.subr.mxu0 0.0
    %416 = vmatpush1.msra.mxu0 %v362
    %417 = vmatprep.subr.mxu0 0.0
    %418 = vmatpush1.msra.mxu0 0.0
    %419 = vmatprep.subr.mxu0 0.0
    %420 = vmatpush1.msra.mxu0 0.0
    %421 = vmatprep.subr.mxu0 0.0
    %422 = vmatpush1.msra.mxu0 0.0
    %423 = vmatprep.subr.mxu0 0.0
    %424 = vmatpush1.msra.mxu0 0.0
    %425 = vmatprep.subr.mxu0 0.0
    %426 = vmatpush1.msra.mxu0 0.0
    %427 = vmatprep.subr.mxu0 0.0
    %428 = vmatpush1.msra.mxu0 0.0
    %429 = vmatprep.subr.mxu0 0.0
    %430 = vmatpush1.msra.mxu0 0.0
    %431 = vmatprep.subr.mxu0 0.0
    %432 = vmatpush1.msra.mxu0 0.0
    %433 = vmatprep.subr.mxu0 0.0
    %434 = vmatpush1.msra.mxu0 0.0
    %435 = vmatprep.subr.mxu0 0.0
    %436 = vmatpush1.msra.mxu0 0.0
    %437 = vmatprep.subr.mxu0 0.0
    %438 = vmatpush1.msra.mxu0 0.0
    %439 = vmatprep.subr.mxu0 0.0
    %440 = vmatpush1.msra.mxu0 0.0
    %441 = vmatprep.subr.mxu0 0.0
    %442 = vmatpush1.msra.mxu0 0.0
    %443 = vmatprep.subr.mxu0 0.0
    %444 = vmatpush1.msra.mxu0 0.0
    %445 = vmatprep.subr.mxu0 0.0
    %446 = vmatpush1.msra.mxu0 0.0
    %447 = vmatprep.subr.mxu0 0.0
    %448 = vmatpush1.msra.mxu0 0.0
    %449 = vmatprep.subr.mxu0 0.0
    %450 = vmatpush1.msra.mxu0 0.0
    %451 = vmatprep.subr.mxu0 0.0
    %452 = vmatpush1.msra.mxu0 0.0
    %453 = vmatprep.subr.mxu0 0.0
    %454 = vmatpush1.msra.mxu0 0.0
    %455 = vmatprep.subr.mxu0 0.0
    %456 = vmatpush1.msra.mxu0 0.0
    %457 = vmatprep.subr.mxu0 0.0
    %458 = vmatpush1.msra.mxu0 0.0
    %459 = vmatprep.subr.mxu0 0.0
    %460 = vmatpush1.msra.mxu0 0.0
    %461 = vmatprep.subr.mxu0 0.0
    %462 = vmatpush1.msra.mxu0 0.0
    %463 = vmatprep.subr.mxu0 0.0
    %464 = vmatpush1.msra.mxu0 0.0
    %465 = vmatprep.subr.mxu0 0.0
    %466 = vmatpush1.msra.mxu0 0.0
    %467 = vmatprep.subr.mxu0 0.0
    %468 = vmatpush1.msra.mxu0 0.0
    %469 = vmatprep.subr.mxu0 0.0
    %470 = vmatpush1.msra.mxu0 0.0
    %471 = vmatprep.subr.mxu0 0.0
    %472 = vmatpush1.msra.mxu0 0.0
    %473 = vmatprep.mubr.f32.mxu0 0.0
    %474 = vmatmul.mubr.f32.gmra.mrb[0].mxu0 %v404
    %v475 = vpop.f32.mrb[0].mxu0
    %v476 = vadd.f32 0.0, %v475
    %v477 = vpop.f32.mrb[0].mxu0
    %478 = vmatprep.mubr.f32.mxu0 0.0
    %479 = vmatmul.mubr.f32.gmra.mrb[0].mxu0 %v407
    %v480 = vpop.f32.mrb[0].mxu0
    %v481 = vadd.f32 0.0, %v480
    %v482 = vpop.f32.mrb[0].mxu0
    %483 = vdwg.mxu0
    %485 = vrot.lane.b32.xlu0 %v476, 96
    %v486 = vpop.permute.xlu0 %485
    %vm487 = vcmask 64512
    %v488 = vsel %vm487, %v476, 0
    %v490 = vsel %vm487, %v486, 0
    %492 = vmatprep.subr.mxu0 0.0
    %493 = vmatpush1.xpose.msra.mxu0 %v490
    %494 = vmatprep.subr.mxu0 0.0
    %495 = vmatpush1.xpose.msra.mxu0 0.0
    %496 = vmatprep.subr.mxu0 0.0
    %497 = vmatpush1.xpose.msra.mxu0 0.0
    %498 = vmatprep.subr.mxu0 0.0
    %499 = vmatpush1.xpose.msra.mxu0 0.0
    %500 = vmatprep.subr.mxu0 0.0
    %501 = vmatpush1.xpose.msra.mxu0 0.0
    %502 = vmatprep.subr.mxu0 0.0
    %503 = vmatpush1.xpose.msra.mxu0 0.0
    %504 = vmatprep.subr.mxu0 0.0
    %505 = vmatpush1.xpose.msra.mxu0 0.0
    %506 = vmatprep.subr.mxu0 0.0
    %507 = vmatpush1.xpose.msra.mxu0 0.0
    %508 = vmatprep.subr.mxu0 0.0
    %509 = vmatpush1.xpose.msra.mxu0 0.0
    %510 = vmatprep.subr.mxu0 0.0
    %511 = vmatpush1.xpose.msra.mxu0 0.0
    %512 = vmatprep.subr.mxu0 0.0
    %513 = vmatpush1.xpose.msra.mxu0 0.0
    %514 = vmatprep.subr.mxu0 0.0
    %515 = vmatpush1.xpose.msra.mxu0 0.0
    %516 = vmatprep.subr.mxu0 0.0
    %517 = vmatpush1.xpose.msra.mxu0 0.0
    %518 = vmatprep.subr.mxu0 0.0
    %519 = vmatpush1.xpose.msra.mxu0 0.0
    %520 = vmatprep.subr.mxu0 0.0
    %521 = vmatpush1.xpose.msra.mxu0 0.0
    %522 = vmatprep.subr.mxu0 0.0
    %523 = vmatpush1.xpose.msra.mxu0 0.0
    %524 = vmatprep.subr.mxu0 0.0
    %525 = vmatpush1.xpose.msra.mxu0 0.0
    %526 = vmatprep.subr.mxu0 0.0
    %527 = vmatpush1.xpose.msra.mxu0 0.0
    %528 = vmatprep.subr.mxu0 0.0
    %529 = vmatpush1.xpose.msra.mxu0 0.0
    %530 = vmatprep.subr.mxu0 0.0
    %531 = vmatpush1.xpose.msra.mxu0 0.0
    %532 = vmatprep.subr.mxu0 0.0
    %533 = vmatpush1.xpose.msra.mxu0 0.0
    %534 = vmatprep.subr.mxu0 0.0
    %535 = vmatpush1.xpose.msra.mxu0 0.0
    %536 = vmatprep.subr.mxu0 0.0
    %537 = vmatpush1.xpose.msra.mxu0 0.0
    %538 = vmatprep.subr.mxu0 0.0
    %539 = vmatpush1.xpose.msra.mxu0 0.0
    %540 = vmatprep.subr.mxu0 0.0
    %541 = vmatpush1.xpose.msra.mxu0 0.0
    %542 = vmatprep.subr.mxu0 0.0
    %543 = vmatpush1.xpose.msra.mxu0 0.0
    %544 = vmatprep.subr.mxu0 0.0
    %545 = vmatpush1.xpose.msra.mxu0 0.0
    %546 = vmatprep.subr.mxu0 0.0
    %547 = vmatpush1.xpose.msra.mxu0 0.0
    %548 = vmatprep.subr.mxu0 0.0
    %549 = vmatpush1.xpose.msra.mxu0 0.0
    %550 = vmatprep.subr.mxu0 0.0
    %551 = vmatpush1.xpose.msra.mxu0 0.0
    %552 = vmatprep.subr.mxu0 0.0
    %553 = vmatpush1.xpose.msra.mxu0 0.0
    %554 = vmatprep.subr.mxu0 0.0
    %555 = vmatpush1.xpose.msra.mxu0 0.0
    %556 = vmatprep.mubr.f32.mxu0 0.0
    %557 = vmatmul.mubr.f32.gmra.mrb[0].mxu0 %v488
    %v558 = vpop.f32.mrb[0].mxu0
    %v559 = vadd.f32 0.0, %v558
    %v560 = vpop.f32.mrb[0].mxu0
    %561 = vdwg.mxu0
    %563 = vrot.lane.b32.xlu0 %v481, 96
    %v564 = vpop.permute.xlu0 %563
    %v565 = vsel %vm487, %v481, 0
    %v567 = vsel %vm487, %v564, 0
    %569 = vmatprep.subr.mxu0 0.0
    %570 = vmatpush1.xpose.msra.mxu0 %v567
    %571 = vmatprep.subr.mxu0 0.0
    %572 = vmatpush1.xpose.msra.mxu0 0.0
    %573 = vmatprep.subr.mxu0 0.0
    %574 = vmatpush1.xpose.msra.mxu0 0.0
    %575 = vmatprep.subr.mxu0 0.0
    %576 = vmatpush1.xpose.msra.mxu0 0.0
    %577 = vmatprep.subr.mxu0 0.0
    %578 = vmatpush1.xpose.msra.mxu0 0.0
    %579 = vmatprep.subr.mxu0 0.0
    %580 = vmatpush1.xpose.msra.mxu0 0.0
    %581 = vmatprep.subr.mxu0 0.0
    %582 = vmatpush1.xpose.msra.mxu0 0.0
    %583 = vmatprep.subr.mxu0 0.0
    %584 = vmatpush1.xpose.msra.mxu0 0.0
    %585 = vmatprep.subr.mxu0 0.0
    %586 = vmatpush1.xpose.msra.mxu0 0.0
    %587 = vmatprep.subr.mxu0 0.0
    %588 = vmatpush1.xpose.msra.mxu0 0.0
    %589 = vmatprep.subr.mxu0 0.0
    %590 = vmatpush1.xpose.msra.mxu0 0.0
    %591 = vmatprep.subr.mxu0 0.0
    %592 = vmatpush1.xpose.msra.mxu0 0.0
    %593 = vmatprep.subr.mxu0 0.0
    %594 = vmatpush1.xpose.msra.mxu0 0.0
    %595 = vmatprep.subr.mxu0 0.0
    %596 = vmatpush1.xpose.msra.mxu0 0.0
    %597 = vmatprep.subr.mxu0 0.0
    %598 = vmatpush1.xpose.msra.mxu0 0.0
    %599 = vmatprep.subr.mxu0 0.0
    %600 = vmatpush1.xpose.msra.mxu0 0.0
    %601 = vmatprep.subr.mxu0 0.0
    %602 = vmatpush1.xpose.msra.mxu0 0.0
    %603 = vmatprep.subr.mxu0 0.0
    %604 = vmatpush1.xpose.msra.mxu0 0.0
    %605 = vmatprep.subr.mxu0 0.0
    %606 = vmatpush1.xpose.msra.mxu0 0.0
    %607 = vmatprep.subr.mxu0 0.0
    %608 = vmatpush1.xpose.msra.mxu0 0.0
    %609 = vmatprep.subr.mxu0 0.0
    %610 = vmatpush1.xpose.msra.mxu0 0.0
    %611 = vmatprep.subr.mxu0 0.0
    %612 = vmatpush1.xpose.msra.mxu0 0.0
    %613 = vmatprep.subr.mxu0 0.0
    %614 = vmatpush1.xpose.msra.mxu0 0.0
    %615 = vmatprep.subr.mxu0 0.0
    %616 = vmatpush1.xpose.msra.mxu0 0.0
    %617 = vmatprep.subr.mxu0 0.0
    %618 = vmatpush1.xpose.msra.mxu0 0.0
    %619 = vmatprep.subr.mxu0 0.0
    %620 = vmatpush1.xpose.msra.mxu0 0.0
    %621 = vmatprep.subr.mxu0 0.0
    %622 = vmatpush1.xpose.msra.mxu0 0.0
    %623 = vmatprep.subr.mxu0 0.0
    %624 = vmatpush1.xpose.msra.mxu0 0.0
    %625 = vmatprep.subr.mxu0 0.0
    %626 = vmatpush1.xpose.msra.mxu0 0.0
    %627 = vmatprep.subr.mxu0 0.0
    %628 = vmatpush1.xpose.msra.mxu0 0.0
    %629 = vmatprep.subr.mxu0 0.0
    %630 = vmatpush1.xpose.msra.mxu0 0.0
    %631 = vmatprep.subr.mxu0 0.0
    %632 = vmatpush1.xpose.msra.mxu0 0.0
    %633 = vmatprep.mubr.f32.mxu0 0.0
    %634 = vmatmul.mubr.f32.gmra.mrb[0].mxu0 %v565
    %v635 = vpop.f32.mrb[0].mxu0
    %v636 = vadd.f32 0.0, %v635
    %v637 = vpop.f32.mrb[0].mxu0
    %638 = vdwg.mxu0
    %v639 = vmul.f32 %v559, 0.35355338
    %v640 = vmul.f32 %v636, 0.35355338
    %v641 = vadd.f32 %v639, %v354
    %v642 = vadd.f32 %v640, %v354
    %v643 = vsel %vm487, %v641, -inf
    %644 = vmax.xlane.f32.xlu0 %v643
    %v645 = vpop.xlane.xlu0 %644
    %v646 = vsel %vm487, %v642, -inf
    %647 = vmax.xlane.f32.xlu0 %v646
    %v648 = vpop.xlane.xlu0 %647
    %v649 = vsub.f32 %v641, %v645
    %v650 = vsub.f32 %v642, %v648
    %v651 = vmul.f32 %v649, 1.442695
    %v652 = vpow.pop %v651
    %v653 = vmul.f32 %v650, 1.442695
    %v654 = vpow.pop %v653
    %v655 = vsel %vm487, %v652, 0.0
    %656 = vadd.xlane.f32.xlu0 %v655
    %v657 = vpop.xlane.xlu0 %656
    %v658 = vsel %vm487, %v654, 0.0
    %659 = vadd.xlane.f32.xlu0 %v658
    %v660 = vpop.xlane.xlu0 %659
    %v661 = vrcp.pop %v657
    %v662 = vmul.f32 %v652, %v661
    %v663 = vrcp.pop %v660
    %v664 = vmul.f32 %v654, %v663
    %665 = vrot.lane.b32.xlu0 %v476, 64
    %v666 = vpop.permute.xlu0 %665
    %v669 = vsel %vm487, %v662, 0
    %671 = vmatprep.subr.mxu0 0.0
    %672 = vmatpush1.msra.mxu0 %v666
    %673 = vmatprep.subr.mxu0 0.0
    %674 = vmatpush1.msra.mxu0 0.0
    %675 = vmatprep.subr.mxu0 0.0
    %676 = vmatpush1.msra.mxu0 0.0
    %677 = vmatprep.subr.mxu0 0.0
    %678 = vmatpush1.msra.mxu0 0.0
    %679 = vmatprep.subr.mxu0 0.0
    %680 = vmatpush1.msra.mxu0 0.0
    %681 = vmatprep.subr.mxu0 0.0
    %682 = vmatpush1.msra.mxu0 0.0
    %683 = vmatprep.subr.mxu0 0.0
    %684 = vmatpush1.msra.mxu0 0.0
    %685 = vmatprep.subr.mxu0 0.0
    %686 = vmatpush1.msra.mxu0 0.0
    %687 = vmatprep.subr.mxu0 0.0
    %688 = vmatpush1.msra.mxu0 0.0
    %689 = vmatprep.subr.mxu0 0.0
    %690 = vmatpush1.msra.mxu0 0.0
    %691 = vmatprep.subr.mxu0 0.0
    %692 = vmatpush1.msra.mxu0 0.0
    %693 = vmatprep.subr.mxu0 0.0
    %694 = vmatpush1.msra.mxu0 0.0
    %695 = vmatprep.subr.mxu0 0.0
    %696 = vmatpush1.msra.mxu0 0.0
    %697 = vmatprep.subr.mxu0 0.0
    %698 = vmatpush1.msra.mxu0 0.0
    %699 = vmatprep.subr.mxu0 0.0
    %700 = vmatpush1.msra.mxu0 0.0
    %701 = vmatprep.subr.mxu0 0.0
    %702 = vmatpush1.msra.mxu0 0.0
    %703 = vmatprep.subr.mxu0 0.0
    %704 = vmatpush1.msra.mxu0 0.0
    %705 = vmatprep.subr.mxu0 0.0
    %706 = vmatpush1.msra.mxu0 0.0
    %707 = vmatprep.subr.mxu0 0.0
    %708 = vmatpush1.msra.mxu0 0.0
    %709 = vmatprep.subr.mxu0 0.0
    %710 = vmatpush1.msra.mxu0 0.0
    %711 = vmatprep.subr.mxu0 0.0
    %712 = vmatpush1.msra.mxu0 0.0
    %713 = vmatprep.subr.mxu0 0.0
    %714 = vmatpush1.msra.mxu0 0.0
    %715 = vmatprep.subr.mxu0 0.0
    %716 = vmatpush1.msra.mxu0 0.0
    %717 = vmatprep.subr.mxu0 0.0
    %718 = vmatpush1.msra.mxu0 0.0
    %719 = vmatprep.subr.mxu0 0.0
    %720 = vmatpush1.msra.mxu0 0.0
    %721 = vmatprep.subr.mxu0 0.0
    %722 = vmatpush1.msra.mxu0 0.0
    %723 = vmatprep.subr.mxu0 0.0
    %724 = vmatpush1.msra.mxu0 0.0
    %725 = vmatprep.subr.mxu0 0.0
    %726 = vmatpush1.msra.mxu0 0.0
    %727 = vmatprep.subr.mxu0 0.0
    %728 = vmatpush1.msra.mxu0 0.0
    %729 = vmatprep.subr.mxu0 0.0
    %730 = vmatpush1.msra.mxu0 0.0
    %731 = vmatprep.subr.mxu0 0.0
    %732 = vmatpush1.msra.mxu0 0.0
    %733 = vmatprep.subr.mxu0 0.0
    %734 = vmatpush1.msra.mxu0 0.0
    %735 = vmatprep.mubr.f32.mxu0 0.0
    %736 = vmatmul.mubr.f32.gmra.mrb[0].mxu0 %v669
    %v737 = vpop.f32.mrb[0].mxu0
    %v738 = vadd.f32 0.0, %v737
    %v739 = vpop.f32.mrb[0].mxu0
    %740 = vdwg.mxu0
    %741 = vrot.lane.b32.xlu0 %v481, 64
    %v742 = vpop.permute.xlu0 %741
    %v745 = vsel %vm487, %v664, 0
    %747 = vmatprep.subr.mxu0 0.0
    %748 = vmatpush1.msra.mxu0 %v742
    %749 = vmatprep.subr.mxu0 0.0
    %750 = vmatpush1.msra.mxu0 0.0
    %751 = vmatprep.subr.mxu0 0.0
    %752 = vmatpush1.msra.mxu0 0.0
    %753 = vmatprep.subr.mxu0 0.0
    %754 = vmatpush1.msra.mxu0 0.0
    %755 = vmatprep.subr.mxu0 0.0
    %756 = vmatpush1.msra.mxu0 0.0
    %757 = vmatprep.subr.mxu0 0.0
    %758 = vmatpush1.msra.mxu0 0.0
    %759 = vmatprep.subr.mxu0 0.0
    %760 = vmatpush1.msra.mxu0 0.0
    %761 = vmatprep.subr.mxu0 0.0
    %762 = vmatpush1.msra.mxu0 0.0
    %763 = vmatprep.subr.mxu0 0.0
    %764 = vmatpush1.msra.mxu0 0.0
    %765 = vmatprep.subr.mxu0 0.0
    %766 = vmatpush1.msra.mxu0 0.0
    %767 = vmatprep.subr.mxu0 0.0
    %768 = vmatpush1.msra.mxu0 0.0
    %769 = vmatprep.subr.mxu0 0.0
    %770 = vmatpush1.msra.mxu0 0.0
    %771 = vmatprep.subr.mxu0 0.0
    %772 = vmatpush1.msra.mxu0 0.0
    %773 = vmatprep.subr.mxu0 0.0
    %774 = vmatpush1.msra.mxu0 0.0
    %775 = vmatprep.subr.mxu0 0.0
    %776 = vmatpush1.msra.mxu0 0.0
    %777 = vmatprep.subr.mxu0 0.0
    %778 = vmatpush1.msra.mxu0 0.0
    %779 = vmatprep.subr.mxu0 0.0
    %780 = vmatpush1.msra.mxu0 0.0
    %781 = vmatprep.subr.mxu0 0.0
    %782 = vmatpush1.msra.mxu0 0.0
    %783 = vmatprep.subr.mxu0 0.0
    %784 = vmatpush1.msra.mxu0 0.0
    %785 = vmatprep.subr.mxu0 0.0
    %786 = vmatpush1.msra.mxu0 0.0
    %787 = vmatprep.subr.mxu0 0.0
    %788 = vmatpush1.msra.mxu0 0.0
    %789 = vmatprep.subr.mxu0 0.0
    %790 = vmatpush1.msra.mxu0 0.0
    %791 = vmatprep.subr.mxu0 0.0
    %792 = vmatpush1.msra.mxu0 0.0
    %793 = vmatprep.subr.mxu0 0.0
    %794 = vmatpush1.msra.mxu0 0.0
    %795 = vmatprep.subr.mxu0 0.0
    %796 = vmatpush1.msra.mxu0 0.0
    %797 = vmatprep.subr.mxu0 0.0
    %798 = vmatpush1.msra.mxu0 0.0
    %799 = vmatprep.subr.mxu0 0.0
    %800 = vmatpush1.msra.mxu0 0.0
    %801 = vmatprep.subr.mxu0 0.0
    %802 = vmatpush1.msra.mxu0 0.0
    %803 = vmatprep.subr.mxu0 0.0
    %804 = vmatpush1.msra.mxu0 0.0
    %805 = vmatprep.subr.mxu0 0.0
    %806 = vmatpush1.msra.mxu0 0.0
    %807 = vmatprep.subr.mxu0 0.0
    %808 = vmatpush1.msra.mxu0 0.0
    %809 = vmatprep.subr.mxu0 0.0
    %810 = vmatpush1.msra.mxu0 0.0
    %811 = vmatprep.mubr.f32.mxu0 0.0
    %812 = vmatmul.mubr.f32.gmra.mrb[0].mxu0 %v745
    %v813 = vpop.f32.mrb[0].mxu0
    %v814 = vadd.f32 0.0, %v813
    %v815 = vpop.f32.mrb[0].mxu0
    %816 = vdwg.mxu0
    %817 = vst.msk [vmem:[#allocation2] sm:$0xff] %vm487, %v738
    %818 = vst.msk [vmem:[#allocation2 + $0x8] sm:$0xff] %vm487, %v814
    %819 = vrot.lane.b32.xlu0 %v476, 120
    %v820 = vpop.permute.xlu0 %819
    %821 = vrot.lane.b32.xlu0 %v476, 88
    %v822 = vpop.permute.xlu0 %821
    %v823 = vsel %vm487, %v820, 0
    %v825 = vsel %vm487, %v822, 0
    %827 = vmatprep.subr.mxu0 0.0
    %828 = vmatpush1.xpose.msra.mxu0 %v825
    %829 = vmatprep.subr.mxu0 0.0
    %830 = vmatpush1.xpose.msra.mxu0 0.0
    %831 = vmatprep.subr.mxu0 0.0
    %832 = vmatpush1.xpose.msra.mxu0 0.0
    %833 = vmatprep.subr.mxu0 0.0
    %834 = vmatpush1.xpose.msra.mxu0 0.0
    %835 = vmatprep.subr.mxu0 0.0
    %836 = vmatpush1.xpose.msra.mxu0 0.0
    %837 = vmatprep.subr.mxu0 0.0
    %838 = vmatpush1.xpose.msra.mxu0 0.0
    %839 = vmatprep.subr.mxu0 0.0
    %840 = vmatpush1.xpose.msra.mxu0 0.0
    %841 = vmatprep.subr.mxu0 0.0
    %842 = vmatpush1.xpose.msra.mxu0 0.0
    %843 = vmatprep.subr.mxu0 0.0
    %844 = vmatpush1.xpose.msra.mxu0 0.0
    %845 = vmatprep.subr.mxu0 0.0
    %846 = vmatpush1.xpose.msra.mxu0 0.0
    %847 = vmatprep.subr.mxu0 0.0
    %848 = vmatpush1.xpose.msra.mxu0 0.0
    %849 = vmatprep.subr.mxu0 0.0
    %850 = vmatpush1.xpose.msra.mxu0 0.0
    %851 = vmatprep.subr.mxu0 0.0
    %852 = vmatpush1.xpose.msra.mxu0 0.0
    %853 = vmatprep.subr.mxu0 0.0
    %854 = vmatpush1.xpose.msra.mxu0 0.0
    %855 = vmatprep.subr.mxu0 0.0
    %856 = vmatpush1.xpose.msra.mxu0 0.0
    %857 = vmatprep.subr.mxu0 0.0
    %858 = vmatpush1.xpose.msra.mxu0 0.0
    %859 = vmatprep.subr.mxu0 0.0
    %860 = vmatpush1.xpose.msra.mxu0 0.0
    %861 = vmatprep.subr.mxu0 0.0
    %862 = vmatpush1.xpose.msra.mxu0 0.0
    %863 = vmatprep.subr.mxu0 0.0
    %864 = vmatpush1.xpose.msra.mxu0 0.0
    %865 = vmatprep.subr.mxu0 0.0
    %866 = vmatpush1.xpose.msra.mxu0 0.0
    %867 = vmatprep.subr.mxu0 0.0
    %868 = vmatpush1.xpose.msra.mxu0 0.0
    %869 = vmatprep.subr.mxu0 0.0
    %870 = vmatpush1.xpose.msra.mxu0 0.0
    %871 = vmatprep.subr.mxu0 0.0
    %872 = vmatpush1.xpose.msra.mxu0 0.0
    %873 = vmatprep.subr.mxu0 0.0
    %874 = vmatpush1.xpose.msra.mxu0 0.0
    %875 = vmatprep.subr.mxu0 0.0
    %876 = vmatpush1.xpose.msra.mxu0 0.0
    %877 = vmatprep.subr.mxu0 0.0
    %878 = vmatpush1.xpose.msra.mxu0 0.0
    %879 = vmatprep.subr.mxu0 0.0
    %880 = vmatpush1.xpose.msra.mxu0 0.0
    %881 = vmatprep.subr.mxu0 0.0
    %882 = vmatpush1.xpose.msra.mxu0 0.0
    %883 = vmatprep.subr.mxu0 0.0
    %884 = vmatpush1.xpose.msra.mxu0 0.0
    %885 = vmatprep.subr.mxu0 0.0
    %886 = vmatpush1.xpose.msra.mxu0 0.0
    %887 = vmatprep.subr.mxu0 0.0
    %888 = vmatpush1.xpose.msra.mxu0 0.0
    %889 = vmatprep.subr.mxu0 0.0
    %890 = vmatpush1.xpose.msra.mxu0 0.0
    %891 = vmatprep.mubr.f32.mxu0 0.0
    %892 = vmatmul.mubr.f32.gmra.mrb[0].mxu0 %v823
    %v893 = vpop.f32.mrb[0].mxu0
    %v894 = vadd.f32 0.0, %v893
    %v895 = vpop.f32.mrb[0].mxu0
    %896 = vdwg.mxu0
    %897 = vrot.lane.b32.xlu0 %v481, 120
    %v898 = vpop.permute.xlu0 %897
    %899 = vrot.lane.b32.xlu0 %v481, 88
    %v900 = vpop.permute.xlu0 %899
    %v901 = vsel %vm487, %v898, 0
    %v903 = vsel %vm487, %v900, 0
    %905 = vmatprep.subr.mxu0 0.0
    %906 = vmatpush1.xpose.msra.mxu0 %v903
    %907 = vmatprep.subr.mxu0 0.0
    %908 = vmatpush1.xpose.msra.mxu0 0.0
    %909 = vmatprep.subr.mxu0 0.0
    %910 = vmatpush1.xpose.msra.mxu0 0.0
    %911 = vmatprep.subr.mxu0 0.0
    %912 = vmatpush1.xpose.msra.mxu0 0.0
    %913 = vmatprep.subr.mxu0 0.0
    %914 = vmatpush1.xpose.msra.mxu0 0.0
    %915 = vmatprep.subr.mxu0 0.0
    %916 = vmatpush1.xpose.msra.mxu0 0.0
    %917 = vmatprep.subr.mxu0 0.0
    %918 = vmatpush1.xpose.msra.mxu0 0.0
    %919 = vmatprep.subr.mxu0 0.0
    %920 = vmatpush1.xpose.msra.mxu0 0.0
    %921 = vmatprep.subr.mxu0 0.0
    %922 = vmatpush1.xpose.msra.mxu0 0.0
    %923 = vmatprep.subr.mxu0 0.0
    %924 = vmatpush1.xpose.msra.mxu0 0.0
    %925 = vmatprep.subr.mxu0 0.0
    %926 = vmatpush1.xpose.msra.mxu0 0.0
    %927 = vmatprep.subr.mxu0 0.0
    %928 = vmatpush1.xpose.msra.mxu0 0.0
    %929 = vmatprep.subr.mxu0 0.0
    %930 = vmatpush1.xpose.msra.mxu0 0.0
    %931 = vmatprep.subr.mxu0 0.0
    %932 = vmatpush1.xpose.msra.mxu0 0.0
    %933 = vmatprep.subr.mxu0 0.0
    %934 = vmatpush1.xpose.msra.mxu0 0.0
    %935 = vmatprep.subr.mxu0 0.0
    %936 = vmatpush1.xpose.msra.mxu0 0.0
    %937 = vmatprep.subr.mxu0 0.0
    %938 = vmatpush1.xpose.msra.mxu0 0.0
    %939 = vmatprep.subr.mxu0 0.0
    %940 = vmatpush1.xpose.msra.mxu0 0.0
    %941 = vmatprep.subr.mxu0 0.0
    %942 = vmatpush1.xpose.msra.mxu0 0.0
    %943 = vmatprep.subr.mxu0 0.0
    %944 = vmatpush1.xpose.msra.mxu0 0.0
    %945 = vmatprep.subr.mxu0 0.0
    %946 = vmatpush1.xpose.msra.mxu0 0.0
    %947 = vmatprep.subr.mxu0 0.0
    %948 = vmatpush1.xpose.msra.mxu0 0.0
    %949 = vmatprep.subr.mxu0 0.0
    %950 = vmatpush1.xpose.msra.mxu0 0.0
    %951 = vmatprep.subr.mxu0 0.0
    %952 = vmatpush1.xpose.msra.mxu0 0.0
    %953 = vmatprep.subr.mxu0 0.0
    %954 = vmatpush1.xpose.msra.mxu0 0.0
    %955 = vmatprep.subr.mxu0 0.0
    %956 = vmatpush1.xpose.msra.mxu0 0.0
    %957 = vmatprep.subr.mxu0 0.0
    %958 = vmatpush1.xpose.msra.mxu0 0.0
    %959 = vmatprep.subr.mxu0 0.0
    %960 = vmatpush1.xpose.msra.mxu0 0.0
    %961 = vmatprep.subr.mxu0 0.0
    %962 = vmatpush1.xpose.msra.mxu0 0.0
    %963 = vmatprep.subr.mxu0 0.0
    %964 = vmatpush1.xpose.msra.mxu0 0.0
    %965 = vmatprep.subr.mxu0 0.0
    %966 = vmatpush1.xpose.msra.mxu0 0.0
    %967 = vmatprep.subr.mxu0 0.0
    %968 = vmatpush1.xpose.msra.mxu0 0.0
    %969 = vmatprep.mubr.f32.mxu0 0.0
    %970 = vmatmul.mubr.f32.gmra.mrb[0].mxu0 %v901
    %v971 = vpop.f32.mrb[0].mxu0
    %v972 = vadd.f32 0.0, %v971
    %v973 = vpop.f32.mrb[0].mxu0
    %974 = vdwg.mxu0
    %v975 = vmul.f32 %v894, 0.35355338
    %v976 = vmul.f32 %v972, 0.35355338
    %v977 = vadd.f32 %v975, %v354
    %v978 = vadd.f32 %v976, %v354
    %v979 = vsel %vm487, %v977, -inf
    %980 = vmax.xlane.f32.xlu0 %v979
    %v981 = vpop.xlane.xlu0 %980
    %v982 = vsel %vm487, %v978, -inf
    %983 = vmax.xlane.f32.xlu0 %v982
    %v984 = vpop.xlane.xlu0 %983
    %v985 = vsub.f32 %v977, %v981
    %v986 = vsub.f32 %v978, %v984
    %v987 = vmul.f32 %v985, 1.442695
    %v988 = vpow.pop %v987
    %v989 = vmul.f32 %v986, 1.442695
    %v990 = vpow.pop %v989
    %v991 = vsel %vm487, %v988, 0.0
    %992 = vadd.xlane.f32.xlu0 %v991
    %v993 = vpop.xlane.xlu0 %992
    %v994 = vsel %vm487, %v990, 0.0
    %995 = vadd.xlane.f32.xlu0 %v994
    %v996 = vpop.xlane.xlu0 %995
    %v997 = vrcp.pop %v993
    %v998 = vmul.f32 %v988, %v997
    %v999 = vrcp.pop %v996
    %v1000 = vmul.f32 %v990, %v999
    %1001 = vrot.lane.b32.xlu0 %v476, 56
    %v1002 = vpop.permute.xlu0 %1001
    %v1005 = vsel %vm487, %v998, 0
    %1007 = vmatprep.subr.mxu0 0.0
    %1008 = vmatpush1.msra.mxu0 %v1002
    %1009 = vmatprep.subr.mxu0 0.0
    %1010 = vmatpush1.msra.mxu0 0.0
    %1011 = vmatprep.subr.mxu0 0.0
    %1012 = vmatpush1.msra.mxu0 0.0
    %1013 = vmatprep.subr.mxu0 0.0
    %1014 = vmatpush1.msra.mxu0 0.0
    %1015 = vmatprep.subr.mxu0 0.0
    %1016 = vmatpush1.msra.mxu0 0.0
    %1017 = vmatprep.subr.mxu0 0.0
    %1018 = vmatpush1.msra.mxu0 0.0
    %1019 = vmatprep.subr.mxu0 0.0
    %1020 = vmatpush1.msra.mxu0 0.0
    %1021 = vmatprep.subr.mxu0 0.0
    %1022 = vmatpush1.msra.mxu0 0.0
    %1023 = vmatprep.subr.mxu0 0.0
    %1024 = vmatpush1.msra.mxu0 0.0
    %1025 = vmatprep.subr.mxu0 0.0
    %1026 = vmatpush1.msra.mxu0 0.0
    %1027 = vmatprep.subr.mxu0 0.0
    %1028 = vmatpush1.msra.mxu0 0.0
    %1029 = vmatprep.subr.mxu0 0.0
    %1030 = vmatpush1.msra.mxu0 0.0
    %1031 = vmatprep.subr.mxu0 0.0
    %1032 = vmatpush1.msra.mxu0 0.0
    %1033 = vmatprep.subr.mxu0 0.0
    %1034 = vmatpush1.msra.mxu0 0.0
    %1035 = vmatprep.subr.mxu0 0.0
    %1036 = vmatpush1.msra.mxu0 0.0
    %1037 = vmatprep.subr.mxu0 0.0
    %1038 = vmatpush1.msra.mxu0 0.0
    %1039 = vmatprep.subr.mxu0 0.0
    %1040 = vmatpush1.msra.mxu0 0.0
    %1041 = vmatprep.subr.mxu0 0.0
    %1042 = vmatpush1.msra.mxu0 0.0
    %1043 = vmatprep.subr.mxu0 0.0
    %1044 = vmatpush1.msra.mxu0 0.0
    %1045 = vmatprep.subr.mxu0 0.0
    %1046 = vmatpush1.msra.mxu0 0.0
    %1047 = vmatprep.subr.mxu0 0.0
    %1048 = vmatpush1.msra.mxu0 0.0
    %1049 = vmatprep.subr.mxu0 0.0
    %1050 = vmatpush1.msra.mxu0 0.0
    %1051 = vmatprep.subr.mxu0 0.0
    %1052 = vmatpush1.msra.mxu0 0.0
    %1053 = vmatprep.subr.mxu0 0.0
    %1054 = vmatpush1.msra.mxu0 0.0
    %1055 = vmatprep.subr.mxu0 0.0
    %1056 = vmatpush1.msra.mxu0 0.0
    %1057 = vmatprep.subr.mxu0 0.0
    %1058 = vmatpush1.msra.mxu0 0.0
    %1059 = vmatprep.subr.mxu0 0.0
    %1060 = vmatpush1.msra.mxu0 0.0
    %1061 = vmatprep.subr.mxu0 0.0
    %1062 = vmatpush1.msra.mxu0 0.0
    %1063 = vmatprep.subr.mxu0 0.0
    %1064 = vmatpush1.msra.mxu0 0.0
    %1065 = vmatprep.subr.mxu0 0.0
    %1066 = vmatpush1.msra.mxu0 0.0
    %1067 = vmatprep.subr.mxu0 0.0
    %1068 = vmatpush1.msra.mxu0 0.0
    %1069 = vmatprep.subr.mxu0 0.0
    %1070 = vmatpush1.msra.mxu0 0.0
    %1071 = vmatprep.mubr.f32.mxu0 0.0
    %1072 = vmatmul.mubr.f32.gmra.mrb[0].mxu0 %v1005
    %v1073 = vpop.f32.mrb[0].mxu0
    %v1074 = vadd.f32 0.0, %v1073
    %v1075 = vpop.f32.mrb[0].mxu0
    %1076 = vdwg.mxu0
    %1077 = vrot.lane.b32.xlu0 %v481, 56
    %v1078 = vpop.permute.xlu0 %1077
    %v1081 = vsel %vm487, %v1000, 0
    %1083 = vmatprep.subr.mxu0 0.0
    %1084 = vmatpush1.msra.mxu0 %v1078
    %1085 = vmatprep.subr.mxu0 0.0
    %1086 = vmatpush1.msra.mxu0 0.0
    %1087 = vmatprep.subr.mxu0 0.0
    %1088 = vmatpush1.msra.mxu0 0.0
    %1089 = vmatprep.subr.mxu0 0.0
    %1090 = vmatpush1.msra.mxu0 0.0
    %1091 = vmatprep.subr.mxu0 0.0
    %1092 = vmatpush1.msra.mxu0 0.0
    %1093 = vmatprep.subr.mxu0 0.0
    %1094 = vmatpush1.msra.mxu0 0.0
    %1095 = vmatprep.subr.mxu0 0.0
    %1096 = vmatpush1.msra.mxu0 0.0
    %1097 = vmatprep.subr.mxu0 0.0
    %1098 = vmatpush1.msra.mxu0 0.0
    %1099 = vmatprep.subr.mxu0 0.0
    %1100 = vmatpush1.msra.mxu0 0.0
    %1101 = vmatprep.subr.mxu0 0.0
    %1102 = vmatpush1.msra.mxu0 0.0
    %1103 = vmatprep.subr.mxu0 0.0
    %1104 = vmatpush1.msra.mxu0 0.0
    %1105 = vmatprep.subr.mxu0 0.0
    %1106 = vmatpush1.msra.mxu0 0.0
    %1107 = vmatprep.subr.mxu0 0.0
    %1108 = vmatpush1.msra.mxu0 0.0
    %1109 = vmatprep.subr.mxu0 0.0
    %1110 = vmatpush1.msra.mxu0 0.0
    %1111 = vmatprep.subr.mxu0 0.0
    %1112 = vmatpush1.msra.mxu0 0.0
    %1113 = vmatprep.subr.mxu0 0.0
    %1114 = vmatpush1.msra.mxu0 0.0
    %1115 = vmatprep.subr.mxu0 0.0
    %1116 = vmatpush1.msra.mxu0 0.0
    %1117 = vmatprep.subr.mxu0 0.0
    %1118 = vmatpush1.msra.mxu0 0.0
    %1119 = vmatprep.subr.mxu0 0.0
    %1120 = vmatpush1.msra.mxu0 0.0
    %1121 = vmatprep.subr.mxu0 0.0
    %1122 = vmatpush1.msra.mxu0 0.0
    %1123 = vmatprep.subr.mxu0 0.0
    %1124 = vmatpush1.msra.mxu0 0.0
    %1125 = vmatprep.subr.mxu0 0.0
    %1126 = vmatpush1.msra.mxu0 0.0
    %1127 = vmatprep.subr.mxu0 0.0
    %1128 = vmatpush1.msra.mxu0 0.0
    %1129 = vmatprep.subr.mxu0 0.0
    %1130 = vmatpush1.msra.mxu0 0.0
    %1131 = vmatprep.subr.mxu0 0.0
    %1132 = vmatpush1.msra.mxu0 0.0
    %1133 = vmatprep.subr.mxu0 0.0
    %1134 = vmatpush1.msra.mxu0 0.0
    %1135 = vmatprep.subr.mxu0 0.0
    %1136 = vmatpush1.msra.mxu0 0.0
    %1137 = vmatprep.subr.mxu0 0.0
    %1138 = vmatpush1.msra.mxu0 0.0
    %1139 = vmatprep.subr.mxu0 0.0
    %1140 = vmatpush1.msra.mxu0 0.0
    %1141 = vmatprep.subr.mxu0 0.0
    %1142 = vmatpush1.msra.mxu0 0.0
    %1143 = vmatprep.subr.mxu0 0.0
    %1144 = vmatpush1.msra.mxu0 0.0
    %1145 = vmatprep.subr.mxu0 0.0
    %1146 = vmatpush1.msra.mxu0 0.0
    %1147 = vmatprep.mubr.f32.mxu0 0.0
    %1148 = vmatmul.mubr.f32.gmra.mrb[0].mxu0 %v1081
    %v1149 = vpop.f32.mrb[0].mxu0
    %v1150 = vadd.f32 0.0, %v1149
    %v1151 = vpop.f32.mrb[0].mxu0
    %1152 = vdwg.mxu0
    %1155 = vrot.lane.b32.xlu0 %v1074, 8
    %v1156 = vpop.permute.xlu0 %1155
    %1157 = vrot.lane.b32.xlu0 %v1150, 8
    %v1158 = vpop.permute.xlu0 %1157
    %vm1161 = vcmask 130112
    %1162 = vst.msk [vmem:[#allocation2] sm:$0xff] %vm1161, %v1156
    %1163 = vst.msk [vmem:[#allocation2 + $0x8] sm:$0xff] %vm1161, %v1158
    %1164 = vrot.lane.b32.xlu0 %v476, 112
    %v1165 = vpop.permute.xlu0 %1164
    %1166 = vrot.lane.b32.xlu0 %v476, 80
    %v1167 = vpop.permute.xlu0 %1166
    %v1168 = vsel %vm487, %v1165, 0
    %v1170 = vsel %vm487, %v1167, 0
    %1172 = vmatprep.subr.mxu0 0.0
    %1173 = vmatpush1.xpose.msra.mxu0 %v1170
    %1174 = vmatprep.subr.mxu0 0.0
    %1175 = vmatpush1.xpose.msra.mxu0 0.0
    %1176 = vmatprep.subr.mxu0 0.0
    %1177 = vmatpush1.xpose.msra.mxu0 0.0
    %1178 = vmatprep.subr.mxu0 0.0
    %1179 = vmatpush1.xpose.msra.mxu0 0.0
    %1180 = vmatprep.subr.mxu0 0.0
    %1181 = vmatpush1.xpose.msra.mxu0 0.0
    %1182 = vmatprep.subr.mxu0 0.0
    %1183 = vmatpush1.xpose.msra.mxu0 0.0
    %1184 = vmatprep.subr.mxu0 0.0
    %1185 = vmatpush1.xpose.msra.mxu0 0.0
    %1186 = vmatprep.subr.mxu0 0.0
    %1187 = vmatpush1.xpose.msra.mxu0 0.0
    %1188 = vmatprep.subr.mxu0 0.0
    %1189 = vmatpush1.xpose.msra.mxu0 0.0
    %1190 = vmatprep.subr.mxu0 0.0
    %1191 = vmatpush1.xpose.msra.mxu0 0.0
    %1192 = vmatprep.subr.mxu0 0.0
    %1193 = vmatpush1.xpose.msra.mxu0 0.0
    %1194 = vmatprep.subr.mxu0 0.0
    %1195 = vmatpush1.xpose.msra.mxu0 0.0
    %1196 = vmatprep.subr.mxu0 0.0
    %1197 = vmatpush1.xpose.msra.mxu0 0.0
    %1198 = vmatprep.subr.mxu0 0.0
    %1199 = vmatpush1.xpose.msra.mxu0 0.0
    %1200 = vmatprep.subr.mxu0 0.0
    %1201 = vmatpush1.xpose.msra.mxu0 0.0
    %1202 = vmatprep.subr.mxu0 0.0
    %1203 = vmatpush1.xpose.msra.mxu0 0.0
    %1204 = vmatprep.subr.mxu0 0.0
    %1205 = vmatpush1.xpose.msra.mxu0 0.0
    %1206 = vmatprep.subr.mxu0 0.0
    %1207 = vmatpush1.xpose.msra.mxu0 0.0
    %1208 = vmatprep.subr.mxu0 0.0
    %1209 = vmatpush1.xpose.msra.mxu0 0.0
    %1210 = vmatprep.subr.mxu0 0.0
    %1211 = vmatpush1.xpose.msra.mxu0 0.0
    %1212 = vmatprep.subr.mxu0 0.0
    %1213 = vmatpush1.xpose.msra.mxu0 0.0
    %1214 = vmatprep.subr.mxu0 0.0
    %1215 = vmatpush1.xpose.msra.mxu0 0.0
    %1216 = vmatprep.subr.mxu0 0.0
    %1217 = vmatpush1.xpose.msra.mxu0 0.0
    %1218 = vmatprep.subr.mxu0 0.0
    %1219 = vmatpush1.xpose.msra.mxu0 0.0
    %1220 = vmatprep.subr.mxu0 0.0
    %1221 = vmatpush1.xpose.msra.mxu0 0.0
    %1222 = vmatprep.subr.mxu0 0.0
    %1223 = vmatpush1.xpose.msra.mxu0 0.0
    %1224 = vmatprep.subr.mxu0 0.0
    %1225 = vmatpush1.xpose.msra.mxu0 0.0
    %1226 = vmatprep.subr.mxu0 0.0
    %1227 = vmatpush1.xpose.msra.mxu0 0.0
    %1228 = vmatprep.subr.mxu0 0.0
    %1229 = vmatpush1.xpose.msra.mxu0 0.0
    %1230 = vmatprep.subr.mxu0 0.0
    %1231 = vmatpush1.xpose.msra.mxu0 0.0
    %1232 = vmatprep.subr.mxu0 0.0
    %1233 = vmatpush1.xpose.msra.mxu0 0.0
    %1234 = vmatprep.subr.mxu0 0.0
    %1235 = vmatpush1.xpose.msra.mxu0 0.0
    %1236 = vmatprep.mubr.f32.mxu0 0.0
    %1237 = vmatmul.mubr.f32.gmra.mrb[0].mxu0 %v1168
    %v1238 = vpop.f32.mrb[0].mxu0
    %v1239 = vadd.f32 0.0, %v1238
    %v1240 = vpop.f32.mrb[0].mxu0
    %1241 = vdwg.mxu0
    %1242 = vrot.lane.b32.xlu0 %v481, 112
    %v1243 = vpop.permute.xlu0 %1242
    %1244 = vrot.lane.b32.xlu0 %v481, 80
    %v1245 = vpop.permute.xlu0 %1244
    %v1246 = vsel %vm487, %v1243, 0
    %v1248 = vsel %vm487, %v1245, 0
    %1250 = vmatprep.subr.mxu0 0.0
    %1251 = vmatpush1.xpose.msra.mxu0 %v1248
    %1252 = vmatprep.subr.mxu0 0.0
    %1253 = vmatpush1.xpose.msra.mxu0 0.0
    %1254 = vmatprep.subr.mxu0 0.0
    %1255 = vmatpush1.xpose.msra.mxu0 0.0
    %1256 = vmatprep.subr.mxu0 0.0
    %1257 = vmatpush1.xpose.msra.mxu0 0.0
    %1258 = vmatprep.subr.mxu0 0.0
    %1259 = vmatpush1.xpose.msra.mxu0 0.0
    %1260 = vmatprep.subr.mxu0 0.0
    %1261 = vmatpush1.xpose.msra.mxu0 0.0
    %1262 = vmatprep.subr.mxu0 0.0
    %1263 = vmatpush1.xpose.msra.mxu0 0.0
    %1264 = vmatprep.subr.mxu0 0.0
    %1265 = vmatpush1.xpose.msra.mxu0 0.0
    %1266 = vmatprep.subr.mxu0 0.0
    %1267 = vmatpush1.xpose.msra.mxu0 0.0
    %1268 = vmatprep.subr.mxu0 0.0
    %1269 = vmatpush1.xpose.msra.mxu0 0.0
    %1270 = vmatprep.subr.mxu0 0.0
    %1271 = vmatpush1.xpose.msra.mxu0 0.0
    %1272 = vmatprep.subr.mxu0 0.0
    %1273 = vmatpush1.xpose.msra.mxu0 0.0
    %1274 = vmatprep.subr.mxu0 0.0
    %1275 = vmatpush1.xpose.msra.mxu0 0.0
    %1276 = vmatprep.subr.mxu0 0.0
    %1277 = vmatpush1.xpose.msra.mxu0 0.0
    %1278 = vmatprep.subr.mxu0 0.0
    %1279 = vmatpush1.xpose.msra.mxu0 0.0
    %1280 = vmatprep.subr.mxu0 0.0
    %1281 = vmatpush1.xpose.msra.mxu0 0.0
    %1282 = vmatprep.subr.mxu0 0.0
    %1283 = vmatpush1.xpose.msra.mxu0 0.0
    %1284 = vmatprep.subr.mxu0 0.0
    %1285 = vmatpush1.xpose.msra.mxu0 0.0
    %1286 = vmatprep.subr.mxu0 0.0
    %1287 = vmatpush1.xpose.msra.mxu0 0.0
    %1288 = vmatprep.subr.mxu0 0.0
    %1289 = vmatpush1.xpose.msra.mxu0 0.0
    %1290 = vmatprep.subr.mxu0 0.0
    %1291 = vmatpush1.xpose.msra.mxu0 0.0
    %1292 = vmatprep.subr.mxu0 0.0
    %1293 = vmatpush1.xpose.msra.mxu0 0.0
    %1294 = vmatprep.subr.mxu0 0.0
    %1295 = vmatpush1.xpose.msra.mxu0 0.0
    %1296 = vmatprep.subr.mxu0 0.0
    %1297 = vmatpush1.xpose.msra.mxu0 0.0
    %1298 = vmatprep.subr.mxu0 0.0
    %1299 = vmatpush1.xpose.msra.mxu0 0.0
    %1300 = vmatprep.subr.mxu0 0.0
    %1301 = vmatpush1.xpose.msra.mxu0 0.0
    %1302 = vmatprep.subr.mxu0 0.0
    %1303 = vmatpush1.xpose.msra.mxu0 0.0
    %1304 = vmatprep.subr.mxu0 0.0
    %1305 = vmatpush1.xpose.msra.mxu0 0.0
    %1306 = vmatprep.subr.mxu0 0.0
    %1307 = vmatpush1.xpose.msra.mxu0 0.0
    %1308 = vmatprep.subr.mxu0 0.0
    %1309 = vmatpush1.xpose.msra.mxu0 0.0
    %1310 = vmatprep.subr.mxu0 0.0
    %1311 = vmatpush1.xpose.msra.mxu0 0.0
    %1312 = vmatprep.subr.mxu0 0.0
    %1313 = vmatpush1.xpose.msra.mxu0 0.0
    %1314 = vmatprep.mubr.f32.mxu0 0.0
    %1315 = vmatmul.mubr.f32.gmra.mrb[0].mxu0 %v1246
    %v1316 = vpop.f32.mrb[0].mxu0
    %v1317 = vadd.f32 0.0, %v1316
    %v1318 = vpop.f32.mrb[0].mxu0
    %1319 = vdwg.mxu0
    %v1320 = vmul.f32 %v1239, 0.35355338
    %v1321 = vmul.f32 %v1317, 0.35355338
    %v1322 = vadd.f32 %v1320, %v354
    %v1323 = vadd.f32 %v1321, %v354
    %v1324 = vsel %vm487, %v1322, -inf
    %1325 = vmax.xlane.f32.xlu0 %v1324
    %v1326 = vpop.xlane.xlu0 %1325
    %v1327 = vsel %vm487, %v1323, -inf
    %1328 = vmax.xlane.f32.xlu0 %v1327
    %v1329 = vpop.xlane.xlu0 %1328
    %v1330 = vsub.f32 %v1322, %v1326
    %v1331 = vsub.f32 %v1323, %v1329
    %v1332 = vmul.f32 %v1330, 1.442695
    %v1333 = vpow.pop %v1332
    %v1334 = vmul.f32 %v1331, 1.442695
    %v1335 = vpow.pop %v1334
    %v1336 = vsel %vm487, %v1333, 0.0
    %1337 = vadd.xlane.f32.xlu0 %v1336
    %v1338 = vpop.xlane.xlu0 %1337
    %v1339 = vsel %vm487, %v1335, 0.0
    %1340 = vadd.xlane.f32.xlu0 %v1339
    %v1341 = vpop.xlane.xlu0 %1340
    %v1342 = vrcp.pop %v1338
    %v1343 = vmul.f32 %v1333, %v1342
    %v1344 = vrcp.pop %v1341
    %v1345 = vmul.f32 %v1335, %v1344
    %1346 = vrot.lane.b32.xlu0 %v476, 48
    %v1347 = vpop.permute.xlu0 %1346
    %v1350 = vsel %vm487, %v1343, 0
    %1352 = vmatprep.subr.mxu0 0.0
    %1353 = vmatpush1.msra.mxu0 %v1347
    %1354 = vmatprep.subr.mxu0 0.0
    %1355 = vmatpush1.msra.mxu0 0.0
    %1356 = vmatprep.subr.mxu0 0.0
    %1357 = vmatpush1.msra.mxu0 0.0
    %1358 = vmatprep.subr.mxu0 0.0
    %1359 = vmatpush1.msra.mxu0 0.0
    %1360 = vmatprep.subr.mxu0 0.0
    %1361 = vmatpush1.msra.mxu0 0.0
    %1362 = vmatprep.subr.mxu0 0.0
    %1363 = vmatpush1.msra.mxu0 0.0
    %1364 = vmatprep.subr.mxu0 0.0
    %1365 = vmatpush1.msra.mxu0 0.0
    %1366 = vmatprep.subr.mxu0 0.0
    %1367 = vmatpush1.msra.mxu0 0.0
    %1368 = vmatprep.subr.mxu0 0.0
    %1369 = vmatpush1.msra.mxu0 0.0
    %1370 = vmatprep.subr.mxu0 0.0
    %1371 = vmatpush1.msra.mxu0 0.0
    %1372 = vmatprep.subr.mxu0 0.0
    %1373 = vmatpush1.msra.mxu0 0.0
    %1374 = vmatprep.subr.mxu0 0.0
    %1375 = vmatpush1.msra.mxu0 0.0
    %1376 = vmatprep.subr.mxu0 0.0
    %1377 = vmatpush1.msra.mxu0 0.0
    %1378 = vmatprep.subr.mxu0 0.0
    %1379 = vmatpush1.msra.mxu0 0.0
    %1380 = vmatprep.subr.mxu0 0.0
    %1381 = vmatpush1.msra.mxu0 0.0
    %1382 = vmatprep.subr.mxu0 0.0
    %1383 = vmatpush1.msra.mxu0 0.0
    %1384 = vmatprep.subr.mxu0 0.0
    %1385 = vmatpush1.msra.mxu0 0.0
    %1386 = vmatprep.subr.mxu0 0.0
    %1387 = vmatpush1.msra.mxu0 0.0
    %1388 = vmatprep.subr.mxu0 0.0
    %1389 = vmatpush1.msra.mxu0 0.0
    %1390 = vmatprep.subr.mxu0 0.0
    %1391 = vmatpush1.msra.mxu0 0.0
    %1392 = vmatprep.subr.mxu0 0.0
    %1393 = vmatpush1.msra.mxu0 0.0
    %1394 = vmatprep.subr.mxu0 0.0
    %1395 = vmatpush1.msra.mxu0 0.0
    %1396 = vmatprep.subr.mxu0 0.0
    %1397 = vmatpush1.msra.mxu0 0.0
    %1398 = vmatprep.subr.mxu0 0.0
    %1399 = vmatpush1.msra.mxu0 0.0
    %1400 = vmatprep.subr.mxu0 0.0
    %1401 = vmatpush1.msra.mxu0 0.0
    %1402 = vmatprep.subr.mxu0 0.0
    %1403 = vmatpush1.msra.mxu0 0.0
    %1404 = vmatprep.subr.mxu0 0.0
    %1405 = vmatpush1.msra.mxu0 0.0
    %1406 = vmatprep.subr.mxu0 0.0
    %1407 = vmatpush1.msra.mxu0 0.0
    %1408 = vmatprep.subr.mxu0 0.0
    %1409 = vmatpush1.msra.mxu0 0.0
    %1410 = vmatprep.subr.mxu0 0.0
    %1411 = vmatpush1.msra.mxu0 0.0
    %1412 = vmatprep.subr.mxu0 0.0
    %1413 = vmatpush1.msra.mxu0 0.0
    %1414 = vmatprep.subr.mxu0 0.0
    %1415 = vmatpush1.msra.mxu0 0.0
    %1416 = vmatprep.mubr.f32.mxu0 0.0
    %1417 = vmatmul.mubr.f32.gmra.mrb[0].mxu0 %v1350
    %v1418 = vpop.f32.mrb[0].mxu0
    %v1419 = vadd.f32 0.0, %v1418
    %v1420 = vpop.f32.mrb[0].mxu0
    %1421 = vdwg.mxu0
    %1422 = vrot.lane.b32.xlu0 %v481, 48
    %v1423 = vpop.permute.xlu0 %1422
    %v1426 = vsel %vm487, %v1345, 0
    %1428 = vmatprep.subr.mxu0 0.0
    %1429 = vmatpush1.msra.mxu0 %v1423
    %1430 = vmatprep.subr.mxu0 0.0
    %1431 = vmatpush1.msra.mxu0 0.0
    %1432 = vmatprep.subr.mxu0 0.0
    %1433 = vmatpush1.msra.mxu0 0.0
    %1434 = vmatprep.subr.mxu0 0.0
    %1435 = vmatpush1.msra.mxu0 0.0
    %1436 = vmatprep.subr.mxu0 0.0
    %1437 = vmatpush1.msra.mxu0 0.0
    %1438 = vmatprep.subr.mxu0 0.0
    %1439 = vmatpush1.msra.mxu0 0.0
    %1440 = vmatprep.subr.mxu0 0.0
    %1441 = vmatpush1.msra.mxu0 0.0
    %1442 = vmatprep.subr.mxu0 0.0
    %1443 = vmatpush1.msra.mxu0 0.0
    %1444 = vmatprep.subr.mxu0 0.0
    %1445 = vmatpush1.msra.mxu0 0.0
    %1446 = vmatprep.subr.mxu0 0.0
    %1447 = vmatpush1.msra.mxu0 0.0
    %1448 = vmatprep.subr.mxu0 0.0
    %1449 = vmatpush1.msra.mxu0 0.0
    %1450 = vmatprep.subr.mxu0 0.0
    %1451 = vmatpush1.msra.mxu0 0.0
    %1452 = vmatprep.subr.mxu0 0.0
    %1453 = vmatpush1.msra.mxu0 0.0
    %1454 = vmatprep.subr.mxu0 0.0
    %1455 = vmatpush1.msra.mxu0 0.0
    %1456 = vmatprep.subr.mxu0 0.0
    %1457 = vmatpush1.msra.mxu0 0.0
    %1458 = vmatprep.subr.mxu0 0.0
    %1459 = vmatpush1.msra.mxu0 0.0
    %1460 = vmatprep.subr.mxu0 0.0
    %1461 = vmatpush1.msra.mxu0 0.0
    %1462 = vmatprep.subr.mxu0 0.0
    %1463 = vmatpush1.msra.mxu0 0.0
    %1464 = vmatprep.subr.mxu0 0.0
    %1465 = vmatpush1.msra.mxu0 0.0
    %1466 = vmatprep.subr.mxu0 0.0
    %1467 = vmatpush1.msra.mxu0 0.0
    %1468 = vmatprep.subr.mxu0 0.0
    %1469 = vmatpush1.msra.mxu0 0.0
    %1470 = vmatprep.subr.mxu0 0.0
    %1471 = vmatpush1.msra.mxu0 0.0
    %1472 = vmatprep.subr.mxu0 0.0
    %1473 = vmatpush1.msra.mxu0 0.0
    %1474 = vmatprep.subr.mxu0 0.0
    %1475 = vmatpush1.msra.mxu0 0.0
    %1476 = vmatprep.subr.mxu0 0.0
    %1477 = vmatpush1.msra.mxu0 0.0
    %1478 = vmatprep.subr.mxu0 0.0
    %1479 = vmatpush1.msra.mxu0 0.0
    %1480 = vmatprep.subr.mxu0 0.0
    %1481 = vmatpush1.msra.mxu0 0.0
    %1482 = vmatprep.subr.mxu0 0.0
    %1483 = vmatpush1.msra.mxu0 0.0
    %1484 = vmatprep.subr.mxu0 0.0
    %1485 = vmatpush1.msra.mxu0 0.0
    %1486 = vmatprep.subr.mxu0 0.0
    %1487 = vmatpush1.msra.mxu0 0.0
    %1488 = vmatprep.subr.mxu0 0.0
    %1489 = vmatpush1.msra.mxu0 0.0
    %1490 = vmatprep.subr.mxu0 0.0
    %1491 = vmatpush1.msra.mxu0 0.0
    %1492 = vmatprep.mubr.f32.mxu0 0.0
    %1493 = vmatmul.mubr.f32.gmra.mrb[0].mxu0 %v1426
    %v1494 = vpop.f32.mrb[0].mxu0
    %v1495 = vadd.f32 0.0, %v1494
    %v1496 = vpop.f32.mrb[0].mxu0
    %1497 = vdwg.mxu0
    %1500 = vrot.lane.b32.xlu0 %v1419, 16
    %v1501 = vpop.permute.xlu0 %1500
    %1502 = vrot.lane.b32.xlu0 %v1495, 16
    %v1503 = vpop.permute.xlu0 %1502
    %vm1506 = vcmask 195712
    %1507 = vst.msk [vmem:[#allocation2] sm:$0xff] %vm1506, %v1501
    %1508 = vst.msk [vmem:[#allocation2 + $0x8] sm:$0xff] %vm1506, %v1503
    %1509 = vrot.lane.b32.xlu0 %v476, 104
    %v1510 = vpop.permute.xlu0 %1509
    %1511 = vrot.lane.b32.xlu0 %v476, 72
    %v1512 = vpop.permute.xlu0 %1511
    %v1513 = vsel %vm487, %v1510, 0
    %v1515 = vsel %vm487, %v1512, 0
    %1517 = vmatprep.subr.mxu0 0.0
    %1518 = vmatpush1.xpose.msra.mxu0 %v1515
    %1519 = vmatprep.subr.mxu0 0.0
    %1520 = vmatpush1.xpose.msra.mxu0 0.0
    %1521 = vmatprep.subr.mxu0 0.0
    %1522 = vmatpush1.xpose.msra.mxu0 0.0
    %1523 = vmatprep.subr.mxu0 0.0
    %1524 = vmatpush1.xpose.msra.mxu0 0.0
    %1525 = vmatprep.subr.mxu0 0.0
    %1526 = vmatpush1.xpose.msra.mxu0 0.0
    %1527 = vmatprep.subr.mxu0 0.0
    %1528 = vmatpush1.xpose.msra.mxu0 0.0
    %1529 = vmatprep.subr.mxu0 0.0
    %1530 = vmatpush1.xpose.msra.mxu0 0.0
    %1531 = vmatprep.subr.mxu0 0.0
    %1532 = vmatpush1.xpose.msra.mxu0 0.0
    %1533 = vmatprep.subr.mxu0 0.0
    %1534 = vmatpush1.xpose.msra.mxu0 0.0
    %1535 = vmatprep.subr.mxu0 0.0
    %1536 = vmatpush1.xpose.msra.mxu0 0.0
    %1537 = vmatprep.subr.mxu0 0.0
    %1538 = vmatpush1.xpose.msra.mxu0 0.0
    %1539 = vmatprep.subr.mxu0 0.0
    %1540 = vmatpush1.xpose.msra.mxu0 0.0
    %1541 = vmatprep.subr.mxu0 0.0
    %1542 = vmatpush1.xpose.msra.mxu0 0.0
    %1543 = vmatprep.subr.mxu0 0.0
    %1544 = vmatpush1.xpose.msra.mxu0 0.0
    %1545 = vmatprep.subr.mxu0 0.0
    %1546 = vmatpush1.xpose.msra.mxu0 0.0
    %1547 = vmatprep.subr.mxu0 0.0
    %1548 = vmatpush1.xpose.msra.mxu0 0.0
    %1549 = vmatprep.subr.mxu0 0.0
    %1550 = vmatpush1.xpose.msra.mxu0 0.0
    %1551 = vmatprep.subr.mxu0 0.0
    %1552 = vmatpush1.xpose.msra.mxu0 0.0
    %1553 = vmatprep.subr.mxu0 0.0
    %1554 = vmatpush1.xpose.msra.mxu0 0.0
    %1555 = vmatprep.subr.mxu0 0.0
    %1556 = vmatpush1.xpose.msra.mxu0 0.0
    %1557 = vmatprep.subr.mxu0 0.0
    %1558 = vmatpush1.xpose.msra.mxu0 0.0
    %1559 = vmatprep.subr.mxu0 0.0
    %1560 = vmatpush1.xpose.msra.mxu0 0.0
    %1561 = vmatprep.subr.mxu0 0.0
    %1562 = vmatpush1.xpose.msra.mxu0 0.0
    %1563 = vmatprep.subr.mxu0 0.0
    %1564 = vmatpush1.xpose.msra.mxu0 0.0
    %1565 = vmatprep.subr.mxu0 0.0
    %1566 = vmatpush1.xpose.msra.mxu0 0.0
    %1567 = vmatprep.subr.mxu0 0.0
    %1568 = vmatpush1.xpose.msra.mxu0 0.0
    %1569 = vmatprep.subr.mxu0 0.0
    %1570 = vmatpush1.xpose.msra.mxu0 0.0
    %1571 = vmatprep.subr.mxu0 0.0
    %1572 = vmatpush1.xpose.msra.mxu0 0.0
    %1573 = vmatprep.subr.mxu0 0.0
    %1574 = vmatpush1.xpose.msra.mxu0 0.0
    %1575 = vmatprep.subr.mxu0 0.0
    %1576 = vmatpush1.xpose.msra.mxu0 0.0
    %1577 = vmatprep.subr.mxu0 0.0
    %1578 = vmatpush1.xpose.msra.mxu0 0.0
    %1579 = vmatprep.subr.mxu0 0.0
    %1580 = vmatpush1.xpose.msra.mxu0 0.0
    %1581 = vmatprep.mubr.f32.mxu0 0.0
    %1582 = vmatmul.mubr.f32.gmra.mrb[0].mxu0 %v1513
    %v1583 = vpop.f32.mrb[0].mxu0
    %v1584 = vadd.f32 0.0, %v1583
    %v1585 = vpop.f32.mrb[0].mxu0
    %1586 = vdwg.mxu0
    %1587 = vrot.lane.b32.xlu0 %v481, 104
    %v1588 = vpop.permute.xlu0 %1587
    %1589 = vrot.lane.b32.xlu0 %v481, 72
    %v1590 = vpop.permute.xlu0 %1589
    %v1591 = vsel %vm487, %v1588, 0
    %v1593 = vsel %vm487, %v1590, 0
    %1595 = vmatprep.subr.mxu0 0.0
    %1596 = vmatpush1.xpose.msra.mxu0 %v1593
    %1597 = vmatprep.subr.mxu0 0.0
    %1598 = vmatpush1.xpose.msra.mxu0 0.0
    %1599 = vmatprep.subr.mxu0 0.0
    %1600 = vmatpush1.xpose.msra.mxu0 0.0
    %1601 = vmatprep.subr.mxu0 0.0
    %1602 = vmatpush1.xpose.msra.mxu0 0.0
    %1603 = vmatprep.subr.mxu0 0.0
    %1604 = vmatpush1.xpose.msra.mxu0 0.0
    %1605 = vmatprep.subr.mxu0 0.0
    %1606 = vmatpush1.xpose.msra.mxu0 0.0
    %1607 = vmatprep.subr.mxu0 0.0
    %1608 = vmatpush1.xpose.msra.mxu0 0.0
    %1609 = vmatprep.subr.mxu0 0.0
    %1610 = vmatpush1.xpose.msra.mxu0 0.0
    %1611 = vmatprep.subr.mxu0 0.0
    %1612 = vmatpush1.xpose.msra.mxu0 0.0
    %1613 = vmatprep.subr.mxu0 0.0
    %1614 = vmatpush1.xpose.msra.mxu0 0.0
    %1615 = vmatprep.subr.mxu0 0.0
    %1616 = vmatpush1.xpose.msra.mxu0 0.0
    %1617 = vmatprep.subr.mxu0 0.0
    %1618 = vmatpush1.xpose.msra.mxu0 0.0
    %1619 = vmatprep.subr.mxu0 0.0
    %1620 = vmatpush1.xpose.msra.mxu0 0.0
    %1621 = vmatprep.subr.mxu0 0.0
    %1622 = vmatpush1.xpose.msra.mxu0 0.0
    %1623 = vmatprep.subr.mxu0 0.0
    %1624 = vmatpush1.xpose.msra.mxu0 0.0
    %1625 = vmatprep.subr.mxu0 0.0
    %1626 = vmatpush1.xpose.msra.mxu0 0.0
    %1627 = vmatprep.subr.mxu0 0.0
    %1628 = vmatpush1.xpose.msra.mxu0 0.0
    %1629 = vmatprep.subr.mxu0 0.0
    %1630 = vmatpush1.xpose.msra.mxu0 0.0
    %1631 = vmatprep.subr.mxu0 0.0
    %1632 = vmatpush1.xpose.msra.mxu0 0.0
    %1633 = vmatprep.subr.mxu0 0.0
    %1634 = vmatpush1.xpose.msra.mxu0 0.0
    %1635 = vmatprep.subr.mxu0 0.0
    %1636 = vmatpush1.xpose.msra.mxu0 0.0
    %1637 = vmatprep.subr.mxu0 0.0
    %1638 = vmatpush1.xpose.msra.mxu0 0.0
    %1639 = vmatprep.subr.mxu0 0.0
    %1640 = vmatpush1.xpose.msra.mxu0 0.0
    %1641 = vmatprep.subr.mxu0 0.0
    %1642 = vmatpush1.xpose.msra.mxu0 0.0
    %1643 = vmatprep.subr.mxu0 0.0
    %1644 = vmatpush1.xpose.msra.mxu0 0.0
    %1645 = vmatprep.subr.mxu0 0.0
    %1646 = vmatpush1.xpose.msra.mxu0 0.0
    %1647 = vmatprep.subr.mxu0 0.0
    %1648 = vmatpush1.xpose.msra.mxu0 0.0
    %1649 = vmatprep.subr.mxu0 0.0
    %1650 = vmatpush1.xpose.msra.mxu0 0.0
    %1651 = vmatprep.subr.mxu0 0.0
    %1652 = vmatpush1.xpose.msra.mxu0 0.0
    %1653 = vmatprep.subr.mxu0 0.0
    %1654 = vmatpush1.xpose.msra.mxu0 0.0
    %1655 = vmatprep.subr.mxu0 0.0
    %1656 = vmatpush1.xpose.msra.mxu0 0.0
    %1657 = vmatprep.subr.mxu0 0.0
    %1658 = vmatpush1.xpose.msra.mxu0 0.0
    %1659 = vmatprep.mubr.f32.mxu0 0.0
    %1660 = vmatmul.mubr.f32.gmra.mrb[0].mxu0 %v1591
    %v1661 = vpop.f32.mrb[0].mxu0
    %v1662 = vadd.f32 0.0, %v1661
    %v1663 = vpop.f32.mrb[0].mxu0
    %1664 = vdwg.mxu0
    %v1665 = vmul.f32 %v1584, 0.35355338
    %v1666 = vmul.f32 %v1662, 0.35355338
    %v1667 = vadd.f32 %v1665, %v354
    %v1668 = vadd.f32 %v1666, %v354
    %v1669 = vsel %vm487, %v1667, -inf
    %1670 = vmax.xlane.f32.xlu0 %v1669
    %v1671 = vpop.xlane.xlu0 %1670
    %v1672 = vsel %vm487, %v1668, -inf
    %1673 = vmax.xlane.f32.xlu0 %v1672
    %v1674 = vpop.xlane.xlu0 %1673
    %v1675 = vsub.f32 %v1667, %v1671
    %v1676 = vsub.f32 %v1668, %v1674
    %v1677 = vmul.f32 %v1675, 1.442695
    %v1678 = vpow.pop %v1677
    %v1679 = vmul.f32 %v1676, 1.442695
    %v1680 = vpow.pop %v1679
    %v1681 = vsel %vm487, %v1678, 0.0
    %1682 = vadd.xlane.f32.xlu0 %v1681
    %v1683 = vpop.xlane.xlu0 %1682
    %v1684 = vsel %vm487, %v1680, 0.0
    %1685 = vadd.xlane.f32.xlu0 %v1684
    %v1686 = vpop.xlane.xlu0 %1685
    %v1687 = vrcp.pop %v1683
    %v1688 = vmul.f32 %v1678, %v1687
    %v1689 = vrcp.pop %v1686
    %v1690 = vmul.f32 %v1680, %v1689
    %1691 = vrot.lane.b32.xlu0 %v476, 40
    %v1692 = vpop.permute.xlu0 %1691
    %v1695 = vsel %vm487, %v1688, 0
    %1697 = vmatprep.subr.mxu0 0.0
    %1698 = vmatpush1.msra.mxu0 %v1692
    %1699 = vmatprep.subr.mxu0 0.0
    %1700 = vmatpush1.msra.mxu0 0.0
    %1701 = vmatprep.subr.mxu0 0.0
    %1702 = vmatpush1.msra.mxu0 0.0
    %1703 = vmatprep.subr.mxu0 0.0
    %1704 = vmatpush1.msra.mxu0 0.0
    %1705 = vmatprep.subr.mxu0 0.0
    %1706 = vmatpush1.msra.mxu0 0.0
    %1707 = vmatprep.subr.mxu0 0.0
    %1708 = vmatpush1.msra.mxu0 0.0
    %1709 = vmatprep.subr.mxu0 0.0
    %1710 = vmatpush1.msra.mxu0 0.0
    %1711 = vmatprep.subr.mxu0 0.0
    %1712 = vmatpush1.msra.mxu0 0.0
    %1713 = vmatprep.subr.mxu0 0.0
    %1714 = vmatpush1.msra.mxu0 0.0
    %1715 = vmatprep.subr.mxu0 0.0
    %1716 = vmatpush1.msra.mxu0 0.0
    %1717 = vmatprep.subr.mxu0 0.0
    %1718 = vmatpush1.msra.mxu0 0.0
    %1719 = vmatprep.subr.mxu0 0.0
    %1720 = vmatpush1.msra.mxu0 0.0
    %1721 = vmatprep.subr.mxu0 0.0
    %1722 = vmatpush1.msra.mxu0 0.0
    %1723 = vmatprep.subr.mxu0 0.0
    %1724 = vmatpush1.msra.mxu0 0.0
    %1725 = vmatprep.subr.mxu0 0.0
    %1726 = vmatpush1.msra.mxu0 0.0
    %1727 = vmatprep.subr.mxu0 0.0
    %1728 = vmatpush1.msra.mxu0 0.0
    %1729 = vmatprep.subr.mxu0 0.0
    %1730 = vmatpush1.msra.mxu0 0.0
    %1731 = vmatprep.subr.mxu0 0.0
    %1732 = vmatpush1.msra.mxu0 0.0
    %1733 = vmatprep.subr.mxu0 0.0
    %1734 = vmatpush1.msra.mxu0 0.0
    %1735 = vmatprep.subr.mxu0 0.0
    %1736 = vmatpush1.msra.mxu0 0.0
    %1737 = vmatprep.subr.mxu0 0.0
    %1738 = vmatpush1.msra.mxu0 0.0
    %1739 = vmatprep.subr.mxu0 0.0
    %1740 = vmatpush1.msra.mxu0 0.0
    %1741 = vmatprep.subr.mxu0 0.0
    %1742 = vmatpush1.msra.mxu0 0.0
    %1743 = vmatprep.subr.mxu0 0.0
    %1744 = vmatpush1.msra.mxu0 0.0
    %1745 = vmatprep.subr.mxu0 0.0
    %1746 = vmatpush1.msra.mxu0 0.0
    %1747 = vmatprep.subr.mxu0 0.0
    %1748 = vmatpush1.msra.mxu0 0.0
    %1749 = vmatprep.subr.mxu0 0.0
    %1750 = vmatpush1.msra.mxu0 0.0
    %1751 = vmatprep.subr.mxu0 0.0
    %1752 = vmatpush1.msra.mxu0 0.0
    %1753 = vmatprep.subr.mxu0 0.0
    %1754 = vmatpush1.msra.mxu0 0.0
    %1755 = vmatprep.subr.mxu0 0.0
    %1756 = vmatpush1.msra.mxu0 0.0
    %1757 = vmatprep.subr.mxu0 0.0
    %1758 = vmatpush1.msra.mxu0 0.0
    %1759 = vmatprep.subr.mxu0 0.0
    %1760 = vmatpush1.msra.mxu0 0.0
    %1761 = vmatprep.mubr.f32.mxu0 0.0
    %1762 = vmatmul.mubr.f32.gmra.mrb[0].mxu0 %v1695
    %v1763 = vpop.f32.mrb[0].mxu0
    %v1764 = vadd.f32 0.0, %v1763
    %v1765 = vpop.f32.mrb[0].mxu0
    %1766 = vdwg.mxu0
    %1767 = vrot.lane.b32.xlu0 %v481, 40
    %v1768 = vpop.permute.xlu0 %1767
    %v1771 = vsel %vm487, %v1690, 0
    %1773 = vmatprep.subr.mxu0 0.0
    %1774 = vmatpush1.msra.mxu0 %v1768
    %1775 = vmatprep.subr.mxu0 0.0
    %1776 = vmatpush1.msra.mxu0 0.0
    %1777 = vmatprep.subr.mxu0 0.0
    %1778 = vmatpush1.msra.mxu0 0.0
    %1779 = vmatprep.subr.mxu0 0.0
    %1780 = vmatpush1.msra.mxu0 0.0
    %1781 = vmatprep.subr.mxu0 0.0
    %1782 = vmatpush1.msra.mxu0 0.0
    %1783 = vmatprep.subr.mxu0 0.0
    %1784 = vmatpush1.msra.mxu0 0.0
    %1785 = vmatprep.subr.mxu0 0.0
    %1786 = vmatpush1.msra.mxu0 0.0
    %1787 = vmatprep.subr.mxu0 0.0
    %1788 = vmatpush1.msra.mxu0 0.0
    %1789 = vmatprep.subr.mxu0 0.0
    %1790 = vmatpush1.msra.mxu0 0.0
    %1791 = vmatprep.subr.mxu0 0.0
    %1792 = vmatpush1.msra.mxu0 0.0
    %1793 = vmatprep.subr.mxu0 0.0
    %1794 = vmatpush1.msra.mxu0 0.0
    %1795 = vmatprep.subr.mxu0 0.0
    %1796 = vmatpush1.msra.mxu0 0.0
    %1797 = vmatprep.subr.mxu0 0.0
    %1798 = vmatpush1.msra.mxu0 0.0
    %1799 = vmatprep.subr.mxu0 0.0
    %1800 = vmatpush1.msra.mxu0 0.0
    %1801 = vmatprep.subr.mxu0 0.0
    %1802 = vmatpush1.msra.mxu0 0.0
    %1803 = vmatprep.subr.mxu0 0.0
    %1804 = vmatpush1.msra.mxu0 0.0
    %1805 = vmatprep.subr.mxu0 0.0
    %1806 = vmatpush1.msra.mxu0 0.0
    %1807 = vmatprep.subr.mxu0 0.0
    %1808 = vmatpush1.msra.mxu0 0.0
    %1809 = vmatprep.subr.mxu0 0.0
    %1810 = vmatpush1.msra.mxu0 0.0
    %1811 = vmatprep.subr.mxu0 0.0
    %1812 = vmatpush1.msra.mxu0 0.0
    %1813 = vmatprep.subr.mxu0 0.0
    %1814 = vmatpush1.msra.mxu0 0.0
    %1815 = vmatprep.subr.mxu0 0.0
    %1816 = vmatpush1.msra.mxu0 0.0
    %1817 = vmatprep.subr.mxu0 0.0
    %1818 = vmatpush1.msra.mxu0 0.0
    %1819 = vmatprep.subr.mxu0 0.0
    %1820 = vmatpush1.msra.mxu0 0.0
    %1821 = vmatprep.subr.mxu0 0.0
    %1822 = vmatpush1.msra.mxu0 0.0
    %1823 = vmatprep.subr.mxu0 0.0
    %1824 = vmatpush1.msra.mxu0 0.0
    %1825 = vmatprep.subr.mxu0 0.0
    %1826 = vmatpush1.msra.mxu0 0.0
    %1827 = vmatprep.subr.mxu0 0.0
    %1828 = vmatpush1.msra.mxu0 0.0
    %1829 = vmatprep.subr.mxu0 0.0
    %1830 = vmatpush1.msra.mxu0 0.0
    %1831 = vmatprep.subr.mxu0 0.0
    %1832 = vmatpush1.msra.mxu0 0.0
    %1833 = vmatprep.subr.mxu0 0.0
    %1834 = vmatpush1.msra.mxu0 0.0
    %1835 = vmatprep.subr.mxu0 0.0
    %1836 = vmatpush1.msra.mxu0 0.0
    %1837 = vmatprep.mubr.f32.mxu0 0.0
    %1838 = vmatmul.mubr.f32.gmra.mrb[0].mxu0 %v1771
    %v1839 = vpop.f32.mrb[0].mxu0
    %v1840 = vadd.f32 0.0, %v1839
    %v1841 = vpop.f32.mrb[0].mxu0
    %1842 = vdwg.mxu0
    %1845 = vrot.lane.b32.xlu0 %v1764, 24
    %v1846 = vpop.permute.xlu0 %1845
    %1847 = vrot.lane.b32.xlu0 %v1840, 24
    %v1848 = vpop.permute.xlu0 %1847
    %vm1851 = vcmask 261312
    %1852 = vst.msk [vmem:[#allocation2] sm:$0xff] %vm1851, %v1846
    %1853 = vst.msk [vmem:[#allocation2 + $0x8] sm:$0xff] %vm1851, %v1848
    %v1854 = vld [vmem:[#allocation2] sm:$0xff]
    %v1855 = vld [vmem:[#allocation2 + $0x8] sm:$0xff]
    %1860 = vrot.lane.b32.xlu0 %v356, 32
    %v1861 = vpop.permute.xlu0 %1860
    %1862 = vrot.lane.b32.xlu0 %v358, 32
    %v1863 = vpop.permute.xlu0 %1862
    %1864 = vrot.lane.b32.xlu0 %v360, 32
    %v1865 = vpop.permute.xlu0 %1864
    %1866 = vrot.lane.b32.xlu0 %v362, 32
    %v1867 = vpop.permute.xlu0 %1866
    %v1873 = vsel %vm336, %v1854, 0
    %v1876 = vsel %vm336, %v1855, 0
    %1878 = vmatprep.subr.mxu0 0.0
    %1879 = vmatpush1.msra.mxu0 %v1861
    %1880 = vmatprep.subr.mxu0 0.0
    %1881 = vmatpush1.msra.mxu0 %v1863
    %1882 = vmatprep.subr.mxu0 0.0
    %1883 = vmatpush1.msra.mxu0 %v1865
    %1884 = vmatprep.subr.mxu0 0.0
    %1885 = vmatpush1.msra.mxu0 %v1867
    %1886 = vmatprep.subr.mxu0 0.0
    %1887 = vmatpush1.msra.mxu0 0.0
    %1888 = vmatprep.subr.mxu0 0.0
    %1889 = vmatpush1.msra.mxu0 0.0
    %1890 = vmatprep.subr.mxu0 0.0
    %1891 = vmatpush1.msra.mxu0 0.0
    %1892 = vmatprep.subr.mxu0 0.0
    %1893 = vmatpush1.msra.mxu0 0.0
    %1894 = vmatprep.subr.mxu0 0.0
    %1895 = vmatpush1.msra.mxu0 0.0
    %1896 = vmatprep.subr.mxu0 0.0
    %1897 = vmatpush1.msra.mxu0 0.0
    %1898 = vmatprep.subr.mxu0 0.0
    %1899 = vmatpush1.msra.mxu0 0.0
    %1900 = vmatprep.subr.mxu0 0.0
    %1901 = vmatpush1.msra.mxu0 0.0
    %1902 = vmatprep.subr.mxu0 0.0
    %1903 = vmatpush1.msra.mxu0 0.0
    %1904 = vmatprep.subr.mxu0 0.0
    %1905 = vmatpush1.msra.mxu0 0.0
    %1906 = vmatprep.subr.mxu0 0.0
    %1907 = vmatpush1.msra.mxu0 0.0
    %1908 = vmatprep.subr.mxu0 0.0
    %1909 = vmatpush1.msra.mxu0 0.0
    %1910 = vmatprep.subr.mxu0 0.0
    %1911 = vmatpush1.msra.mxu0 0.0
    %1912 = vmatprep.subr.mxu0 0.0
    %1913 = vmatpush1.msra.mxu0 0.0
    %1914 = vmatprep.subr.mxu0 0.0
    %1915 = vmatpush1.msra.mxu0 0.0
    %1916 = vmatprep.subr.mxu0 0.0
    %1917 = vmatpush1.msra.mxu0 0.0
    %1918 = vmatprep.subr.mxu0 0.0
    %1919 = vmatpush1.msra.mxu0 0.0
    %1920 = vmatprep.subr.mxu0 0.0
    %1921 = vmatpush1.msra.mxu0 0.0
    %1922 = vmatprep.subr.mxu0 0.0
    %1923 = vmatpush1.msra.mxu0 0.0
    %1924 = vmatprep.subr.mxu0 0.0
    %1925 = vmatpush1.msra.mxu0 0.0
    %1926 = vmatprep.subr.mxu0 0.0
    %1927 = vmatpush1.msra.mxu0 0.0
    %1928 = vmatprep.subr.mxu0 0.0
    %1929 = vmatpush1.msra.mxu0 0.0
    %1930 = vmatprep.subr.mxu0 0.0
    %1931 = vmatpush1.msra.mxu0 0.0
    %1932 = vmatprep.subr.mxu0 0.0
    %1933 = vmatpush1.msra.mxu0 0.0
    %1934 = vmatprep.subr.mxu0 0.0
    %1935 = vmatpush1.msra.mxu0 0.0
    %1936 = vmatprep.subr.mxu0 0.0
    %1937 = vmatpush1.msra.mxu0 0.0
    %1938 = vmatprep.subr.mxu0 0.0
    %1939 = vmatpush1.msra.mxu0 0.0
    %1940 = vmatprep.subr.mxu0 0.0
    %1941 = vmatpush1.msra.mxu0 0.0
    %1942 = vmatprep.mubr.f32.mxu0 0.0
    %1943 = vmatmul.mubr.f32.gmra.mrb[0].mxu0 %v1873
    %v1944 = vpop.f32.mrb[0].mxu0
    %v1945 = vadd.f32 0.0, %v1944
    %v1946 = vpop.f32.mrb[0].mxu0
    %1947 = vmatprep.mubr.f32.mxu0 0.0
    %1948 = vmatmul.mubr.f32.gmra.mrb[0].mxu0 %v1876
    %v1949 = vpop.f32.mrb[0].mxu0
    %v1950 = vadd.f32 0.0, %v1949
    %v1951 = vpop.f32.mrb[0].mxu0
    %1952 = vdwg.mxu0
    %v1953 = vadd.f32 %v349, %v1945
    %v1954 = vadd.f32 %v350, %v1950
    %v1955 = vlaneseq
    %v1956 = vshrl.u32 %v1955, 7
    %v1957 = vsub.s32 2, %v1956
    %v1958 = vrot.slane %v355, %v1957
    %v1959 = vadd.f32 %v1953, %v1958
    %v1960 = vadd.f32 %v1954, %v1958
    %v1961 = vsel %vm336, %v1959, 0.0
    %1962 = vadd.xlane.f32.xlu0 %v1961
    %v1963 = vpop.xlane.xlu0 %1962
    %v1964 = vsel %vm336, %v1960, 0.0
    %1965 = vadd.xlane.f32.xlu0 %v1964
    %v1966 = vpop.xlane.xlu0 %1965
    %v1967 = vmul.f32 %v1963, %v370
    %v1968 = vmul.f32 %v1966, %v370
    %v1969 = vsub.f32 %v1959, %v1967
    %v1970 = vsub.f32 %v1960, %v1968
    %v1971 = vmul.f32 %v1969, %v1969
    %v1972 = vmul.f32 %v1970, %v1970
    %v1973 = vsel %vm336, %v1971, 0.0
    %1974 = vadd.xlane.f32.xlu0 %v1973
    %v1975 = vpop.xlane.xlu0 %1974
    %v1976 = vsel %vm336, %v1972, 0.0
    %1977 = vadd.xlane.f32.xlu0 %v1976
    %v1978 = vpop.xlane.xlu0 %1977
    %v1979 = vmul.f32 %v1975, %v370
    %v1980 = vmul.f32 %v1978, %v370
    %v1981 = vadd.f32 %v1979, 1e-05
    %v1982 = vadd.f32 %v1980, 1e-05
    %v1983 = vrsqrt.pop %v1981
    %v1984 = vrsqrt.pop %v1982
    %v1985 = vmul.f32 %v1969, %v1983
    %v1986 = vmul.f32 %v1970, %v1984
    %v1987 = vlaneseq
    %v1988 = vshrl.u32 %v1987, 7
    %v1989 = vsub.s32 3, %v1988
    %v1990 = vrot.slane %v355, %v1989
    %v1991 = vmul.f32 %v1985, %v1990
    %v1992 = vmul.f32 %v1986, %v1990
    %v1993 = vlaneseq
    %v1994 = vshrl.u32 %v1993, 7
    %v1995 = vsub.s32 4, %v1994
    %v1996 = vrot.slane %v355, %v1995
    %v1997 = vadd.f32 %v1991, %v1996
    %v1998 = vadd.f32 %v1992, %v1996
    %v1999 = vlaneseq
    %v2000 = vshrl.u32 %v1999, 7
    %v2001 = vsub.s32 6, %v2000
    %v2002 = vrot.slane %v355, %v2001
    %v2004 = vsel %vm336, %v1997, 0
    %v2007 = vsel %vm336, %v1998, 0
    %2009 = vmatprep.subr.mxu0 0.0
    %2010 = vmatpush1.msra.mxu0 %v357
    %2011 = vmatprep.subr.mxu0 0.0
    %2012 = vmatpush1.msra.mxu0 %v359
    %2013 = vmatprep.subr.mxu0 0.0
    %2014 = vmatpush1.msra.mxu0 %v361
    %2015 = vmatprep.subr.mxu0 0.0
    %2016 = vmatpush1.msra.mxu0 %v363
    %2017 = vmatprep.subr.mxu0 0.0
    %2018 = vmatpush1.msra.mxu0 0.0
    %2019 = vmatprep.subr.mxu0 0.0
    %2020 = vmatpush1.msra.mxu0 0.0
    %2021 = vmatprep.subr.mxu0 0.0
    %2022 = vmatpush1.msra.mxu0 0.0
    %2023 = vmatprep.subr.mxu0 0.0
    %2024 = vmatpush1.msra.mxu0 0.0
    %2025 = vmatprep.subr.mxu0 0.0
    %2026 = vmatpush1.msra.mxu0 0.0
    %2027 = vmatprep.subr.mxu0 0.0
    %2028 = vmatpush1.msra.mxu0 0.0
    %2029 = vmatprep.subr.mxu0 0.0
    %2030 = vmatpush1.msra.mxu0 0.0
    %2031 = vmatprep.subr.mxu0 0.0
    %2032 = vmatpush1.msra.mxu0 0.0
    %2033 = vmatprep.subr.mxu0 0.0
    %2034 = vmatpush1.msra.mxu0 0.0
    %2035 = vmatprep.subr.mxu0 0.0
    %2036 = vmatpush1.msra.mxu0 0.0
    %2037 = vmatprep.subr.mxu0 0.0
    %2038 = vmatpush1.msra.mxu0 0.0
    %2039 = vmatprep.subr.mxu0 0.0
    %2040 = vmatpush1.msra.mxu0 0.0
    %2041 = vmatprep.subr.mxu0 0.0
    %2042 = vmatpush1.msra.mxu0 0.0
    %2043 = vmatprep.subr.mxu0 0.0
    %2044 = vmatpush1.msra.mxu0 0.0
    %2045 = vmatprep.subr.mxu0 0.0
    %2046 = vmatpush1.msra.mxu0 0.0
    %2047 = vmatprep.subr.mxu0 0.0
    %2048 = vmatpush1.msra.mxu0 0.0
    %2049 = vmatprep.subr.mxu0 0.0
    %2050 = vmatpush1.msra.mxu0 0.0
    %2051 = vmatprep.subr.mxu0 0.0
    %2052 = vmatpush1.msra.mxu0 0.0
    %2053 = vmatprep.subr.mxu0 0.0
    %2054 = vmatpush1.msra.mxu0 0.0
    %2055 = vmatprep.subr.mxu0 0.0
    %2056 = vmatpush1.msra.mxu0 0.0
    %2057 = vmatprep.subr.mxu0 0.0
    %2058 = vmatpush1.msra.mxu0 0.0
    %2059 = vmatprep.subr.mxu0 0.0
    %2060 = vmatpush1.msra.mxu0 0.0
    %2061 = vmatprep.subr.mxu0 0.0
    %2062 = vmatpush1.msra.mxu0 0.0
    %2063 = vmatprep.subr.mxu0 0.0
    %2064 = vmatpush1.msra.mxu0 0.0
    %2065 = vmatprep.subr.mxu0 0.0
    %2066 = vmatpush1.msra.mxu0 0.0
    %2067 = vmatprep.subr.mxu0 0.0
    %2068 = vmatpush1.msra.mxu0 0.0
    %2069 = vmatprep.subr.mxu0 0.0
    %2070 = vmatpush1.msra.mxu0 0.0
    %2071 = vmatprep.subr.mxu0 0.0
    %2072 = vmatpush1.msra.mxu0 0.0
    %2073 = vmatprep.mubr.f32.mxu0 0.0
    %2074 = vmatmul.mubr.f32.gmra.mrb[0].mxu0 %v2004
    %v2075 = vpop.f32.mrb[0].mxu0
    %v2076 = vadd.f32 %v2002, %v2075
    %v2077 = vpop.f32.mrb[0].mxu0
    %2078 = vmatprep.mubr.f32.mxu0 0.0
    %2079 = vmatmul.mubr.f32.gmra.mrb[0].mxu0 %v2007
    %v2080 = vpop.f32.mrb[0].mxu0
    %v2081 = vadd.f32 %v2002, %v2080
    %v2082 = vpop.f32.mrb[0].mxu0
    %2083 = vdwg.mxu0
    %v2084 = vmul.f32 %v2076, 0.5
    %v2085 = vmul.f32 %v2081, 0.5
    %v2086 = vmul.f32 %v2076, 0.044715
    %v2087 = vmul.f32 %v2081, 0.044715
    %v2088 = vmul.f32 %v2086, %v2076
    %v2089 = vmul.f32 %v2087, %v2081
    %v2090 = vmul.f32 %v2088, %v2076
    %v2091 = vmul.f32 %v2089, %v2081
    %v2092 = vadd.f32 %v2076, %v2090
    %v2093 = vadd.f32 %v2081, %v2091
    %v2094 = vmul.f32 %v2092, 0.7978846
    %v2095 = vmul.f32 %v2093, 0.7978846
    %v2096 = vtanh.pop %v2094
    %v2097 = vtanh.pop %v2095
    %v2098 = vadd.f32 %v2096, 1.0
    %v2099 = vadd.f32 %v2097, 1.0
    %v2100 = vmul.f32 %v2084, %v2098
    %v2101 = vmul.f32 %v2085, %v2099
    %v2102 = vld [vmem:[%s4] sm:$0xff]
    %v2103 = vld [vmem:[%s4 + $0x8] sm:$0xff]
    %v2104 = vld [vmem:[%s4 + $0x10] sm:$0xff]
    %v2105 = vld [vmem:[%s4 + $0x18] sm:$0xff]
    %v2106 = vld [vmem:[%s4 + $0x20] sm:$0xff]
    %v2107 = vld [vmem:[%s4 + $0x28] sm:$0xff]
    %v2108 = vld [vmem:[%s4 + $0x30] sm:$0xff]
    %v2109 = vld [vmem:[%s4 + $0x38] sm:$0xff]
    %v2110 = vld [vmem:[%s4 + $0x40] sm:$0xff]
    %v2111 = vld [vmem:[%s4 + $0x48] sm:$0xff]
    %v2112 = vld [vmem:[%s4 + $0x50] sm:$0xff]
    %v2113 = vld [vmem:[%s4 + $0x58] sm:$0xff]
    %v2114 = vld [vmem:[%s4 + $0x60] sm:$0xff]
    %v2115 = vld [vmem:[%s4 + $0x68] sm:$0xff]
    %v2116 = vld [vmem:[%s4 + $0x70] sm:$0xff]
    %v2117 = vld [vmem:[%s4 + $0x78] sm:$0xff]
    %v2118 = vlaneseq
    %v2119 = vshrl.u32 %v2118, 7
    %v2120 = vsub.s32 5, %v2119
    %v2121 = vrot.slane %v355, %v2120
    %2122 = vmatprep.subr.mxu0 0.0
    %2123 = vmatpush1.msra.mxu0 %v2102
    %2124 = vmatprep.subr.mxu0 0.0
    %2125 = vmatpush1.msra.mxu0 %v2103
    %2126 = vmatprep.subr.mxu0 0.0
    %2127 = vmatpush1.msra.mxu0 %v2104
    %2128 = vmatprep.subr.mxu0 0.0
    %2129 = vmatpush1.msra.mxu0 %v2105
    %2130 = vmatprep.subr.mxu0 0.0
    %2131 = vmatpush1.msra.mxu0 %v2106
    %2132 = vmatprep.subr.mxu0 0.0
    %2133 = vmatpush1.msra.mxu0 %v2107
    %2134 = vmatprep.subr.mxu0 0.0
    %2135 = vmatpush1.msra.mxu0 %v2108
    %2136 = vmatprep.subr.mxu0 0.0
    %2137 = vmatpush1.msra.mxu0 %v2109
    %2138 = vmatprep.subr.mxu0 0.0
    %2139 = vmatpush1.msra.mxu0 %v2110
    %2140 = vmatprep.subr.mxu0 0.0
    %2141 = vmatpush1.msra.mxu0 %v2111
    %2142 = vmatprep.subr.mxu0 0.0
    %2143 = vmatpush1.msra.mxu0 %v2112
    %2144 = vmatprep.subr.mxu0 0.0
    %2145 = vmatpush1.msra.mxu0 %v2113
    %2146 = vmatprep.subr.mxu0 0.0
    %2147 = vmatpush1.msra.mxu0 %v2114
    %2148 = vmatprep.subr.mxu0 0.0
    %2149 = vmatpush1.msra.mxu0 %v2115
    %2150 = vmatprep.subr.mxu0 0.0
    %2151 = vmatpush1.msra.mxu0 %v2116
    %2152 = vmatprep.subr.mxu0 0.0
    %2153 = vmatpush1.msra.mxu0 %v2117
    %2154 = vmatprep.subr.mxu0 0.0
    %2155 = vmatpush1.msra.mxu0 0.0
    %2156 = vmatprep.subr.mxu0 0.0
    %2157 = vmatpush1.msra.mxu0 0.0
    %2158 = vmatprep.subr.mxu0 0.0
    %2159 = vmatpush1.msra.mxu0 0.0
    %2160 = vmatprep.subr.mxu0 0.0
    %2161 = vmatpush1.msra.mxu0 0.0
    %2162 = vmatprep.subr.mxu0 0.0
    %2163 = vmatpush1.msra.mxu0 0.0
    %2164 = vmatprep.subr.mxu0 0.0
    %2165 = vmatpush1.msra.mxu0 0.0
    %2166 = vmatprep.subr.mxu0 0.0
    %2167 = vmatpush1.msra.mxu0 0.0
    %2168 = vmatprep.subr.mxu0 0.0
    %2169 = vmatpush1.msra.mxu0 0.0
    %2170 = vmatprep.subr.mxu0 0.0
    %2171 = vmatpush1.msra.mxu0 0.0
    %2172 = vmatprep.subr.mxu0 0.0
    %2173 = vmatpush1.msra.mxu0 0.0
    %2174 = vmatprep.subr.mxu0 0.0
    %2175 = vmatpush1.msra.mxu0 0.0
    %2176 = vmatprep.subr.mxu0 0.0
    %2177 = vmatpush1.msra.mxu0 0.0
    %2178 = vmatprep.subr.mxu0 0.0
    %2179 = vmatpush1.msra.mxu0 0.0
    %2180 = vmatprep.subr.mxu0 0.0
    %2181 = vmatpush1.msra.mxu0 0.0
    %2182 = vmatprep.subr.mxu0 0.0
    %2183 = vmatpush1.msra.mxu0 0.0
    %2184 = vmatprep.subr.mxu0 0.0
    %2185 = vmatpush1.msra.mxu0 0.0
    %2186 = vmatprep.mubr.f32.mxu0 0.0
    %2187 = vmatmul.mubr.f32.gmra.mrb[0].mxu0 %v2100
    %v2188 = vpop.f32.mrb[0].mxu0
    %v2189 = vadd.f32 %v2121, %v2188
    %v2190 = vpop.f32.mrb[0].mxu0
    %2191 = vmatprep.mubr.f32.mxu0 0.0
    %2192 = vmatmul.mubr.f32.gmra.mrb[0].mxu0 %v2101
    %v2193 = vpop.f32.mrb[0].mxu0
    %v2194 = vadd.f32 %v2121, %v2193
    %v2195 = vpop.f32.mrb[0].mxu0
    %2196 = vdwg.mxu0
    %v2197 = vadd.f32 %v1959, %v2189
    %v2198 = vadd.f32 %v1960, %v2194
    %s2199 = scalar_lea.vmem %s5, 8
    %v2200 = vld [vmem:[%s2199] sm:$0xff]
    %s2201 = scalar_lea.vmem %s3, 64
    %v2202 = vld [vmem:[%s2201] sm:$0xff]
    %v2203 = vld [vmem:[%s2201 + $0x8] sm:$0xff]
    %v2204 = vld [vmem:[%s2201 + $0x10] sm:$0xff]
    %v2205 = vld [vmem:[%s2201 + $0x18] sm:$0xff]
    %v2206 = vld [vmem:[%s2201 + $0x20] sm:$0xff]
    %v2207 = vld [vmem:[%s2201 + $0x28] sm:$0xff]
    %v2208 = vld [vmem:[%s2201 + $0x30] sm:$0xff]
    %v2209 = vld [vmem:[%s2201 + $0x38] sm:$0xff]
    %v2210 = vsel %vm336, %v2197, 0.0
    %2211 = vadd.xlane.f32.xlu0 %v2210
    %v2212 = vpop.xlane.xlu0 %2211
    %v2213 = vsel %vm336, %v2198, 0.0
    %2214 = vadd.xlane.f32.xlu0 %v2213
    %v2215 = vpop.xlane.xlu0 %2214
    %v2216 = vmul.f32 %v2212, %v370
    %v2217 = vmul.f32 %v2215, %v370
    %v2218 = vsub.f32 %v2197, %v2216
    %v2219 = vsub.f32 %v2198, %v2217
    %v2220 = vmul.f32 %v2218, %v2218
    %v2221 = vmul.f32 %v2219, %v2219
    %v2222 = vsel %vm336, %v2220, 0.0
    %2223 = vadd.xlane.f32.xlu0 %v2222
    %v2224 = vpop.xlane.xlu0 %2223
    %v2225 = vsel %vm336, %v2221, 0.0
    %2226 = vadd.xlane.f32.xlu0 %v2225
    %v2227 = vpop.xlane.xlu0 %2226
    %v2228 = vmul.f32 %v2224, %v370
    %v2229 = vmul.f32 %v2227, %v370
    %v2230 = vadd.f32 %v2228, 1e-05
    %v2231 = vadd.f32 %v2229, 1e-05
    %v2232 = vrsqrt.pop %v2230
    %v2233 = vrsqrt.pop %v2231
    %v2234 = vmul.f32 %v2218, %v2232
    %v2235 = vmul.f32 %v2219, %v2233
    %v2236 = vlaneseq
    %v2237 = vshrl.u32 %v2236, 7
    %v2238 = vsub.s32 0, %v2237
    %v2239 = vrot.slane %v2200, %v2238
    %v2240 = vmul.f32 %v2234, %v2239
    %v2241 = vmul.f32 %v2235, %v2239
    %v2242 = vlaneseq
    %v2243 = vshrl.u32 %v2242, 7
    %v2244 = vsub.s32 1, %v2243
    %v2245 = vrot.slane %v2200, %v2244
    %v2246 = vadd.f32 %v2240, %v2245
    %v2247 = vadd.f32 %v2241, %v2245
    %v2249 = vsel %vm336, %v2246, 0
    %v2252 = vsel %vm336, %v2247, 0
    %2254 = vmatprep.subr.mxu0 0.0
    %2255 = vmatpush1.msra.mxu0 %v2202
    %2256 = vmatprep.subr.mxu0 0.0
    %2257 = vmatpush1.msra.mxu0 %v2204
    %2258 = vmatprep.subr.mxu0 0.0
    %2259 = vmatpush1.msra.mxu0 %v2206
    %2260 = vmatprep.subr.mxu0 0.0
    %2261 = vmatpush1.msra.mxu0 %v2208
    %2262 = vmatprep.subr.mxu0 0.0
    %2263 = vmatpush1.msra.mxu0 0.0
    %2264 = vmatprep.subr.mxu0 0.0
    %2265 = vmatpush1.msra.mxu0 0.0
    %2266 = vmatprep.subr.mxu0 0.0
    %2267 = vmatpush1.msra.mxu0 0.0
    %2268 = vmatprep.subr.mxu0 0.0
    %2269 = vmatpush1.msra.mxu0 0.0
    %2270 = vmatprep.subr.mxu0 0.0
    %2271 = vmatpush1.msra.mxu0 0.0
    %2272 = vmatprep.subr.mxu0 0.0
    %2273 = vmatpush1.msra.mxu0 0.0
    %2274 = vmatprep.subr.mxu0 0.0
    %2275 = vmatpush1.msra.mxu0 0.0
    %2276 = vmatprep.subr.mxu0 0.0
    %2277 = vmatpush1.msra.mxu0 0.0
    %2278 = vmatprep.subr.mxu0 0.0
    %2279 = vmatpush1.msra.mxu0 0.0
    %2280 = vmatprep.subr.mxu0 0.0
    %2281 = vmatpush1.msra.mxu0 0.0
    %2282 = vmatprep.subr.mxu0 0.0
    %2283 = vmatpush1.msra.mxu0 0.0
    %2284 = vmatprep.subr.mxu0 0.0
    %2285 = vmatpush1.msra.mxu0 0.0
    %2286 = vmatprep.subr.mxu0 0.0
    %2287 = vmatpush1.msra.mxu0 0.0
    %2288 = vmatprep.subr.mxu0 0.0
    %2289 = vmatpush1.msra.mxu0 0.0
    %2290 = vmatprep.subr.mxu0 0.0
    %2291 = vmatpush1.msra.mxu0 0.0
    %2292 = vmatprep.subr.mxu0 0.0
    %2293 = vmatpush1.msra.mxu0 0.0
    %2294 = vmatprep.subr.mxu0 0.0
    %2295 = vmatpush1.msra.mxu0 0.0
    %2296 = vmatprep.subr.mxu0 0.0
    %2297 = vmatpush1.msra.mxu0 0.0
    %2298 = vmatprep.subr.mxu0 0.0
    %2299 = vmatpush1.msra.mxu0 0.0
    %2300 = vmatprep.subr.mxu0 0.0
    %2301 = vmatpush1.msra.mxu0 0.0
    %2302 = vmatprep.subr.mxu0 0.0
    %2303 = vmatpush1.msra.mxu0 0.0
    %2304 = vmatprep.subr.mxu0 0.0
    %2305 = vmatpush1.msra.mxu0 0.0
    %2306 = vmatprep.subr.mxu0 0.0
    %2307 = vmatpush1.msra.mxu0 0.0
    %2308 = vmatprep.subr.mxu0 0.0
    %2309 = vmatpush1.msra.mxu0 0.0
    %2310 = vmatprep.subr.mxu0 0.0
    %2311 = vmatpush1.msra.mxu0 0.0
    %2312 = vmatprep.subr.mxu0 0.0
    %2313 = vmatpush1.msra.mxu0 0.0
    %2314 = vmatprep.subr.mxu0 0.0
    %2315 = vmatpush1.msra.mxu0 0.0
    %2316 = vmatprep.subr.mxu0 0.0
    %2317 = vmatpush1.msra.mxu0 0.0
    %2318 = vmatprep.mubr.f32.mxu0 0.0
    %2319 = vmatmul.mubr.f32.gmra.mrb[0].mxu0 %v2249
    %v2320 = vpop.f32.mrb[0].mxu0
    %v2321 = vadd.f32 0.0, %v2320
    %v2322 = vpop.f32.mrb[0].mxu0
    %2323 = vmatprep.mubr.f32.mxu0 0.0
    %2324 = vmatmul.mubr.f32.gmra.mrb[0].mxu0 %v2252
    %v2325 = vpop.f32.mrb[0].mxu0
    %v2326 = vadd.f32 0.0, %v2325
    %v2327 = vpop.f32.mrb[0].mxu0
    %2328 = vdwg.mxu0
    %2330 = vrot.lane.b32.xlu0 %v2321, 96
    %v2331 = vpop.permute.xlu0 %2330
    %v2332 = vsel %vm487, %v2321, 0
    %v2334 = vsel %vm487, %v2331, 0
    %2336 = vmatprep.subr.mxu0 0.0
    %2337 = vmatpush1.xpose.msra.mxu0 %v2334
    %2338 = vmatprep.subr.mxu0 0.0
    %2339 = vmatpush1.xpose.msra.mxu0 0.0
    %2340 = vmatprep.subr.mxu0 0.0
    %2341 = vmatpush1.xpose.msra.mxu0 0.0
    %2342 = vmatprep.subr.mxu0 0.0
    %2343 = vmatpush1.xpose.msra.mxu0 0.0
    %2344 = vmatprep.subr.mxu0 0.0
    %2345 = vmatpush1.xpose.msra.mxu0 0.0
    %2346 = vmatprep.subr.mxu0 0.0
    %2347 = vmatpush1.xpose.msra.mxu0 0.0
    %2348 = vmatprep.subr.mxu0 0.0
    %2349 = vmatpush1.xpose.msra.mxu0 0.0
    %2350 = vmatprep.subr.mxu0 0.0
    %2351 = vmatpush1.xpose.msra.mxu0 0.0
    %2352 = vmatprep.subr.mxu0 0.0
    %2353 = vmatpush1.xpose.msra.mxu0 0.0
    %2354 = vmatprep.subr.mxu0 0.0
    %2355 = vmatpush1.xpose.msra.mxu0 0.0
    %2356 = vmatprep.subr.mxu0 0.0
    %2357 = vmatpush1.xpose.msra.mxu0 0.0
    %2358 = vmatprep.subr.mxu0 0.0
    %2359 = vmatpush1.xpose.msra.mxu0 0.0
    %2360 = vmatprep.subr.mxu0 0.0
    %2361 = vmatpush1.xpose.msra.mxu0 0.0
    %2362 = vmatprep.subr.mxu0 0.0
    %2363 = vmatpush1.xpose.msra.mxu0 0.0
    %2364 = vmatprep.subr.mxu0 0.0
    %2365 = vmatpush1.xpose.msra.mxu0 0.0
    %2366 = vmatprep.subr.mxu0 0.0
    %2367 = vmatpush1.xpose.msra.mxu0 0.0
    %2368 = vmatprep.subr.mxu0 0.0
    %2369 = vmatpush1.xpose.msra.mxu0 0.0
    %2370 = vmatprep.subr.mxu0 0.0
    %2371 = vmatpush1.xpose.msra.mxu0 0.0
    %2372 = vmatprep.subr.mxu0 0.0
    %2373 = vmatpush1.xpose.msra.mxu0 0.0
    %2374 = vmatprep.subr.mxu0 0.0
    %2375 = vmatpush1.xpose.msra.mxu0 0.0
    %2376 = vmatprep.subr.mxu0 0.0
    %2377 = vmatpush1.xpose.msra.mxu0 0.0
    %2378 = vmatprep.subr.mxu0 0.0
    %2379 = vmatpush1.xpose.msra.mxu0 0.0
    %2380 = vmatprep.subr.mxu0 0.0
    %2381 = vmatpush1.xpose.msra.mxu0 0.0
    %2382 = vmatprep.subr.mxu0 0.0
    %2383 = vmatpush1.xpose.msra.mxu0 0.0
    %2384 = vmatprep.subr.mxu0 0.0
    %2385 = vmatpush1.xpose.msra.mxu0 0.0
    %2386 = vmatprep.subr.mxu0 0.0
    %2387 = vmatpush1.xpose.msra.mxu0 0.0
    %2388 = vmatprep.subr.mxu0 0.0
    %2389 = vmatpush1.xpose.msra.mxu0 0.0
    %2390 = vmatprep.subr.mxu0 0.0
    %2391 = vmatpush1.xpose.msra.mxu0 0.0
    %2392 = vmatprep.subr.mxu0 0.0
    %2393 = vmatpush1.xpose.msra.mxu0 0.0
    %2394 = vmatprep.subr.mxu0 0.0
    %2395 = vmatpush1.xpose.msra.mxu0 0.0
    %2396 = vmatprep.subr.mxu0 0.0
    %2397 = vmatpush1.xpose.msra.mxu0 0.0
    %2398 = vmatprep.subr.mxu0 0.0
    %2399 = vmatpush1.xpose.msra.mxu0 0.0
    %2400 = vmatprep.mubr.f32.mxu0 0.0
    %2401 = vmatmul.mubr.f32.gmra.mrb[0].mxu0 %v2332
    %v2402 = vpop.f32.mrb[0].mxu0
    %v2403 = vadd.f32 0.0, %v2402
    %v2404 = vpop.f32.mrb[0].mxu0
    %2405 = vdwg.mxu0
    %2407 = vrot.lane.b32.xlu0 %v2326, 96
    %v2408 = vpop.permute.xlu0 %2407
    %v2409 = vsel %vm487, %v2326, 0
    %v2411 = vsel %vm487, %v2408, 0
    %2413 = vmatprep.subr.mxu0 0.0
    %2414 = vmatpush1.xpose.msra.mxu0 %v2411
    %2415 = vmatprep.subr.mxu0 0.0
    %2416 = vmatpush1.xpose.msra.mxu0 0.0
    %2417 = vmatprep.subr.mxu0 0.0
    %2418 = vmatpush1.xpose.msra.mxu0 0.0
    %2419 = vmatprep.subr.mxu0 0.0
    %2420 = vmatpush1.xpose.msra.mxu0 0.0
    %2421 = vmatprep.subr.mxu0 0.0
    %2422 = vmatpush1.xpose.msra.mxu0 0.0
    %2423 = vmatprep.subr.mxu0 0.0
    %2424 = vmatpush1.xpose.msra.mxu0 0.0
    %2425 = vmatprep.subr.mxu0 0.0
    %2426 = vmatpush1.xpose.msra.mxu0 0.0
    %2427 = vmatprep.subr.mxu0 0.0
    %2428 = vmatpush1.xpose.msra.mxu0 0.0
    %2429 = vmatprep.subr.mxu0 0.0
    %2430 = vmatpush1.xpose.msra.mxu0 0.0
    %2431 = vmatprep.subr.mxu0 0.0
    %2432 = vmatpush1.xpose.msra.mxu0 0.0
    %2433 = vmatprep.subr.mxu0 0.0
    %2434 = vmatpush1.xpose.msra.mxu0 0.0
    %2435 = vmatprep.subr.mxu0 0.0
    %2436 = vmatpush1.xpose.msra.mxu0 0.0
    %2437 = vmatprep.subr.mxu0 0.0
    %2438 = vmatpush1.xpose.msra.mxu0 0.0
    %2439 = vmatprep.subr.mxu0 0.0
    %2440 = vmatpush1.xpose.msra.mxu0 0.0
    %2441 = vmatprep.subr.mxu0 0.0
    %2442 = vmatpush1.xpose.msra.mxu0 0.0
    %2443 = vmatprep.subr.mxu0 0.0
    %2444 = vmatpush1.xpose.msra.mxu0 0.0
    %2445 = vmatprep.subr.mxu0 0.0
    %2446 = vmatpush1.xpose.msra.mxu0 0.0
    %2447 = vmatprep.subr.mxu0 0.0
    %2448 = vmatpush1.xpose.msra.mxu0 0.0
    %2449 = vmatprep.subr.mxu0 0.0
    %2450 = vmatpush1.xpose.msra.mxu0 0.0
    %2451 = vmatprep.subr.mxu0 0.0
    %2452 = vmatpush1.xpose.msra.mxu0 0.0
    %2453 = vmatprep.subr.mxu0 0.0
    %2454 = vmatpush1.xpose.msra.mxu0 0.0
    %2455 = vmatprep.subr.mxu0 0.0
    %2456 = vmatpush1.xpose.msra.mxu0 0.0
    %2457 = vmatprep.subr.mxu0 0.0
    %2458 = vmatpush1.xpose.msra.mxu0 0.0
    %2459 = vmatprep.subr.mxu0 0.0
    %2460 = vmatpush1.xpose.msra.mxu0 0.0
    %2461 = vmatprep.subr.mxu0 0.0
    %2462 = vmatpush1.xpose.msra.mxu0 0.0
    %2463 = vmatprep.subr.mxu0 0.0
    %2464 = vmatpush1.xpose.msra.mxu0 0.0
    %2465 = vmatprep.subr.mxu0 0.0
    %2466 = vmatpush1.xpose.msra.mxu0 0.0
    %2467 = vmatprep.subr.mxu0 0.0
    %2468 = vmatpush1.xpose.msra.mxu0 0.0
    %2469 = vmatprep.subr.mxu0 0.0
    %2470 = vmatpush1.xpose.msra.mxu0 0.0
    %2471 = vmatprep.subr.mxu0 0.0
    %2472 = vmatpush1.xpose.msra.mxu0 0.0
    %2473 = vmatprep.subr.mxu0 0.0
    %2474 = vmatpush1.xpose.msra.mxu0 0.0
    %2475 = vmatprep.subr.mxu0 0.0
    %2476 = vmatpush1.xpose.msra.mxu0 0.0
    %2477 = vmatprep.mubr.f32.mxu0 0.0
    %2478 = vmatmul.mubr.f32.gmra.mrb[0].mxu0 %v2409
    %v2479 = vpop.f32.mrb[0].mxu0
    %v2480 = vadd.f32 0.0, %v2479
    %v2481 = vpop.f32.mrb[0].mxu0
    %2482 = vdwg.mxu0
    %v2483 = vmul.f32 %v2403, 0.35355338
    %v2484 = vmul.f32 %v2480, 0.35355338
    %v2485 = vadd.f32 %v2483, %v354
    %v2486 = vadd.f32 %v2484, %v354
    %v2487 = vsel %vm487, %v2485, -inf
    %2488 = vmax.xlane.f32.xlu0 %v2487
    %v2489 = vpop.xlane.xlu0 %2488
    %v2490 = vsel %vm487, %v2486, -inf
    %2491 = vmax.xlane.f32.xlu0 %v2490
    %v2492 = vpop.xlane.xlu0 %2491
    %v2493 = vsub.f32 %v2485, %v2489
    %v2494 = vsub.f32 %v2486, %v2492
    %v2495 = vmul.f32 %v2493, 1.442695
    %v2496 = vpow.pop %v2495
    %v2497 = vmul.f32 %v2494, 1.442695
    %v2498 = vpow.pop %v2497
    %v2499 = vsel %vm487, %v2496, 0.0
    %2500 = vadd.xlane.f32.xlu0 %v2499
    %v2501 = vpop.xlane.xlu0 %2500
    %v2502 = vsel %vm487, %v2498, 0.0
    %2503 = vadd.xlane.f32.xlu0 %v2502
    %v2504 = vpop.xlane.xlu0 %2503
    %v2505 = vrcp.pop %v2501
    %v2506 = vmul.f32 %v2496, %v2505
    %v2507 = vrcp.pop %v2504
    %v2508 = vmul.f32 %v2498, %v2507
    %2509 = vrot.lane.b32.xlu0 %v2321, 64
    %v2510 = vpop.permute.xlu0 %2509
    %v2513 = vsel %vm487, %v2506, 0
    %2515 = vmatprep.subr.mxu0 0.0
    %2516 = vmatpush1.msra.mxu0 %v2510
    %2517 = vmatprep.subr.mxu0 0.0
    %2518 = vmatpush1.msra.mxu0 0.0
    %2519 = vmatprep.subr.mxu0 0.0
    %2520 = vmatpush1.msra.mxu0 0.0
    %2521 = vmatprep.subr.mxu0 0.0
    %2522 = vmatpush1.msra.mxu0 0.0
    %2523 = vmatprep.subr.mxu0 0.0
    %2524 = vmatpush1.msra.mxu0 0.0
    %2525 = vmatprep.subr.mxu0 0.0
    %2526 = vmatpush1.msra.mxu0 0.0
    %2527 = vmatprep.subr.mxu0 0.0
    %2528 = vmatpush1.msra.mxu0 0.0
    %2529 = vmatprep.subr.mxu0 0.0
    %2530 = vmatpush1.msra.mxu0 0.0
    %2531 = vmatprep.subr.mxu0 0.0
    %2532 = vmatpush1.msra.mxu0 0.0
    %2533 = vmatprep.subr.mxu0 0.0
    %2534 = vmatpush1.msra.mxu0 0.0
    %2535 = vmatprep.subr.mxu0 0.0
    %2536 = vmatpush1.msra.mxu0 0.0
    %2537 = vmatprep.subr.mxu0 0.0
    %2538 = vmatpush1.msra.mxu0 0.0
    %2539 = vmatprep.subr.mxu0 0.0
    %2540 = vmatpush1.msra.mxu0 0.0
    %2541 = vmatprep.subr.mxu0 0.0
    %2542 = vmatpush1.msra.mxu0 0.0
    %2543 = vmatprep.subr.mxu0 0.0
    %2544 = vmatpush1.msra.mxu0 0.0
    %2545 = vmatprep.subr.mxu0 0.0
    %2546 = vmatpush1.msra.mxu0 0.0
    %2547 = vmatprep.subr.mxu0 0.0
    %2548 = vmatpush1.msra.mxu0 0.0
    %2549 = vmatprep.subr.mxu0 0.0
    %2550 = vmatpush1.msra.mxu0 0.0
    %2551 = vmatprep.subr.mxu0 0.0
    %2552 = vmatpush1.msra.mxu0 0.0
    %2553 = vmatprep.subr.mxu0 0.0
    %2554 = vmatpush1.msra.mxu0 0.0
    %2555 = vmatprep.subr.mxu0 0.0
    %2556 = vmatpush1.msra.mxu0 0.0
    %2557 = vmatprep.subr.mxu0 0.0
    %2558 = vmatpush1.msra.mxu0 0.0
    %2559 = vmatprep.subr.mxu0 0.0
    %2560 = vmatpush1.msra.mxu0 0.0
    %2561 = vmatprep.subr.mxu0 0.0
    %2562 = vmatpush1.msra.mxu0 0.0
    %2563 = vmatprep.subr.mxu0 0.0
    %2564 = vmatpush1.msra.mxu0 0.0
    %2565 = vmatprep.subr.mxu0 0.0
    %2566 = vmatpush1.msra.mxu0 0.0
    %2567 = vmatprep.subr.mxu0 0.0
    %2568 = vmatpush1.msra.mxu0 0.0
    %2569 = vmatprep.subr.mxu0 0.0
    %2570 = vmatpush1.msra.mxu0 0.0
    %2571 = vmatprep.subr.mxu0 0.0
    %2572 = vmatpush1.msra.mxu0 0.0
    %2573 = vmatprep.subr.mxu0 0.0
    %2574 = vmatpush1.msra.mxu0 0.0
    %2575 = vmatprep.subr.mxu0 0.0
    %2576 = vmatpush1.msra.mxu0 0.0
    %2577 = vmatprep.subr.mxu0 0.0
    %2578 = vmatpush1.msra.mxu0 0.0
    %2579 = vmatprep.mubr.f32.mxu0 0.0
    %2580 = vmatmul.mubr.f32.gmra.mrb[0].mxu0 %v2513
    %v2581 = vpop.f32.mrb[0].mxu0
    %v2582 = vadd.f32 0.0, %v2581
    %v2583 = vpop.f32.mrb[0].mxu0
    %2584 = vdwg.mxu0
    %2585 = vrot.lane.b32.xlu0 %v2326, 64
    %v2586 = vpop.permute.xlu0 %2585
    %v2589 = vsel %vm487, %v2508, 0
    %2591 = vmatprep.subr.mxu0 0.0
    %2592 = vmatpush1.msra.mxu0 %v2586
    %2593 = vmatprep.subr.mxu0 0.0
    %2594 = vmatpush1.msra.mxu0 0.0
    %2595 = vmatprep.subr.mxu0 0.0
    %2596 = vmatpush1.msra.mxu0 0.0
    %2597 = vmatprep.subr.mxu0 0.0
    %2598 = vmatpush1.msra.mxu0 0.0
    %2599 = vmatprep.subr.mxu0 0.0
    %2600 = vmatpush1.msra.mxu0 0.0
    %2601 = vmatprep.subr.mxu0 0.0
    %2602 = vmatpush1.msra.mxu0 0.0
    %2603 = vmatprep.subr.mxu0 0.0
    %2604 = vmatpush1.msra.mxu0 0.0
    %2605 = vmatprep.subr.mxu0 0.0
    %2606 = vmatpush1.msra.mxu0 0.0
    %2607 = vmatprep.subr.mxu0 0.0
    %2608 = vmatpush1.msra.mxu0 0.0
    %2609 = vmatprep.subr.mxu0 0.0
    %2610 = vmatpush1.msra.mxu0 0.0
    %2611 = vmatprep.subr.mxu0 0.0
    %2612 = vmatpush1.msra.mxu0 0.0
    %2613 = vmatprep.subr.mxu0 0.0
    %2614 = vmatpush1.msra.mxu0 0.0
    %2615 = vmatprep.subr.mxu0 0.0
    %2616 = vmatpush1.msra.mxu0 0.0
    %2617 = vmatprep.subr.mxu0 0.0
    %2618 = vmatpush1.msra.mxu0 0.0
    %2619 = vmatprep.subr.mxu0 0.0
    %2620 = vmatpush1.msra.mxu0 0.0
    %2621 = vmatprep.subr.mxu0 0.0
    %2622 = vmatpush1.msra.mxu0 0.0
    %2623 = vmatprep.subr.mxu0 0.0
    %2624 = vmatpush1.msra.mxu0 0.0
    %2625 = vmatprep.subr.mxu0 0.0
    %2626 = vmatpush1.msra.mxu0 0.0
    %2627 = vmatprep.subr.mxu0 0.0
    %2628 = vmatpush1.msra.mxu0 0.0
    %2629 = vmatprep.subr.mxu0 0.0
    %2630 = vmatpush1.msra.mxu0 0.0
    %2631 = vmatprep.subr.mxu0 0.0
    %2632 = vmatpush1.msra.mxu0 0.0
    %2633 = vmatprep.subr.mxu0 0.0
    %2634 = vmatpush1.msra.mxu0 0.0
    %2635 = vmatprep.subr.mxu0 0.0
    %2636 = vmatpush1.msra.mxu0 0.0
    %2637 = vmatprep.subr.mxu0 0.0
    %2638 = vmatpush1.msra.mxu0 0.0
    %2639 = vmatprep.subr.mxu0 0.0
    %2640 = vmatpush1.msra.mxu0 0.0
    %2641 = vmatprep.subr.mxu0 0.0
    %2642 = vmatpush1.msra.mxu0 0.0
    %2643 = vmatprep.subr.mxu0 0.0
    %2644 = vmatpush1.msra.mxu0 0.0
    %2645 = vmatprep.subr.mxu0 0.0
    %2646 = vmatpush1.msra.mxu0 0.0
    %2647 = vmatprep.subr.mxu0 0.0
    %2648 = vmatpush1.msra.mxu0 0.0
    %2649 = vmatprep.subr.mxu0 0.0
    %2650 = vmatpush1.msra.mxu0 0.0
    %2651 = vmatprep.subr.mxu0 0.0
    %2652 = vmatpush1.msra.mxu0 0.0
    %2653 = vmatprep.subr.mxu0 0.0
    %2654 = vmatpush1.msra.mxu0 0.0
    %2655 = vmatprep.mubr.f32.mxu0 0.0
    %2656 = vmatmul.mubr.f32.gmra.mrb[0].mxu0 %v2589
    %v2657 = vpop.f32.mrb[0].mxu0
    %v2658 = vadd.f32 0.0, %v2657
    %v2659 = vpop.f32.mrb[0].mxu0
    %2660 = vdwg.mxu0
    %2661 = vst.msk [vmem:[#allocation2] sm:$0xff] %vm487, %v2582
    %2662 = vst.msk [vmem:[#allocation2 + $0x8] sm:$0xff] %vm487, %v2658
    %2663 = vrot.lane.b32.xlu0 %v2321, 120
    %v2664 = vpop.permute.xlu0 %2663
    %2665 = vrot.lane.b32.xlu0 %v2321, 88
    %v2666 = vpop.permute.xlu0 %2665
    %v2667 = vsel %vm487, %v2664, 0
    %v2669 = vsel %vm487, %v2666, 0
    %2671 = vmatprep.subr.mxu0 0.0
    %2672 = vmatpush1.xpose.msra.mxu0 %v2669
    %2673 = vmatprep.subr.mxu0 0.0
    %2674 = vmatpush1.xpose.msra.mxu0 0.0
    %2675 = vmatprep.subr.mxu0 0.0
    %2676 = vmatpush1.xpose.msra.mxu0 0.0
    %2677 = vmatprep.subr.mxu0 0.0
    %2678 = vmatpush1.xpose.msra.mxu0 0.0
    %2679 = vmatprep.subr.mxu0 0.0
    %2680 = vmatpush1.xpose.msra.mxu0 0.0
    %2681 = vmatprep.subr.mxu0 0.0
    %2682 = vmatpush1.xpose.msra.mxu0 0.0
    %2683 = vmatprep.subr.mxu0 0.0
    %2684 = vmatpush1.xpose.msra.mxu0 0.0
    %2685 = vmatprep.subr.mxu0 0.0
    %2686 = vmatpush1.xpose.msra.mxu0 0.0
    %2687 = vmatprep.subr.mxu0 0.0
    %2688 = vmatpush1.xpose.msra.mxu0 0.0
    %2689 = vmatprep.subr.mxu0 0.0
    %2690 = vmatpush1.xpose.msra.mxu0 0.0
    %2691 = vmatprep.subr.mxu0 0.0
    %2692 = vmatpush1.xpose.msra.mxu0 0.0
    %2693 = vmatprep.subr.mxu0 0.0
    %2694 = vmatpush1.xpose.msra.mxu0 0.0
    %2695 = vmatprep.subr.mxu0 0.0
    %2696 = vmatpush1.xpose.msra.mxu0 0.0
    %2697 = vmatprep.subr.mxu0 0.0
    %2698 = vmatpush1.xpose.msra.mxu0 0.0
    %2699 = vmatprep.subr.mxu0 0.0
    %2700 = vmatpush1.xpose.msra.mxu0 0.0
    %2701 = vmatprep.subr.mxu0 0.0
    %2702 = vmatpush1.xpose.msra.mxu0 0.0
    %2703 = vmatprep.subr.mxu0 0.0
    %2704 = vmatpush1.xpose.msra.mxu0 0.0
    %2705 = vmatprep.subr.mxu0 0.0
    %2706 = vmatpush1.xpose.msra.mxu0 0.0
    %2707 = vmatprep.subr.mxu0 0.0
    %2708 = vmatpush1.xpose.msra.mxu0 0.0
    %2709 = vmatprep.subr.mxu0 0.0
    %2710 = vmatpush1.xpose.msra.mxu0 0.0
    %2711 = vmatprep.subr.mxu0 0.0
    %2712 = vmatpush1.xpose.msra.mxu0 0.0
    %2713 = vmatprep.subr.mxu0 0.0
    %2714 = vmatpush1.xpose.msra.mxu0 0.0
    %2715 = vmatprep.subr.mxu0 0.0
    %2716 = vmatpush1.xpose.msra.mxu0 0.0
    %2717 = vmatprep.subr.mxu0 0.0
    %2718 = vmatpush1.xpose.msra.mxu0 0.0
    %2719 = vmatprep.subr.mxu0 0.0
    %2720 = vmatpush1.xpose.msra.mxu0 0.0
    %2721 = vmatprep.subr.mxu0 0.0
    %2722 = vmatpush1.xpose.msra.mxu0 0.0
    %2723 = vmatprep.subr.mxu0 0.0
    %2724 = vmatpush1.xpose.msra.mxu0 0.0
    %2725 = vmatprep.subr.mxu0 0.0
    %2726 = vmatpush1.xpose.msra.mxu0 0.0
    %2727 = vmatprep.subr.mxu0 0.0
    %2728 = vmatpush1.xpose.msra.mxu0 0.0
    %2729 = vmatprep.subr.mxu0 0.0
    %2730 = vmatpush1.xpose.msra.mxu0 0.0
    %2731 = vmatprep.subr.mxu0 0.0
    %2732 = vmatpush1.xpose.msra.mxu0 0.0
    %2733 = vmatprep.subr.mxu0 0.0
    %2734 = vmatpush1.xpose.msra.mxu0 0.0
    %2735 = vmatprep.mubr.f32.mxu0 0.0
    %2736 = vmatmul.mubr.f32.gmra.mrb[0].mxu0 %v2667
    %v2737 = vpop.f32.mrb[0].mxu0
    %v2738 = vadd.f32 0.0, %v2737
    %v2739 = vpop.f32.mrb[0].mxu0
    %2740 = vdwg.mxu0
    %2741 = vrot.lane.b32.xlu0 %v2326, 120
    %v2742 = vpop.permute.xlu0 %2741
    %2743 = vrot.lane.b32.xlu0 %v2326, 88
    %v2744 = vpop.permute.xlu0 %2743
    %v2745 = vsel %vm487, %v2742, 0
    %v2747 = vsel %vm487, %v2744, 0
    %2749 = vmatprep.subr.mxu0 0.0
    %2750 = vmatpush1.xpose.msra.mxu0 %v2747
    %2751 = vmatprep.subr.mxu0 0.0
    %2752 = vmatpush1.xpose.msra.mxu0 0.0
    %2753 = vmatprep.subr.mxu0 0.0
    %2754 = vmatpush1.xpose.msra.mxu0 0.0
    %2755 = vmatprep.subr.mxu0 0.0
    %2756 = vmatpush1.xpose.msra.mxu0 0.0
    %2757 = vmatprep.subr.mxu0 0.0
    %2758 = vmatpush1.xpose.msra.mxu0 0.0
    %2759 = vmatprep.subr.mxu0 0.0
    %2760 = vmatpush1.xpose.msra.mxu0 0.0
    %2761 = vmatprep.subr.mxu0 0.0
    %2762 = vmatpush1.xpose.msra.mxu0 0.0
    %2763 = vmatprep.subr.mxu0 0.0
    %2764 = vmatpush1.xpose.msra.mxu0 0.0
    %2765 = vmatprep.subr.mxu0 0.0
    %2766 = vmatpush1.xpose.msra.mxu0 0.0
    %2767 = vmatprep.subr.mxu0 0.0
    %2768 = vmatpush1.xpose.msra.mxu0 0.0
    %2769 = vmatprep.subr.mxu0 0.0
    %2770 = vmatpush1.xpose.msra.mxu0 0.0
    %2771 = vmatprep.subr.mxu0 0.0
    %2772 = vmatpush1.xpose.msra.mxu0 0.0
    %2773 = vmatprep.subr.mxu0 0.0
    %2774 = vmatpush1.xpose.msra.mxu0 0.0
    %2775 = vmatprep.subr.mxu0 0.0
    %2776 = vmatpush1.xpose.msra.mxu0 0.0
    %2777 = vmatprep.subr.mxu0 0.0
    %2778 = vmatpush1.xpose.msra.mxu0 0.0
    %2779 = vmatprep.subr.mxu0 0.0
    %2780 = vmatpush1.xpose.msra.mxu0 0.0
    %2781 = vmatprep.subr.mxu0 0.0
    %2782 = vmatpush1.xpose.msra.mxu0 0.0
    %2783 = vmatprep.subr.mxu0 0.0
    %2784 = vmatpush1.xpose.msra.mxu0 0.0
    %2785 = vmatprep.subr.mxu0 0.0
    %2786 = vmatpush1.xpose.msra.mxu0 0.0
    %2787 = vmatprep.subr.mxu0 0.0
    %2788 = vmatpush1.xpose.msra.mxu0 0.0
    %2789 = vmatprep.subr.mxu0 0.0
    %2790 = vmatpush1.xpose.msra.mxu0 0.0
    %2791 = vmatprep.subr.mxu0 0.0
    %2792 = vmatpush1.xpose.msra.mxu0 0.0
    %2793 = vmatprep.subr.mxu0 0.0
    %2794 = vmatpush1.xpose.msra.mxu0 0.0
    %2795 = vmatprep.subr.mxu0 0.0
    %2796 = vmatpush1.xpose.msra.mxu0 0.0
    %2797 = vmatprep.subr.mxu0 0.0
    %2798 = vmatpush1.xpose.msra.mxu0 0.0
    %2799 = vmatprep.subr.mxu0 0.0
    %2800 = vmatpush1.xpose.msra.mxu0 0.0
    %2801 = vmatprep.subr.mxu0 0.0
    %2802 = vmatpush1.xpose.msra.mxu0 0.0
    %2803 = vmatprep.subr.mxu0 0.0
    %2804 = vmatpush1.xpose.msra.mxu0 0.0
    %2805 = vmatprep.subr.mxu0 0.0
    %2806 = vmatpush1.xpose.msra.mxu0 0.0
    %2807 = vmatprep.subr.mxu0 0.0
    %2808 = vmatpush1.xpose.msra.mxu0 0.0
    %2809 = vmatprep.subr.mxu0 0.0
    %2810 = vmatpush1.xpose.msra.mxu0 0.0
    %2811 = vmatprep.subr.mxu0 0.0
    %2812 = vmatpush1.xpose.msra.mxu0 0.0
    %2813 = vmatprep.mubr.f32.mxu0 0.0
    %2814 = vmatmul.mubr.f32.gmra.mrb[0].mxu0 %v2745
    %v2815 = vpop.f32.mrb[0].mxu0
    %v2816 = vadd.f32 0.0, %v2815
    %v2817 = vpop.f32.mrb[0].mxu0
    %2818 = vdwg.mxu0
    %v2819 = vmul.f32 %v2738, 0.35355338
    %v2820 = vmul.f32 %v2816, 0.35355338
    %v2821 = vadd.f32 %v2819, %v354
    %v2822 = vadd.f32 %v2820, %v354
    %v2823 = vsel %vm487, %v2821, -inf
    %2824 = vmax.xlane.f32.xlu0 %v2823
    %v2825 = vpop.xlane.xlu0 %2824
    %v2826 = vsel %vm487, %v2822, -inf
    %2827 = vmax.xlane.f32.xlu0 %v2826
    %v2828 = vpop.xlane.xlu0 %2827
    %v2829 = vsub.f32 %v2821, %v2825
    %v2830 = vsub.f32 %v2822, %v2828
    %v2831 = vmul.f32 %v2829, 1.442695
    %v2832 = vpow.pop %v2831
    %v2833 = vmul.f32 %v2830, 1.442695
    %v2834 = vpow.pop %v2833
    %v2835 = vsel %vm487, %v2832, 0.0
    %2836 = vadd.xlane.f32.xlu0 %v2835
    %v2837 = vpop.xlane.xlu0 %2836
    %v2838 = vsel %vm487, %v2834, 0.0
    %2839 = vadd.xlane.f32.xlu0 %v2838
    %v2840 = vpop.xlane.xlu0 %2839
    %v2841 = vrcp.pop %v2837
    %v2842 = vmul.f32 %v2832, %v2841
    %v2843 = vrcp.pop %v2840
    %v2844 = vmul.f32 %v2834, %v2843
    %2845 = vrot.lane.b32.xlu0 %v2321, 56
    %v2846 = vpop.permute.xlu0 %2845
    %v2849 = vsel %vm487, %v2842, 0
    %2851 = vmatprep.subr.mxu0 0.0
    %2852 = vmatpush1.msra.mxu0 %v2846
    %2853 = vmatprep.subr.mxu0 0.0
    %2854 = vmatpush1.msra.mxu0 0.0
    %2855 = vmatprep.subr.mxu0 0.0
    %2856 = vmatpush1.msra.mxu0 0.0
    %2857 = vmatprep.subr.mxu0 0.0
    %2858 = vmatpush1.msra.mxu0 0.0
    %2859 = vmatprep.subr.mxu0 0.0
    %2860 = vmatpush1.msra.mxu0 0.0
    %2861 = vmatprep.subr.mxu0 0.0
    %2862 = vmatpush1.msra.mxu0 0.0
    %2863 = vmatprep.subr.mxu0 0.0
    %2864 = vmatpush1.msra.mxu0 0.0
    %2865 = vmatprep.subr.mxu0 0.0
    %2866 = vmatpush1.msra.mxu0 0.0
    %2867 = vmatprep.subr.mxu0 0.0
    %2868 = vmatpush1.msra.mxu0 0.0
    %2869 = vmatprep.subr.mxu0 0.0
    %2870 = vmatpush1.msra.mxu0 0.0
    %2871 = vmatprep.subr.mxu0 0.0
    %2872 = vmatpush1.msra.mxu0 0.0
    %2873 = vmatprep.subr.mxu0 0.0
    %2874 = vmatpush1.msra.mxu0 0.0
    %2875 = vmatprep.subr.mxu0 0.0
    %2876 = vmatpush1.msra.mxu0 0.0
    %2877 = vmatprep.subr.mxu0 0.0
    %2878 = vmatpush1.msra.mxu0 0.0
    %2879 = vmatprep.subr.mxu0 0.0
    %2880 = vmatpush1.msra.mxu0 0.0
    %2881 = vmatprep.subr.mxu0 0.0
    %2882 = vmatpush1.msra.mxu0 0.0
    %2883 = vmatprep.subr.mxu0 0.0
    %2884 = vmatpush1.msra.mxu0 0.0
    %2885 = vmatprep.subr.mxu0 0.0
    %2886 = vmatpush1.msra.mxu0 0.0
    %2887 = vmatprep.subr.mxu0 0.0
    %2888 = vmatpush1.msra.mxu0 0.0
    %2889 = vmatprep.subr.mxu0 0.0
    %2890 = vmatpush1.msra.mxu0 0.0
    %2891 = vmatprep.subr.mxu0 0.0
    %2892 = vmatpush1.msra.mxu0 0.0
    %2893 = vmatprep.subr.mxu0 0.0
    %2894 = vmatpush1.msra.mxu0 0.0
    %2895 = vmatprep.subr.mxu0 0.0
    %2896 = vmatpush1.msra.mxu0 0.0
    %2897 = vmatprep.subr.mxu0 0.0
    %2898 = vmatpush1.msra.mxu0 0.0
    %2899 = vmatprep.subr.mxu0 0.0
    %2900 = vmatpush1.msra.mxu0 0.0
    %2901 = vmatprep.subr.mxu0 0.0
    %2902 = vmatpush1.msra.mxu0 0.0
    %2903 = vmatprep.subr.mxu0 0.0
    %2904 = vmatpush1.msra.mxu0 0.0
    %2905 = vmatprep.subr.mxu0 0.0
    %2906 = vmatpush1.msra.mxu0 0.0
    %2907 = vmatprep.subr.mxu0 0.0
    %2908 = vmatpush1.msra.mxu0 0.0
    %2909 = vmatprep.subr.mxu0 0.0
    %2910 = vmatpush1.msra.mxu0 0.0
    %2911 = vmatprep.subr.mxu0 0.0
    %2912 = vmatpush1.msra.mxu0 0.0
    %2913 = vmatprep.subr.mxu0 0.0
    %2914 = vmatpush1.msra.mxu0 0.0
    %2915 = vmatprep.mubr.f32.mxu0 0.0
    %2916 = vmatmul.mubr.f32.gmra.mrb[0].mxu0 %v2849
    %v2917 = vpop.f32.mrb[0].mxu0
    %v2918 = vadd.f32 0.0, %v2917
    %v2919 = vpop.f32.mrb[0].mxu0
    %2920 = vdwg.mxu0
    %2921 = vrot.lane.b32.xlu0 %v2326, 56
    %v2922 = vpop.permute.xlu0 %2921
    %v2925 = vsel %vm487, %v2844, 0
    %2927 = vmatprep.subr.mxu0 0.0
    %2928 = vmatpush1.msra.mxu0 %v2922
    %2929 = vmatprep.subr.mxu0 0.0
    %2930 = vmatpush1.msra.mxu0 0.0
    %2931 = vmatprep.subr.mxu0 0.0
    %2932 = vmatpush1.msra.mxu0 0.0
    %2933 = vmatprep.subr.mxu0 0.0
    %2934 = vmatpush1.msra.mxu0 0.0
    %2935 = vmatprep.subr.mxu0 0.0
    %2936 = vmatpush1.msra.mxu0 0.0
    %2937 = vmatprep.subr.mxu0 0.0
    %2938 = vmatpush1.msra.mxu0 0.0
    %2939 = vmatprep.subr.mxu0 0.0
    %2940 = vmatpush1.msra.mxu0 0.0
    %2941 = vmatprep.subr.mxu0 0.0
    %2942 = vmatpush1.msra.mxu0 0.0
    %2943 = vmatprep.subr.mxu0 0.0
    %2944 = vmatpush1.msra.mxu0 0.0
    %2945 = vmatprep.subr.mxu0 0.0
    %2946 = vmatpush1.msra.mxu0 0.0
    %2947 = vmatprep.subr.mxu0 0.0
    %2948 = vmatpush1.msra.mxu0 0.0
    %2949 = vmatprep.subr.mxu0 0.0
    %2950 = vmatpush1.msra.mxu0 0.0
    %2951 = vmatprep.subr.mxu0 0.0
    %2952 = vmatpush1.msra.mxu0 0.0
    %2953 = vmatprep.subr.mxu0 0.0
    %2954 = vmatpush1.msra.mxu0 0.0
    %2955 = vmatprep.subr.mxu0 0.0
    %2956 = vmatpush1.msra.mxu0 0.0
    %2957 = vmatprep.subr.mxu0 0.0
    %2958 = vmatpush1.msra.mxu0 0.0
    %2959 = vmatprep.subr.mxu0 0.0
    %2960 = vmatpush1.msra.mxu0 0.0
    %2961 = vmatprep.subr.mxu0 0.0
    %2962 = vmatpush1.msra.mxu0 0.0
    %2963 = vmatprep.subr.mxu0 0.0
    %2964 = vmatpush1.msra.mxu0 0.0
    %2965 = vmatprep.subr.mxu0 0.0
    %2966 = vmatpush1.msra.mxu0 0.0
    %2967 = vmatprep.subr.mxu0 0.0
    %2968 = vmatpush1.msra.mxu0 0.0
    %2969 = vmatprep.subr.mxu0 0.0
    %2970 = vmatpush1.msra.mxu0 0.0
    %2971 = vmatprep.subr.mxu0 0.0
    %2972 = vmatpush1.msra.mxu0 0.0
    %2973 = vmatprep.subr.mxu0 0.0
    %2974 = vmatpush1.msra.mxu0 0.0
    %2975 = vmatprep.subr.mxu0 0.0
    %2976 = vmatpush1.msra.mxu0 0.0
    %2977 = vmatprep.subr.mxu0 0.0
    %2978 = vmatpush1.msra.mxu0 0.0
    %2979 = vmatprep.subr.mxu0 0.0
    %2980 = vmatpush1.msra.mxu0 0.0
    %2981 = vmatprep.subr.mxu0 0.0
    %2982 = vmatpush1.msra.mxu0 0.0
    %2983 = vmatprep.subr.mxu0 0.0
    %2984 = vmatpush1.msra.mxu0 0.0
    %2985 = vmatprep.subr.mxu0 0.0
    %2986 = vmatpush1.msra.mxu0 0.0
    %2987 = vmatprep.subr.mxu0 0.0
    %2988 = vmatpush1.msra.mxu0 0.0
    %2989 = vmatprep.subr.mxu0 0.0
    %2990 = vmatpush1.msra.mxu0 0.0
    %2991 = vmatprep.mubr.f32.mxu0 0.0
    %2992 = vmatmul.mubr.f32.gmra.mrb[0].mxu0 %v2925
    %v2993 = vpop.f32.mrb[0].mxu0
    %v2994 = vadd.f32 0.0, %v2993
    %v2995 = vpop.f32.mrb[0].mxu0
    %2996 = vdwg.mxu0
    %2999 = vrot.lane.b32.xlu0 %v2918, 8
    %v3000 = vpop.permute.xlu0 %2999
    %3001 = vrot.lane.b32.xlu0 %v2994, 8
    %v3002 = vpop.permute.xlu0 %3001
    %3005 = vst.msk [vmem:[#allocation2] sm:$0xff] %vm1161, %v3000
    %3006 = vst.msk [vmem:[#allocation2 + $0x8] sm:$0xff] %vm1161, %v3002
    %3007 = vrot.lane.b32.xlu0 %v2321, 112
    %v3008 = vpop.permute.xlu0 %3007
    %3009 = vrot.lane.b32.xlu0 %v2321, 80
    %v3010 = vpop.permute.xlu0 %3009
    %v3011 = vsel %vm487, %v3008, 0
    %v3013 = vsel %vm487, %v3010, 0
    %3015 = vmatprep.subr.mxu0 0.0
    %3016 = vmatpush1.xpose.msra.mxu0 %v3013
    %3017 = vmatprep.subr.mxu0 0.0
    %3018 = vmatpush1.xpose.msra.mxu0 0.0
    %3019 = vmatprep.subr.mxu0 0.0
    %3020 = vmatpush1.xpose.msra.mxu0 0.0
    %3021 = vmatprep.subr.mxu0 0.0
    %3022 = vmatpush1.xpose.msra.mxu0 0.0
    %3023 = vmatprep.subr.mxu0 0.0
    %3024 = vmatpush1.xpose.msra.mxu0 0.0
    %3025 = vmatprep.subr.mxu0 0.0
    %3026 = vmatpush1.xpose.msra.mxu0 0.0
    %3027 = vmatprep.subr.mxu0 0.0
    %3028 = vmatpush1.xpose.msra.mxu0 0.0
    %3029 = vmatprep.subr.mxu0 0.0
    %3030 = vmatpush1.xpose.msra.mxu0 0.0
    %3031 = vmatprep.subr.mxu0 0.0
    %3032 = vmatpush1.xpose.msra.mxu0 0.0
    %3033 = vmatprep.subr.mxu0 0.0
    %3034 = vmatpush1.xpose.msra.mxu0 0.0
    %3035 = vmatprep.subr.mxu0 0.0
    %3036 = vmatpush1.xpose.msra.mxu0 0.0
    %3037 = vmatprep.subr.mxu0 0.0
    %3038 = vmatpush1.xpose.msra.mxu0 0.0
    %3039 = vmatprep.subr.mxu0 0.0
    %3040 = vmatpush1.xpose.msra.mxu0 0.0
    %3041 = vmatprep.subr.mxu0 0.0
    %3042 = vmatpush1.xpose.msra.mxu0 0.0
    %3043 = vmatprep.subr.mxu0 0.0
    %3044 = vmatpush1.xpose.msra.mxu0 0.0
    %3045 = vmatprep.subr.mxu0 0.0
    %3046 = vmatpush1.xpose.msra.mxu0 0.0
    %3047 = vmatprep.subr.mxu0 0.0
    %3048 = vmatpush1.xpose.msra.mxu0 0.0
    %3049 = vmatprep.subr.mxu0 0.0
    %3050 = vmatpush1.xpose.msra.mxu0 0.0
    %3051 = vmatprep.subr.mxu0 0.0
    %3052 = vmatpush1.xpose.msra.mxu0 0.0
    %3053 = vmatprep.subr.mxu0 0.0
    %3054 = vmatpush1.xpose.msra.mxu0 0.0
    %3055 = vmatprep.subr.mxu0 0.0
    %3056 = vmatpush1.xpose.msra.mxu0 0.0
    %3057 = vmatprep.subr.mxu0 0.0
    %3058 = vmatpush1.xpose.msra.mxu0 0.0
    %3059 = vmatprep.subr.mxu0 0.0
    %3060 = vmatpush1.xpose.msra.mxu0 0.0
    %3061 = vmatprep.subr.mxu0 0.0
    %3062 = vmatpush1.xpose.msra.mxu0 0.0
    %3063 = vmatprep.subr.mxu0 0.0
    %3064 = vmatpush1.xpose.msra.mxu0 0.0
    %3065 = vmatprep.subr.mxu0 0.0
    %3066 = vmatpush1.xpose.msra.mxu0 0.0
    %3067 = vmatprep.subr.mxu0 0.0
    %3068 = vmatpush1.xpose.msra.mxu0 0.0
    %3069 = vmatprep.subr.mxu0 0.0
    %3070 = vmatpush1.xpose.msra.mxu0 0.0
    %3071 = vmatprep.subr.mxu0 0.0
    %3072 = vmatpush1.xpose.msra.mxu0 0.0
    %3073 = vmatprep.subr.mxu0 0.0
    %3074 = vmatpush1.xpose.msra.mxu0 0.0
    %3075 = vmatprep.subr.mxu0 0.0
    %3076 = vmatpush1.xpose.msra.mxu0 0.0
    %3077 = vmatprep.subr.mxu0 0.0
    %3078 = vmatpush1.xpose.msra.mxu0 0.0
    %3079 = vmatprep.mubr.f32.mxu0 0.0
    %3080 = vmatmul.mubr.f32.gmra.mrb[0].mxu0 %v3011
    %v3081 = vpop.f32.mrb[0].mxu0
    %v3082 = vadd.f32 0.0, %v3081
    %v3083 = vpop.f32.mrb[0].mxu0
    %3084 = vdwg.mxu0
    %3085 = vrot.lane.b32.xlu0 %v2326, 112
    %v3086 = vpop.permute.xlu0 %3085
    %3087 = vrot.lane.b32.xlu0 %v2326, 80
    %v3088 = vpop.permute.xlu0 %3087
    %v3089 = vsel %vm487, %v3086, 0
    %v3091 = vsel %vm487, %v3088, 0
    %3093 = vmatprep.subr.mxu0 0.0
    %3094 = vmatpush1.xpose.msra.mxu0 %v3091
    %3095 = vmatprep.subr.mxu0 0.0
    %3096 = vmatpush1.xpose.msra.mxu0 0.0
    %3097 = vmatprep.subr.mxu0 0.0
    %3098 = vmatpush1.xpose.msra.mxu0 0.0
    %3099 = vmatprep.subr.mxu0 0.0
    %3100 = vmatpush1.xpose.msra.mxu0 0.0
    %3101 = vmatprep.subr.mxu0 0.0
    %3102 = vmatpush1.xpose.msra.mxu0 0.0
    %3103 = vmatprep.subr.mxu0 0.0
    %3104 = vmatpush1.xpose.msra.mxu0 0.0
    %3105 = vmatprep.subr.mxu0 0.0
    %3106 = vmatpush1.xpose.msra.mxu0 0.0
    %3107 = vmatprep.subr.mxu0 0.0
    %3108 = vmatpush1.xpose.msra.mxu0 0.0
    %3109 = vmatprep.subr.mxu0 0.0
    %3110 = vmatpush1.xpose.msra.mxu0 0.0
    %3111 = vmatprep.subr.mxu0 0.0
    %3112 = vmatpush1.xpose.msra.mxu0 0.0
    %3113 = vmatprep.subr.mxu0 0.0
    %3114 = vmatpush1.xpose.msra.mxu0 0.0
    %3115 = vmatprep.subr.mxu0 0.0
    %3116 = vmatpush1.xpose.msra.mxu0 0.0
    %3117 = vmatprep.subr.mxu0 0.0
    %3118 = vmatpush1.xpose.msra.mxu0 0.0
    %3119 = vmatprep.subr.mxu0 0.0
    %3120 = vmatpush1.xpose.msra.mxu0 0.0
    %3121 = vmatprep.subr.mxu0 0.0
    %3122 = vmatpush1.xpose.msra.mxu0 0.0
    %3123 = vmatprep.subr.mxu0 0.0
    %3124 = vmatpush1.xpose.msra.mxu0 0.0
    %3125 = vmatprep.subr.mxu0 0.0
    %3126 = vmatpush1.xpose.msra.mxu0 0.0
    %3127 = vmatprep.subr.mxu0 0.0
    %3128 = vmatpush1.xpose.msra.mxu0 0.0
    %3129 = vmatprep.subr.mxu0 0.0
    %3130 = vmatpush1.xpose.msra.mxu0 0.0
    %3131 = vmatprep.subr.mxu0 0.0
    %3132 = vmatpush1.xpose.msra.mxu0 0.0
    %3133 = vmatprep.subr.mxu0 0.0
    %3134 = vmatpush1.xpose.msra.mxu0 0.0
    %3135 = vmatprep.subr.mxu0 0.0
    %3136 = vmatpush1.xpose.msra.mxu0 0.0
    %3137 = vmatprep.subr.mxu0 0.0
    %3138 = vmatpush1.xpose.msra.mxu0 0.0
    %3139 = vmatprep.subr.mxu0 0.0
    %3140 = vmatpush1.xpose.msra.mxu0 0.0
    %3141 = vmatprep.subr.mxu0 0.0
    %3142 = vmatpush1.xpose.msra.mxu0 0.0
    %3143 = vmatprep.subr.mxu0 0.0
    %3144 = vmatpush1.xpose.msra.mxu0 0.0
    %3145 = vmatprep.subr.mxu0 0.0
    %3146 = vmatpush1.xpose.msra.mxu0 0.0
    %3147 = vmatprep.subr.mxu0 0.0
    %3148 = vmatpush1.xpose.msra.mxu0 0.0
    %3149 = vmatprep.subr.mxu0 0.0
    %3150 = vmatpush1.xpose.msra.mxu0 0.0
    %3151 = vmatprep.subr.mxu0 0.0
    %3152 = vmatpush1.xpose.msra.mxu0 0.0
    %3153 = vmatprep.subr.mxu0 0.0
    %3154 = vmatpush1.xpose.msra.mxu0 0.0
    %3155 = vmatprep.subr.mxu0 0.0
    %3156 = vmatpush1.xpose.msra.mxu0 0.0
    %3157 = vmatprep.mubr.f32.mxu0 0.0
    %3158 = vmatmul.mubr.f32.gmra.mrb[0].mxu0 %v3089
    %v3159 = vpop.f32.mrb[0].mxu0
    %v3160 = vadd.f32 0.0, %v3159
    %v3161 = vpop.f32.mrb[0].mxu0
    %3162 = vdwg.mxu0
    %v3163 = vmul.f32 %v3082, 0.35355338
    %v3164 = vmul.f32 %v3160, 0.35355338
    %v3165 = vadd.f32 %v3163, %v354
    %v3166 = vadd.f32 %v3164, %v354
    %v3167 = vsel %vm487, %v3165, -inf
    %3168 = vmax.xlane.f32.xlu0 %v3167
    %v3169 = vpop.xlane.xlu0 %3168
    %v3170 = vsel %vm487, %v3166, -inf
    %3171 = vmax.xlane.f32.xlu0 %v3170
    %v3172 = vpop.xlane.xlu0 %3171
    %v3173 = vsub.f32 %v3165, %v3169
    %v3174 = vsub.f32 %v3166, %v3172
    %v3175 = vmul.f32 %v3173, 1.442695
    %v3176 = vpow.pop %v3175
    %v3177 = vmul.f32 %v3174, 1.442695
    %v3178 = vpow.pop %v3177
    %v3179 = vsel %vm487, %v3176, 0.0
    %3180 = vadd.xlane.f32.xlu0 %v3179
    %v3181 = vpop.xlane.xlu0 %3180
    %v3182 = vsel %vm487, %v3178, 0.0
    %3183 = vadd.xlane.f32.xlu0 %v3182
    %v3184 = vpop.xlane.xlu0 %3183
    %v3185 = vrcp.pop %v3181
    %v3186 = vmul.f32 %v3176, %v3185
    %v3187 = vrcp.pop %v3184
    %v3188 = vmul.f32 %v3178, %v3187
    %3189 = vrot.lane.b32.xlu0 %v2321, 48
    %v3190 = vpop.permute.xlu0 %3189
    %v3193 = vsel %vm487, %v3186, 0
    %3195 = vmatprep.subr.mxu0 0.0
    %3196 = vmatpush1.msra.mxu0 %v3190
    %3197 = vmatprep.subr.mxu0 0.0
    %3198 = vmatpush1.msra.mxu0 0.0
    %3199 = vmatprep.subr.mxu0 0.0
    %3200 = vmatpush1.msra.mxu0 0.0
    %3201 = vmatprep.subr.mxu0 0.0
    %3202 = vmatpush1.msra.mxu0 0.0
    %3203 = vmatprep.subr.mxu0 0.0
    %3204 = vmatpush1.msra.mxu0 0.0
    %3205 = vmatprep.subr.mxu0 0.0
    %3206 = vmatpush1.msra.mxu0 0.0
    %3207 = vmatprep.subr.mxu0 0.0
    %3208 = vmatpush1.msra.mxu0 0.0
    %3209 = vmatprep.subr.mxu0 0.0
    %3210 = vmatpush1.msra.mxu0 0.0
    %3211 = vmatprep.subr.mxu0 0.0
    %3212 = vmatpush1.msra.mxu0 0.0
    %3213 = vmatprep.subr.mxu0 0.0
    %3214 = vmatpush1.msra.mxu0 0.0
    %3215 = vmatprep.subr.mxu0 0.0
    %3216 = vmatpush1.msra.mxu0 0.0
    %3217 = vmatprep.subr.mxu0 0.0
    %3218 = vmatpush1.msra.mxu0 0.0
    %3219 = vmatprep.subr.mxu0 0.0
    %3220 = vmatpush1.msra.mxu0 0.0
    %3221 = vmatprep.subr.mxu0 0.0
    %3222 = vmatpush1.msra.mxu0 0.0
    %3223 = vmatprep.subr.mxu0 0.0
    %3224 = vmatpush1.msra.mxu0 0.0
    %3225 = vmatprep.subr.mxu0 0.0
    %3226 = vmatpush1.msra.mxu0 0.0
    %3227 = vmatprep.subr.mxu0 0.0
    %3228 = vmatpush1.msra.mxu0 0.0
    %3229 = vmatprep.subr.mxu0 0.0
    %3230 = vmatpush1.msra.mxu0 0.0
    %3231 = vmatprep.subr.mxu0 0.0
    %3232 = vmatpush1.msra.mxu0 0.0
    %3233 = vmatprep.subr.mxu0 0.0
    %3234 = vmatpush1.msra.mxu0 0.0
    %3235 = vmatprep.subr.mxu0 0.0
    %3236 = vmatpush1.msra.mxu0 0.0
    %3237 = vmatprep.subr.mxu0 0.0
    %3238 = vmatpush1.msra.mxu0 0.0
    %3239 = vmatprep.subr.mxu0 0.0
    %3240 = vmatpush1.msra.mxu0 0.0
    %3241 = vmatprep.subr.mxu0 0.0
    %3242 = vmatpush1.msra.mxu0 0.0
    %3243 = vmatprep.subr.mxu0 0.0
    %3244 = vmatpush1.msra.mxu0 0.0
    %3245 = vmatprep.subr.mxu0 0.0
    %3246 = vmatpush1.msra.mxu0 0.0
    %3247 = vmatprep.subr.mxu0 0.0
    %3248 = vmatpush1.msra.mxu0 0.0
    %3249 = vmatprep.subr.mxu0 0.0
    %3250 = vmatpush1.msra.mxu0 0.0
    %3251 = vmatprep.subr.mxu0 0.0
    %3252 = vmatpush1.msra.mxu0 0.0
    %3253 = vmatprep.subr.mxu0 0.0
    %3254 = vmatpush1.msra.mxu0 0.0
    %3255 = vmatprep.subr.mxu0 0.0
    %3256 = vmatpush1.msra.mxu0 0.0
    %3257 = vmatprep.subr.mxu0 0.0
    %3258 = vmatpush1.msra.mxu0 0.0
    %3259 = vmatprep.mubr.f32.mxu0 0.0
    %3260 = vmatmul.mubr.f32.gmra.mrb[0].mxu0 %v3193
    %v3261 = vpop.f32.mrb[0].mxu0
    %v3262 = vadd.f32 0.0, %v3261
    %v3263 = vpop.f32.mrb[0].mxu0
    %3264 = vdwg.mxu0
    %3265 = vrot.lane.b32.xlu0 %v2326, 48
    %v3266 = vpop.permute.xlu0 %3265
    %v3269 = vsel %vm487, %v3188, 0
    %3271 = vmatprep.subr.mxu0 0.0
    %3272 = vmatpush1.msra.mxu0 %v3266
    %3273 = vmatprep.subr.mxu0 0.0
    %3274 = vmatpush1.msra.mxu0 0.0
    %3275 = vmatprep.subr.mxu0 0.0
    %3276 = vmatpush1.msra.mxu0 0.0
    %3277 = vmatprep.subr.mxu0 0.0
    %3278 = vmatpush1.msra.mxu0 0.0
    %3279 = vmatprep.subr.mxu0 0.0
    %3280 = vmatpush1.msra.mxu0 0.0
    %3281 = vmatprep.subr.mxu0 0.0
    %3282 = vmatpush1.msra.mxu0 0.0
    %3283 = vmatprep.subr.mxu0 0.0
    %3284 = vmatpush1.msra.mxu0 0.0
    %3285 = vmatprep.subr.mxu0 0.0
    %3286 = vmatpush1.msra.mxu0 0.0
    %3287 = vmatprep.subr.mxu0 0.0
    %3288 = vmatpush1.msra.mxu0 0.0
    %3289 = vmatprep.subr.mxu0 0.0
    %3290 = vmatpush1.msra.mxu0 0.0
    %3291 = vmatprep.subr.mxu0 0.0
    %3292 = vmatpush1.msra.mxu0 0.0
    %3293 = vmatprep.subr.mxu0 0.0
    %3294 = vmatpush1.msra.mxu0 0.0
    %3295 = vmatprep.subr.mxu0 0.0
    %3296 = vmatpush1.msra.mxu0 0.0
    %3297 = vmatprep.subr.mxu0 0.0
    %3298 = vmatpush1.msra.mxu0 0.0
    %3299 = vmatprep.subr.mxu0 0.0
    %3300 = vmatpush1.msra.mxu0 0.0
    %3301 = vmatprep.subr.mxu0 0.0
    %3302 = vmatpush1.msra.mxu0 0.0
    %3303 = vmatprep.subr.mxu0 0.0
    %3304 = vmatpush1.msra.mxu0 0.0
    %3305 = vmatprep.subr.mxu0 0.0
    %3306 = vmatpush1.msra.mxu0 0.0
    %3307 = vmatprep.subr.mxu0 0.0
    %3308 = vmatpush1.msra.mxu0 0.0
    %3309 = vmatprep.subr.mxu0 0.0
    %3310 = vmatpush1.msra.mxu0 0.0
    %3311 = vmatprep.subr.mxu0 0.0
    %3312 = vmatpush1.msra.mxu0 0.0
    %3313 = vmatprep.subr.mxu0 0.0
    %3314 = vmatpush1.msra.mxu0 0.0
    %3315 = vmatprep.subr.mxu0 0.0
    %3316 = vmatpush1.msra.mxu0 0.0
    %3317 = vmatprep.subr.mxu0 0.0
    %3318 = vmatpush1.msra.mxu0 0.0
    %3319 = vmatprep.subr.mxu0 0.0
    %3320 = vmatpush1.msra.mxu0 0.0
    %3321 = vmatprep.subr.mxu0 0.0
    %3322 = vmatpush1.msra.mxu0 0.0
    %3323 = vmatprep.subr.mxu0 0.0
    %3324 = vmatpush1.msra.mxu0 0.0
    %3325 = vmatprep.subr.mxu0 0.0
    %3326 = vmatpush1.msra.mxu0 0.0
    %3327 = vmatprep.subr.mxu0 0.0
    %3328 = vmatpush1.msra.mxu0 0.0
    %3329 = vmatprep.subr.mxu0 0.0
    %3330 = vmatpush1.msra.mxu0 0.0
    %3331 = vmatprep.subr.mxu0 0.0
    %3332 = vmatpush1.msra.mxu0 0.0
    %3333 = vmatprep.subr.mxu0 0.0
    %3334 = vmatpush1.msra.mxu0 0.0
    %3335 = vmatprep.mubr.f32.mxu0 0.0
    %3336 = vmatmul.mubr.f32.gmra.mrb[0].mxu0 %v3269
    %v3337 = vpop.f32.mrb[0].mxu0
    %v3338 = vadd.f32 0.0, %v3337
    %v3339 = vpop.f32.mrb[0].mxu0
    %3340 = vdwg.mxu0
    %3343 = vrot.lane.b32.xlu0 %v3262, 16
    %v3344 = vpop.permute.xlu0 %3343
    %3345 = vrot.lane.b32.xlu0 %v3338, 16
    %v3346 = vpop.permute.xlu0 %3345
    %3349 = vst.msk [vmem:[#allocation2] sm:$0xff] %vm1506, %v3344
    %3350 = vst.msk [vmem:[#allocation2 + $0x8] sm:$0xff] %vm1506, %v3346
    %3351 = vrot.lane.b32.xlu0 %v2321, 104
    %v3352 = vpop.permute.xlu0 %3351
    %3353 = vrot.lane.b32.xlu0 %v2321, 72
    %v3354 = vpop.permute.xlu0 %3353
    %v3355 = vsel %vm487, %v3352, 0
    %v3357 = vsel %vm487, %v3354, 0
    %3359 = vmatprep.subr.mxu0 0.0
    %3360 = vmatpush1.xpose.msra.mxu0 %v3357
    %3361 = vmatprep.subr.mxu0 0.0
    %3362 = vmatpush1.xpose.msra.mxu0 0.0
    %3363 = vmatprep.subr.mxu0 0.0
    %3364 = vmatpush1.xpose.msra.mxu0 0.0
    %3365 = vmatprep.subr.mxu0 0.0
    %3366 = vmatpush1.xpose.msra.mxu0 0.0
    %3367 = vmatprep.subr.mxu0 0.0
    %3368 = vmatpush1.xpose.msra.mxu0 0.0
    %3369 = vmatprep.subr.mxu0 0.0
    %3370 = vmatpush1.xpose.msra.mxu0 0.0
    %3371 = vmatprep.subr.mxu0 0.0
    %3372 = vmatpush1.xpose.msra.mxu0 0.0
    %3373 = vmatprep.subr.mxu0 0.0
    %3374 = vmatpush1.xpose.msra.mxu0 0.0
    %3375 = vmatprep.subr.mxu0 0.0
    %3376 = vmatpush1.xpose.msra.mxu0 0.0
    %3377 = vmatprep.subr.mxu0 0.0
    %3378 = vmatpush1.xpose.msra.mxu0 0.0
    %3379 = vmatprep.subr.mxu0 0.0
    %3380 = vmatpush1.xpose.msra.mxu0 0.0
    %3381 = vmatprep.subr.mxu0 0.0
    %3382 = vmatpush1.xpose.msra.mxu0 0.0
    %3383 = vmatprep.subr.mxu0 0.0
    %3384 = vmatpush1.xpose.msra.mxu0 0.0
    %3385 = vmatprep.subr.mxu0 0.0
    %3386 = vmatpush1.xpose.msra.mxu0 0.0
    %3387 = vmatprep.subr.mxu0 0.0
    %3388 = vmatpush1.xpose.msra.mxu0 0.0
    %3389 = vmatprep.subr.mxu0 0.0
    %3390 = vmatpush1.xpose.msra.mxu0 0.0
    %3391 = vmatprep.subr.mxu0 0.0
    %3392 = vmatpush1.xpose.msra.mxu0 0.0
    %3393 = vmatprep.subr.mxu0 0.0
    %3394 = vmatpush1.xpose.msra.mxu0 0.0
    %3395 = vmatprep.subr.mxu0 0.0
    %3396 = vmatpush1.xpose.msra.mxu0 0.0
    %3397 = vmatprep.subr.mxu0 0.0
    %3398 = vmatpush1.xpose.msra.mxu0 0.0
    %3399 = vmatprep.subr.mxu0 0.0
    %3400 = vmatpush1.xpose.msra.mxu0 0.0
    %3401 = vmatprep.subr.mxu0 0.0
    %3402 = vmatpush1.xpose.msra.mxu0 0.0
    %3403 = vmatprep.subr.mxu0 0.0
    %3404 = vmatpush1.xpose.msra.mxu0 0.0
    %3405 = vmatprep.subr.mxu0 0.0
    %3406 = vmatpush1.xpose.msra.mxu0 0.0
    %3407 = vmatprep.subr.mxu0 0.0
    %3408 = vmatpush1.xpose.msra.mxu0 0.0
    %3409 = vmatprep.subr.mxu0 0.0
    %3410 = vmatpush1.xpose.msra.mxu0 0.0
    %3411 = vmatprep.subr.mxu0 0.0
    %3412 = vmatpush1.xpose.msra.mxu0 0.0
    %3413 = vmatprep.subr.mxu0 0.0
    %3414 = vmatpush1.xpose.msra.mxu0 0.0
    %3415 = vmatprep.subr.mxu0 0.0
    %3416 = vmatpush1.xpose.msra.mxu0 0.0
    %3417 = vmatprep.subr.mxu0 0.0
    %3418 = vmatpush1.xpose.msra.mxu0 0.0
    %3419 = vmatprep.subr.mxu0 0.0
    %3420 = vmatpush1.xpose.msra.mxu0 0.0
    %3421 = vmatprep.subr.mxu0 0.0
    %3422 = vmatpush1.xpose.msra.mxu0 0.0
    %3423 = vmatprep.mubr.f32.mxu0 0.0
    %3424 = vmatmul.mubr.f32.gmra.mrb[0].mxu0 %v3355
    %v3425 = vpop.f32.mrb[0].mxu0
    %v3426 = vadd.f32 0.0, %v3425
    %v3427 = vpop.f32.mrb[0].mxu0
    %3428 = vdwg.mxu0
    %3429 = vrot.lane.b32.xlu0 %v2326, 104
    %v3430 = vpop.permute.xlu0 %3429
    %3431 = vrot.lane.b32.xlu0 %v2326, 72
    %v3432 = vpop.permute.xlu0 %3431
    %v3433 = vsel %vm487, %v3430, 0
    %v3435 = vsel %vm487, %v3432, 0
    %3437 = vmatprep.subr.mxu0 0.0
    %3438 = vmatpush1.xpose.msra.mxu0 %v3435
    %3439 = vmatprep.subr.mxu0 0.0
    %3440 = vmatpush1.xpose.msra.mxu0 0.0
    %3441 = vmatprep.subr.mxu0 0.0
    %3442 = vmatpush1.xpose.msra.mxu0 0.0
    %3443 = vmatprep.subr.mxu0 0.0
    %3444 = vmatpush1.xpose.msra.mxu0 0.0
    %3445 = vmatprep.subr.mxu0 0.0
    %3446 = vmatpush1.xpose.msra.mxu0 0.0
    %3447 = vmatprep.subr.mxu0 0.0
    %3448 = vmatpush1.xpose.msra.mxu0 0.0
    %3449 = vmatprep.subr.mxu0 0.0
    %3450 = vmatpush1.xpose.msra.mxu0 0.0
    %3451 = vmatprep.subr.mxu0 0.0
    %3452 = vmatpush1.xpose.msra.mxu0 0.0
    %3453 = vmatprep.subr.mxu0 0.0
    %3454 = vmatpush1.xpose.msra.mxu0 0.0
    %3455 = vmatprep.subr.mxu0 0.0
    %3456 = vmatpush1.xpose.msra.mxu0 0.0
    %3457 = vmatprep.subr.mxu0 0.0
    %3458 = vmatpush1.xpose.msra.mxu0 0.0
    %3459 = vmatprep.subr.mxu0 0.0
    %3460 = vmatpush1.xpose.msra.mxu0 0.0
    %3461 = vmatprep.subr.mxu0 0.0
    %3462 = vmatpush1.xpose.msra.mxu0 0.0
    %3463 = vmatprep.subr.mxu0 0.0
    %3464 = vmatpush1.xpose.msra.mxu0 0.0
    %3465 = vmatprep.subr.mxu0 0.0
    %3466 = vmatpush1.xpose.msra.mxu0 0.0
    %3467 = vmatprep.subr.mxu0 0.0
    %3468 = vmatpush1.xpose.msra.mxu0 0.0
    %3469 = vmatprep.subr.mxu0 0.0
    %3470 = vmatpush1.xpose.msra.mxu0 0.0
    %3471 = vmatprep.subr.mxu0 0.0
    %3472 = vmatpush1.xpose.msra.mxu0 0.0
    %3473 = vmatprep.subr.mxu0 0.0
    %3474 = vmatpush1.xpose.msra.mxu0 0.0
    %3475 = vmatprep.subr.mxu0 0.0
    %3476 = vmatpush1.xpose.msra.mxu0 0.0
    %3477 = vmatprep.subr.mxu0 0.0
    %3478 = vmatpush1.xpose.msra.mxu0 0.0
    %3479 = vmatprep.subr.mxu0 0.0
    %3480 = vmatpush1.xpose.msra.mxu0 0.0
    %3481 = vmatprep.subr.mxu0 0.0
    %3482 = vmatpush1.xpose.msra.mxu0 0.0
    %3483 = vmatprep.subr.mxu0 0.0
    %3484 = vmatpush1.xpose.msra.mxu0 0.0
    %3485 = vmatprep.subr.mxu0 0.0
    %3486 = vmatpush1.xpose.msra.mxu0 0.0
    %3487 = vmatprep.subr.mxu0 0.0
    %3488 = vmatpush1.xpose.msra.mxu0 0.0
    %3489 = vmatprep.subr.mxu0 0.0
    %3490 = vmatpush1.xpose.msra.mxu0 0.0
    %3491 = vmatprep.subr.mxu0 0.0
    %3492 = vmatpush1.xpose.msra.mxu0 0.0
    %3493 = vmatprep.subr.mxu0 0.0
    %3494 = vmatpush1.xpose.msra.mxu0 0.0
    %3495 = vmatprep.subr.mxu0 0.0
    %3496 = vmatpush1.xpose.msra.mxu0 0.0
    %3497 = vmatprep.subr.mxu0 0.0
    %3498 = vmatpush1.xpose.msra.mxu0 0.0
    %3499 = vmatprep.subr.mxu0 0.0
    %3500 = vmatpush1.xpose.msra.mxu0 0.0
    %3501 = vmatprep.mubr.f32.mxu0 0.0
    %3502 = vmatmul.mubr.f32.gmra.mrb[0].mxu0 %v3433
    %v3503 = vpop.f32.mrb[0].mxu0
    %v3504 = vadd.f32 0.0, %v3503
    %v3505 = vpop.f32.mrb[0].mxu0
    %3506 = vdwg.mxu0
    %v3507 = vmul.f32 %v3426, 0.35355338
    %v3508 = vmul.f32 %v3504, 0.35355338
    %v3509 = vadd.f32 %v3507, %v354
    %v3510 = vadd.f32 %v3508, %v354
    %v3511 = vsel %vm487, %v3509, -inf
    %3512 = vmax.xlane.f32.xlu0 %v3511
    %v3513 = vpop.xlane.xlu0 %3512
    %v3514 = vsel %vm487, %v3510, -inf
    %3515 = vmax.xlane.f32.xlu0 %v3514
    %v3516 = vpop.xlane.xlu0 %3515
    %v3517 = vsub.f32 %v3509, %v3513
    %v3518 = vsub.f32 %v3510, %v3516
    %v3519 = vmul.f32 %v3517, 1.442695
    %v3520 = vpow.pop %v3519
    %v3521 = vmul.f32 %v3518, 1.442695
    %v3522 = vpow.pop %v3521
    %v3523 = vsel %vm487, %v3520, 0.0
    %3524 = vadd.xlane.f32.xlu0 %v3523
    %v3525 = vpop.xlane.xlu0 %3524
    %v3526 = vsel %vm487, %v3522, 0.0
    %3527 = vadd.xlane.f32.xlu0 %v3526
    %v3528 = vpop.xlane.xlu0 %3527
    %v3529 = vrcp.pop %v3525
    %v3530 = vmul.f32 %v3520, %v3529
    %v3531 = vrcp.pop %v3528
    %v3532 = vmul.f32 %v3522, %v3531
    %3533 = vrot.lane.b32.xlu0 %v2321, 40
    %v3534 = vpop.permute.xlu0 %3533
    %v3537 = vsel %vm487, %v3530, 0
    %3539 = vmatprep.subr.mxu0 0.0
    %3540 = vmatpush1.msra.mxu0 %v3534
    %3541 = vmatprep.subr.mxu0 0.0
    %3542 = vmatpush1.msra.mxu0 0.0
    %3543 = vmatprep.subr.mxu0 0.0
    %3544 = vmatpush1.msra.mxu0 0.0
    %3545 = vmatprep.subr.mxu0 0.0
    %3546 = vmatpush1.msra.mxu0 0.0
    %3547 = vmatprep.subr.mxu0 0.0
    %3548 = vmatpush1.msra.mxu0 0.0
    %3549 = vmatprep.subr.mxu0 0.0
    %3550 = vmatpush1.msra.mxu0 0.0
    %3551 = vmatprep.subr.mxu0 0.0
    %3552 = vmatpush1.msra.mxu0 0.0
    %3553 = vmatprep.subr.mxu0 0.0
    %3554 = vmatpush1.msra.mxu0 0.0
    %3555 = vmatprep.subr.mxu0 0.0
    %3556 = vmatpush1.msra.mxu0 0.0
    %3557 = vmatprep.subr.mxu0 0.0
    %3558 = vmatpush1.msra.mxu0 0.0
    %3559 = vmatprep.subr.mxu0 0.0
    %3560 = vmatpush1.msra.mxu0 0.0
    %3561 = vmatprep.subr.mxu0 0.0
    %3562 = vmatpush1.msra.mxu0 0.0
    %3563 = vmatprep.subr.mxu0 0.0
    %3564 = vmatpush1.msra.mxu0 0.0
    %3565 = vmatprep.subr.mxu0 0.0
    %3566 = vmatpush1.msra.mxu0 0.0
    %3567 = vmatprep.subr.mxu0 0.0
    %3568 = vmatpush1.msra.mxu0 0.0
    %3569 = vmatprep.subr.mxu0 0.0
    %3570 = vmatpush1.msra.mxu0 0.0
    %3571 = vmatprep.subr.mxu0 0.0
    %3572 = vmatpush1.msra.mxu0 0.0
    %3573 = vmatprep.subr.mxu0 0.0
    %3574 = vmatpush1.msra.mxu0 0.0
    %3575 = vmatprep.subr.mxu0 0.0
    %3576 = vmatpush1.msra.mxu0 0.0
    %3577 = vmatprep.subr.mxu0 0.0
    %3578 = vmatpush1.msra.mxu0 0.0
    %3579 = vmatprep.subr.mxu0 0.0
    %3580 = vmatpush1.msra.mxu0 0.0
    %3581 = vmatprep.subr.mxu0 0.0
    %3582 = vmatpush1.msra.mxu0 0.0
    %3583 = vmatprep.subr.mxu0 0.0
    %3584 = vmatpush1.msra.mxu0 0.0
    %3585 = vmatprep.subr.mxu0 0.0
    %3586 = vmatpush1.msra.mxu0 0.0
    %3587 = vmatprep.subr.mxu0 0.0
    %3588 = vmatpush1.msra.mxu0 0.0
    %3589 = vmatprep.subr.mxu0 0.0
    %3590 = vmatpush1.msra.mxu0 0.0
    %3591 = vmatprep.subr.mxu0 0.0
    %3592 = vmatpush1.msra.mxu0 0.0
    %3593 = vmatprep.subr.mxu0 0.0
    %3594 = vmatpush1.msra.mxu0 0.0
    %3595 = vmatprep.subr.mxu0 0.0
    %3596 = vmatpush1.msra.mxu0 0.0
    %3597 = vmatprep.subr.mxu0 0.0
    %3598 = vmatpush1.msra.mxu0 0.0
    %3599 = vmatprep.subr.mxu0 0.0
    %3600 = vmatpush1.msra.mxu0 0.0
    %3601 = vmatprep.subr.mxu0 0.0
    %3602 = vmatpush1.msra.mxu0 0.0
    %3603 = vmatprep.mubr.f32.mxu0 0.0
    %3604 = vmatmul.mubr.f32.gmra.mrb[0].mxu0 %v3537
    %v3605 = vpop.f32.mrb[0].mxu0
    %v3606 = vadd.f32 0.0, %v3605
    %v3607 = vpop.f32.mrb[0].mxu0
    %3608 = vdwg.mxu0
    %3609 = vrot.lane.b32.xlu0 %v2326, 40
    %v3610 = vpop.permute.xlu0 %3609
    %v3613 = vsel %vm487, %v3532, 0
    %3615 = vmatprep.subr.mxu0 0.0
    %3616 = vmatpush1.msra.mxu0 %v3610
    %3617 = vmatprep.subr.mxu0 0.0
    %3618 = vmatpush1.msra.mxu0 0.0
    %3619 = vmatprep.subr.mxu0 0.0
    %3620 = vmatpush1.msra.mxu0 0.0
    %3621 = vmatprep.subr.mxu0 0.0
    %3622 = vmatpush1.msra.mxu0 0.0
    %3623 = vmatprep.subr.mxu0 0.0
    %3624 = vmatpush1.msra.mxu0 0.0
    %3625 = vmatprep.subr.mxu0 0.0
    %3626 = vmatpush1.msra.mxu0 0.0
    %3627 = vmatprep.subr.mxu0 0.0
    %3628 = vmatpush1.msra.mxu0 0.0
    %3629 = vmatprep.subr.mxu0 0.0
    %3630 = vmatpush1.msra.mxu0 0.0
    %3631 = vmatprep.subr.mxu0 0.0
    %3632 = vmatpush1.msra.mxu0 0.0
    %3633 = vmatprep.subr.mxu0 0.0
    %3634 = vmatpush1.msra.mxu0 0.0
    %3635 = vmatprep.subr.mxu0 0.0
    %3636 = vmatpush1.msra.mxu0 0.0
    %3637 = vmatprep.subr.mxu0 0.0
    %3638 = vmatpush1.msra.mxu0 0.0
    %3639 = vmatprep.subr.mxu0 0.0
    %3640 = vmatpush1.msra.mxu0 0.0
    %3641 = vmatprep.subr.mxu0 0.0
    %3642 = vmatpush1.msra.mxu0 0.0
    %3643 = vmatprep.subr.mxu0 0.0
    %3644 = vmatpush1.msra.mxu0 0.0
    %3645 = vmatprep.subr.mxu0 0.0
    %3646 = vmatpush1.msra.mxu0 0.0
    %3647 = vmatprep.subr.mxu0 0.0
    %3648 = vmatpush1.msra.mxu0 0.0
    %3649 = vmatprep.subr.mxu0 0.0
    %3650 = vmatpush1.msra.mxu0 0.0
    %3651 = vmatprep.subr.mxu0 0.0
    %3652 = vmatpush1.msra.mxu0 0.0
    %3653 = vmatprep.subr.mxu0 0.0
    %3654 = vmatpush1.msra.mxu0 0.0
    %3655 = vmatprep.subr.mxu0 0.0
    %3656 = vmatpush1.msra.mxu0 0.0
    %3657 = vmatprep.subr.mxu0 0.0
    %3658 = vmatpush1.msra.mxu0 0.0
    %3659 = vmatprep.subr.mxu0 0.0
    %3660 = vmatpush1.msra.mxu0 0.0
    %3661 = vmatprep.subr.mxu0 0.0
    %3662 = vmatpush1.msra.mxu0 0.0
    %3663 = vmatprep.subr.mxu0 0.0
    %3664 = vmatpush1.msra.mxu0 0.0
    %3665 = vmatprep.subr.mxu0 0.0
    %3666 = vmatpush1.msra.mxu0 0.0
    %3667 = vmatprep.subr.mxu0 0.0
    %3668 = vmatpush1.msra.mxu0 0.0
    %3669 = vmatprep.subr.mxu0 0.0
    %3670 = vmatpush1.msra.mxu0 0.0
    %3671 = vmatprep.subr.mxu0 0.0
    %3672 = vmatpush1.msra.mxu0 0.0
    %3673 = vmatprep.subr.mxu0 0.0
    %3674 = vmatpush1.msra.mxu0 0.0
    %3675 = vmatprep.subr.mxu0 0.0
    %3676 = vmatpush1.msra.mxu0 0.0
    %3677 = vmatprep.subr.mxu0 0.0
    %3678 = vmatpush1.msra.mxu0 0.0
    %3679 = vmatprep.mubr.f32.mxu0 0.0
    %3680 = vmatmul.mubr.f32.gmra.mrb[0].mxu0 %v3613
    %v3681 = vpop.f32.mrb[0].mxu0
    %v3682 = vadd.f32 0.0, %v3681
    %v3683 = vpop.f32.mrb[0].mxu0
    %3684 = vdwg.mxu0
    %3687 = vrot.lane.b32.xlu0 %v3606, 24
    %v3688 = vpop.permute.xlu0 %3687
    %3689 = vrot.lane.b32.xlu0 %v3682, 24
    %v3690 = vpop.permute.xlu0 %3689
    %3693 = vst.msk [vmem:[#allocation2] sm:$0xff] %vm1851, %v3688
    %3694 = vst.msk [vmem:[#allocation2 + $0x8] sm:$0xff] %vm1851, %v3690
    %v3695 = vld [vmem:[#allocation2] sm:$0xff]
    %v3696 = vld [vmem:[#allocation2 + $0x8] sm:$0xff]
    %3701 = vrot.lane.b32.xlu0 %v2202, 32
    %v3702 = vpop.permute.xlu0 %3701
    %3703 = vrot.lane.b32.xlu0 %v2204, 32
    %v3704 = vpop.permute.xlu0 %3703
    %3705 = vrot.lane.b32.xlu0 %v2206, 32
    %v3706 = vpop.permute.xlu0 %3705
    %3707 = vrot.lane.b32.xlu0 %v2208, 32
    %v3708 = vpop.permute.xlu0 %3707
    %v3714 = vsel %vm336, %v3695, 0
    %v3717 = vsel %vm336, %v3696, 0
    %3719 = vmatprep.subr.mxu0 0.0
    %3720 = vmatpush1.msra.mxu0 %v3702
    %3721 = vmatprep.subr.mxu0 0.0
    %3722 = vmatpush1.msra.mxu0 %v3704
    %3723 = vmatprep.subr.mxu0 0.0
    %3724 = vmatpush1.msra.mxu0 %v3706
    %3725 = vmatprep.subr.mxu0 0.0
    %3726 = vmatpush1.msra.mxu0 %v3708
    %3727 = vmatprep.subr.mxu0 0.0
    %3728 = vmatpush1.msra.mxu0 0.0
    %3729 = vmatprep.subr.mxu0 0.0
    %3730 = vmatpush1.msra.mxu0 0.0
    %3731 = vmatprep.subr.mxu0 0.0
    %3732 = vmatpush1.msra.mxu0 0.0
    %3733 = vmatprep.subr.mxu0 0.0
    %3734 = vmatpush1.msra.mxu0 0.0
    %3735 = vmatprep.subr.mxu0 0.0
    %3736 = vmatpush1.msra.mxu0 0.0
    %3737 = vmatprep.subr.mxu0 0.0
    %3738 = vmatpush1.msra.mxu0 0.0
    %3739 = vmatprep.subr.mxu0 0.0
    %3740 = vmatpush1.msra.mxu0 0.0
    %3741 = vmatprep.subr.mxu0 0.0
    %3742 = vmatpush1.msra.mxu0 0.0
    %3743 = vmatprep.subr.mxu0 0.0
    %3744 = vmatpush1.msra.mxu0 0.0
    %3745 = vmatprep.subr.mxu0 0.0
    %3746 = vmatpush1.msra.mxu0 0.0
    %3747 = vmatprep.subr.mxu0 0.0
    %3748 = vmatpush1.msra.mxu0 0.0
    %3749 = vmatprep.subr.mxu0 0.0
    %3750 = vmatpush1.msra.mxu0 0.0
    %3751 = vmatprep.subr.mxu0 0.0
    %3752 = vmatpush1.msra.mxu0 0.0
    %3753 = vmatprep.subr.mxu0 0.0
    %3754 = vmatpush1.msra.mxu0 0.0
    %3755 = vmatprep.subr.mxu0 0.0
    %3756 = vmatpush1.msra.mxu0 0.0
    %3757 = vmatprep.subr.mxu0 0.0
    %3758 = vmatpush1.msra.mxu0 0.0
    %3759 = vmatprep.subr.mxu0 0.0
    %3760 = vmatpush1.msra.mxu0 0.0
    %3761 = vmatprep.subr.mxu0 0.0
    %3762 = vmatpush1.msra.mxu0 0.0
    %3763 = vmatprep.subr.mxu0 0.0
    %3764 = vmatpush1.msra.mxu0 0.0
    %3765 = vmatprep.subr.mxu0 0.0
    %3766 = vmatpush1.msra.mxu0 0.0
    %3767 = vmatprep.subr.mxu0 0.0
    %3768 = vmatpush1.msra.mxu0 0.0
    %3769 = vmatprep.subr.mxu0 0.0
    %3770 = vmatpush1.msra.mxu0 0.0
    %3771 = vmatprep.subr.mxu0 0.0
    %3772 = vmatpush1.msra.mxu0 0.0
    %3773 = vmatprep.subr.mxu0 0.0
    %3774 = vmatpush1.msra.mxu0 0.0
    %3775 = vmatprep.subr.mxu0 0.0
    %3776 = vmatpush1.msra.mxu0 0.0
    %3777 = vmatprep.subr.mxu0 0.0
    %3778 = vmatpush1.msra.mxu0 0.0
    %3779 = vmatprep.subr.mxu0 0.0
    %3780 = vmatpush1.msra.mxu0 0.0
    %3781 = vmatprep.subr.mxu0 0.0
    %3782 = vmatpush1.msra.mxu0 0.0
    %3783 = vmatprep.mubr.f32.mxu0 0.0
    %3784 = vmatmul.mubr.f32.gmra.mrb[0].mxu0 %v3714
    %v3785 = vpop.f32.mrb[0].mxu0
    %v3786 = vadd.f32 0.0, %v3785
    %v3787 = vpop.f32.mrb[0].mxu0
    %3788 = vmatprep.mubr.f32.mxu0 0.0
    %3789 = vmatmul.mubr.f32.gmra.mrb[0].mxu0 %v3717
    %v3790 = vpop.f32.mrb[0].mxu0
    %v3791 = vadd.f32 0.0, %v3790
    %v3792 = vpop.f32.mrb[0].mxu0
    %3793 = vdwg.mxu0
    %v3794 = vadd.f32 %v2197, %v3786
    %v3795 = vadd.f32 %v2198, %v3791
    %v3796 = vlaneseq
    %v3797 = vshrl.u32 %v3796, 7
    %v3798 = vsub.s32 2, %v3797
    %v3799 = vrot.slane %v2200, %v3798
    %v3800 = vadd.f32 %v3794, %v3799
    %v3801 = vadd.f32 %v3795, %v3799
    %v3802 = vsel %vm336, %v3800, 0.0
    %3803 = vadd.xlane.f32.xlu0 %v3802
    %v3804 = vpop.xlane.xlu0 %3803
    %v3805 = vsel %vm336, %v3801, 0.0
    %3806 = vadd.xlane.f32.xlu0 %v3805
    %v3807 = vpop.xlane.xlu0 %3806
    %v3808 = vmul.f32 %v3804, %v370
    %v3809 = vmul.f32 %v3807, %v370
    %v3810 = vsub.f32 %v3800, %v3808
    %v3811 = vsub.f32 %v3801, %v3809
    %v3812 = vmul.f32 %v3810, %v3810
    %v3813 = vmul.f32 %v3811, %v3811
    %v3814 = vsel %vm336, %v3812, 0.0
    %3815 = vadd.xlane.f32.xlu0 %v3814
    %v3816 = vpop.xlane.xlu0 %3815
    %v3817 = vsel %vm336, %v3813, 0.0
    %3818 = vadd.xlane.f32.xlu0 %v3817
    %v3819 = vpop.xlane.xlu0 %3818
    %v3820 = vmul.f32 %v3816, %v370
    %v3821 = vmul.f32 %v3819, %v370
    %v3822 = vadd.f32 %v3820, 1e-05
    %v3823 = vadd.f32 %v3821, 1e-05
    %v3824 = vrsqrt.pop %v3822
    %v3825 = vrsqrt.pop %v3823
    %v3826 = vmul.f32 %v3810, %v3824
    %v3827 = vmul.f32 %v3811, %v3825
    %v3828 = vlaneseq
    %v3829 = vshrl.u32 %v3828, 7
    %v3830 = vsub.s32 3, %v3829
    %v3831 = vrot.slane %v2200, %v3830
    %v3832 = vmul.f32 %v3826, %v3831
    %v3833 = vmul.f32 %v3827, %v3831
    %v3834 = vlaneseq
    %v3835 = vshrl.u32 %v3834, 7
    %v3836 = vsub.s32 4, %v3835
    %v3837 = vrot.slane %v2200, %v3836
    %v3838 = vadd.f32 %v3832, %v3837
    %v3839 = vadd.f32 %v3833, %v3837
    %v3840 = vlaneseq
    %v3841 = vshrl.u32 %v3840, 7
    %v3842 = vsub.s32 6, %v3841
    %v3843 = vrot.slane %v2200, %v3842
    %v3845 = vsel %vm336, %v3838, 0
    %v3848 = vsel %vm336, %v3839, 0
    %3850 = vmatprep.subr.mxu0 0.0
    %3851 = vmatpush1.msra.mxu0 %v2203
    %3852 = vmatprep.subr.mxu0 0.0
    %3853 = vmatpush1.msra.mxu0 %v2205
    %3854 = vmatprep.subr.mxu0 0.0
    %3855 = vmatpush1.msra.mxu0 %v2207
    %3856 = vmatprep.subr.mxu0 0.0
    %3857 = vmatpush1.msra.mxu0 %v2209
    %3858 = vmatprep.subr.mxu0 0.0
    %3859 = vmatpush1.msra.mxu0 0.0
    %3860 = vmatprep.subr.mxu0 0.0
    %3861 = vmatpush1.msra.mxu0 0.0
    %3862 = vmatprep.subr.mxu0 0.0
    %3863 = vmatpush1.msra.mxu0 0.0
    %3864 = vmatprep.subr.mxu0 0.0
    %3865 = vmatpush1.msra.mxu0 0.0
    %3866 = vmatprep.subr.mxu0 0.0
    %3867 = vmatpush1.msra.mxu0 0.0
    %3868 = vmatprep.subr.mxu0 0.0
    %3869 = vmatpush1.msra.mxu0 0.0
    %3870 = vmatprep.subr.mxu0 0.0
    %3871 = vmatpush1.msra.mxu0 0.0
    %3872 = vmatprep.subr.mxu0 0.0
    %3873 = vmatpush1.msra.mxu0 0.0
    %3874 = vmatprep.subr.mxu0 0.0
    %3875 = vmatpush1.msra.mxu0 0.0
    %3876 = vmatprep.subr.mxu0 0.0
    %3877 = vmatpush1.msra.mxu0 0.0
    %3878 = vmatprep.subr.mxu0 0.0
    %3879 = vmatpush1.msra.mxu0 0.0
    %3880 = vmatprep.subr.mxu0 0.0
    %3881 = vmatpush1.msra.mxu0 0.0
    %3882 = vmatprep.subr.mxu0 0.0
    %3883 = vmatpush1.msra.mxu0 0.0
    %3884 = vmatprep.subr.mxu0 0.0
    %3885 = vmatpush1.msra.mxu0 0.0
    %3886 = vmatprep.subr.mxu0 0.0
    %3887 = vmatpush1.msra.mxu0 0.0
    %3888 = vmatprep.subr.mxu0 0.0
    %3889 = vmatpush1.msra.mxu0 0.0
    %3890 = vmatprep.subr.mxu0 0.0
    %3891 = vmatpush1.msra.mxu0 0.0
    %3892 = vmatprep.subr.mxu0 0.0
    %3893 = vmatpush1.msra.mxu0 0.0
    %3894 = vmatprep.subr.mxu0 0.0
    %3895 = vmatpush1.msra.mxu0 0.0
    %3896 = vmatprep.subr.mxu0 0.0
    %3897 = vmatpush1.msra.mxu0 0.0
    %3898 = vmatprep.subr.mxu0 0.0
    %3899 = vmatpush1.msra.mxu0 0.0
    %3900 = vmatprep.subr.mxu0 0.0
    %3901 = vmatpush1.msra.mxu0 0.0
    %3902 = vmatprep.subr.mxu0 0.0
    %3903 = vmatpush1.msra.mxu0 0.0
    %3904 = vmatprep.subr.mxu0 0.0
    %3905 = vmatpush1.msra.mxu0 0.0
    %3906 = vmatprep.subr.mxu0 0.0
    %3907 = vmatpush1.msra.mxu0 0.0
    %3908 = vmatprep.subr.mxu0 0.0
    %3909 = vmatpush1.msra.mxu0 0.0
    %3910 = vmatprep.subr.mxu0 0.0
    %3911 = vmatpush1.msra.mxu0 0.0
    %3912 = vmatprep.subr.mxu0 0.0
    %3913 = vmatpush1.msra.mxu0 0.0
    %3914 = vmatprep.mubr.f32.mxu0 0.0
    %3915 = vmatmul.mubr.f32.gmra.mrb[0].mxu0 %v3845
    %v3916 = vpop.f32.mrb[0].mxu0
    %v3917 = vadd.f32 %v3843, %v3916
    %v3918 = vpop.f32.mrb[0].mxu0
    %3919 = vmatprep.mubr.f32.mxu0 0.0
    %3920 = vmatmul.mubr.f32.gmra.mrb[0].mxu0 %v3848
    %v3921 = vpop.f32.mrb[0].mxu0
    %v3922 = vadd.f32 %v3843, %v3921
    %v3923 = vpop.f32.mrb[0].mxu0
    %3924 = vdwg.mxu0
    %v3925 = vmul.f32 %v3917, 0.5
    %v3926 = vmul.f32 %v3922, 0.5
    %v3927 = vmul.f32 %v3917, 0.044715
    %v3928 = vmul.f32 %v3922, 0.044715
    %v3929 = vmul.f32 %v3927, %v3917
    %v3930 = vmul.f32 %v3928, %v3922
    %v3931 = vmul.f32 %v3929, %v3917
    %v3932 = vmul.f32 %v3930, %v3922
    %v3933 = vadd.f32 %v3917, %v3931
    %v3934 = vadd.f32 %v3922, %v3932
    %v3935 = vmul.f32 %v3933, 0.7978846
    %v3936 = vmul.f32 %v3934, 0.7978846
    %v3937 = vtanh.pop %v3935
    %v3938 = vtanh.pop %v3936
    %v3939 = vadd.f32 %v3937, 1.0
    %v3940 = vadd.f32 %v3938, 1.0
    %v3941 = vmul.f32 %v3925, %v3939
    %v3942 = vmul.f32 %v3926, %v3940
    %s3943 = scalar_lea.vmem %s4, 128
    %v3944 = vld [vmem:[%s3943] sm:$0xff]
    %v3945 = vld [vmem:[%s3943 + $0x8] sm:$0xff]
    %v3946 = vld [vmem:[%s3943 + $0x10] sm:$0xff]
    %v3947 = vld [vmem:[%s3943 + $0x18] sm:$0xff]
    %v3948 = vld [vmem:[%s3943 + $0x20] sm:$0xff]
    %v3949 = vld [vmem:[%s3943 + $0x28] sm:$0xff]
    %v3950 = vld [vmem:[%s3943 + $0x30] sm:$0xff]
    %v3951 = vld [vmem:[%s3943 + $0x38] sm:$0xff]
    %v3952 = vld [vmem:[%s3943 + $0x40] sm:$0xff]
    %v3953 = vld [vmem:[%s3943 + $0x48] sm:$0xff]
    %v3954 = vld [vmem:[%s3943 + $0x50] sm:$0xff]
    %v3955 = vld [vmem:[%s3943 + $0x58] sm:$0xff]
    %v3956 = vld [vmem:[%s3943 + $0x60] sm:$0xff]
    %v3957 = vld [vmem:[%s3943 + $0x68] sm:$0xff]
    %v3958 = vld [vmem:[%s3943 + $0x70] sm:$0xff]
    %v3959 = vld [vmem:[%s3943 + $0x78] sm:$0xff]
    %v3960 = vlaneseq
    %v3961 = vshrl.u32 %v3960, 7
    %v3962 = vsub.s32 5, %v3961
    %v3963 = vrot.slane %v2200, %v3962
    %3964 = vmatprep.subr.mxu0 0.0
    %3965 = vmatpush1.msra.mxu0 %v3944
    %3966 = vmatprep.subr.mxu0 0.0
    %3967 = vmatpush1.msra.mxu0 %v3945
    %3968 = vmatprep.subr.mxu0 0.0
    %3969 = vmatpush1.msra.mxu0 %v3946
    %3970 = vmatprep.subr.mxu0 0.0
    %3971 = vmatpush1.msra.mxu0 %v3947
    %3972 = vmatprep.subr.mxu0 0.0
    %3973 = vmatpush1.msra.mxu0 %v3948
    %3974 = vmatprep.subr.mxu0 0.0
    %3975 = vmatpush1.msra.mxu0 %v3949
    %3976 = vmatprep.subr.mxu0 0.0
    %3977 = vmatpush1.msra.mxu0 %v3950
    %3978 = vmatprep.subr.mxu0 0.0
    %3979 = vmatpush1.msra.mxu0 %v3951
    %3980 = vmatprep.subr.mxu0 0.0
    %3981 = vmatpush1.msra.mxu0 %v3952
    %3982 = vmatprep.subr.mxu0 0.0
    %3983 = vmatpush1.msra.mxu0 %v3953
    %3984 = vmatprep.subr.mxu0 0.0
    %3985 = vmatpush1.msra.mxu0 %v3954
    %3986 = vmatprep.subr.mxu0 0.0
    %3987 = vmatpush1.msra.mxu0 %v3955
    %3988 = vmatprep.subr.mxu0 0.0
    %3989 = vmatpush1.msra.mxu0 %v3956
    %3990 = vmatprep.subr.mxu0 0.0
    %3991 = vmatpush1.msra.mxu0 %v3957
    %3992 = vmatprep.subr.mxu0 0.0
    %3993 = vmatpush1.msra.mxu0 %v3958
    %3994 = vmatprep.subr.mxu0 0.0
    %3995 = vmatpush1.msra.mxu0 %v3959
    %3996 = vmatprep.subr.mxu0 0.0
    %3997 = vmatpush1.msra.mxu0 0.0
    %3998 = vmatprep.subr.mxu0 0.0
    %3999 = vmatpush1.msra.mxu0 0.0
    %4000 = vmatprep.subr.mxu0 0.0
    %4001 = vmatpush1.msra.mxu0 0.0
    %4002 = vmatprep.subr.mxu0 0.0
    %4003 = vmatpush1.msra.mxu0 0.0
    %4004 = vmatprep.subr.mxu0 0.0
    %4005 = vmatpush1.msra.mxu0 0.0
    %4006 = vmatprep.subr.mxu0 0.0
    %4007 = vmatpush1.msra.mxu0 0.0
    %4008 = vmatprep.subr.mxu0 0.0
    %4009 = vmatpush1.msra.mxu0 0.0
    %4010 = vmatprep.subr.mxu0 0.0
    %4011 = vmatpush1.msra.mxu0 0.0
    %4012 = vmatprep.subr.mxu0 0.0
    %4013 = vmatpush1.msra.mxu0 0.0
    %4014 = vmatprep.subr.mxu0 0.0
    %4015 = vmatpush1.msra.mxu0 0.0
    %4016 = vmatprep.subr.mxu0 0.0
    %4017 = vmatpush1.msra.mxu0 0.0
    %4018 = vmatprep.subr.mxu0 0.0
    %4019 = vmatpush1.msra.mxu0 0.0
    %4020 = vmatprep.subr.mxu0 0.0
    %4021 = vmatpush1.msra.mxu0 0.0
    %4022 = vmatprep.subr.mxu0 0.0
    %4023 = vmatpush1.msra.mxu0 0.0
    %4024 = vmatprep.subr.mxu0 0.0
    %4025 = vmatpush1.msra.mxu0 0.0
    %4026 = vmatprep.subr.mxu0 0.0
    %4027 = vmatpush1.msra.mxu0 0.0
    %4028 = vmatprep.mubr.f32.mxu0 0.0
    %4029 = vmatmul.mubr.f32.gmra.mrb[0].mxu0 %v3941
    %v4030 = vpop.f32.mrb[0].mxu0
    %v4031 = vadd.f32 %v3963, %v4030
    %v4032 = vpop.f32.mrb[0].mxu0
    %4033 = vmatprep.mubr.f32.mxu0 0.0
    %4034 = vmatmul.mubr.f32.gmra.mrb[0].mxu0 %v3942
    %v4035 = vpop.f32.mrb[0].mxu0
    %v4036 = vadd.f32 %v3963, %v4035
    %v4037 = vpop.f32.mrb[0].mxu0
    %4038 = vdwg.mxu0
    %v4039 = vadd.f32 %v3800, %v4031
    %v4040 = vadd.f32 %v3801, %v4036
    %v4041 = vld [vmem:[%s5] sm:$0xff]
    %v4044 = vrot.slane %v4040, 7
    %vm4045 = vcmask 1045509
    %v4046 = vsel %vm4045, %v4044, %v4039
    %vm4048 = vcmask 259076
    %v4049 = vsel %vm4048, %v4046, 0.0
    %4050 = vadd.xlane.f32.xlu0 %v4049
    %v4051 = vpop.xlane.xlu0 %4050
    %v4052 = vmul.f32 %v4051, %v370
    %v4054 = vrot.slane %v4052, 1
    %v4057 = vsub.f32 %v4039, %v4052
    %v4058 = vsub.f32 %v4040, %v4054
    %v4059 = vmul.f32 %v4057, %v4057
    %v4060 = vmul.f32 %v4058, %v4058
    %v4063 = vrot.slane %v4060, 7
    %v4064 = vsel %vm4045, %v4063, %v4059
    %v4066 = vsel %vm4048, %v4064, 0.0
    %4067 = vadd.xlane.f32.xlu0 %v4066
    %v4068 = vpop.xlane.xlu0 %4067
    %v4069 = vmul.f32 %v4068, %v370
    %v4070 = vadd.f32 %v4069, 1e-05
    %v4071 = vrsqrt.pop %v4070
    %v4073 = vrot.slane %v4071, 1
    %v4076 = vmul.f32 %v4057, %v4071
    %v4077 = vmul.f32 %v4058, %v4073
    %v4078 = vlaneseq
    %v4079 = vshrl.u32 %v4078, 7
    %v4080 = vsub.s32 7, %v4079
    %v4081 = vrot.slane %v4041, %v4080
    %v4082 = vmul.f32 %v4076, %v4081
    %v4083 = vmul.f32 %v4077, %v4081
    %4085 = vrot.lane.b32.xlu0 %v4081, 96
    %v4086 = vpop.permute.xlu0 %4085
    %v4088 = vadd.f32 %v4082, %v4086
    %v4089 = vadd.f32 %v4083, %v4086
    %v4092 = vrot.slane %v4089, 7
    %v4093 = vsel %vm4045, %v4092, %v4088
    %4095 = vst.msk [vmem:[#allocation3 - $0x4] sm:$0x30] %vm4048, %v4093
    // Predicated region
    $region26: #{elevation_transformer_forward.1} parent=1 // pred_check
      _
    $region27: #{elevation_transformer_forward.1} parent=1 // pred_check_branch
      %4097 = sbr.rel (0) target = $region29
    $region28: #{elevation_transformer_forward.1} parent=1 // pred_region
      %s4099 = ssub.s32 32, 32
      %4100 = vsyncadd [#allocation4], %s4099
      %s4102 = sshll.u32 [#allocation3], 4
      %s4103 = int_to_ptr.vmem [resolvable:$true] %s4102
      %4105 = dma.vmem_to_hbm [thread:$0]  %s4103, 32, %s6, [#allocation4]
    $region29: #{elevation_transformer_forward.1} parent=1 // pred_fallthru
      _
    // Predicated region
    $region30: #{elevation_transformer_forward.1} parent=1 // pred_check
      _
    $region31: #{elevation_transformer_forward.1} parent=1 // pred_check_branch
      %4107 = sbr.rel (0) target = $region33
    $region32: #{elevation_transformer_forward.1} parent=1 // pred_region
      %4108 = dma.done [#allocation4], 32
    $region33: #{elevation_transformer_forward.1} parent=1 // pred_fallthru
      _
    %4109 = vsyncpa [#allocation4], 1

</llo_original>
